<compile_context>
chip_gen: v7x
topology: tpu7x:2x2x1
jax: 0.10.0
libtpu: 0.0.40
codegen_flags: <defaults>
</compile_context>

<pallas_src>
import functools
import math

import jax
import jax.numpy as jnp
from jax.experimental import pallas as pl
from jax.experimental.pallas import tpu as pltpu  # noqa: F401  (TPU backend)

# ----------------------------- model config ---------------------------------
B = 2            # batch
S = 8            # input sequence length
P = 8            # prompt_length (small-shape stand-in for the default 32)
H = 32           # hidden size
F = 64           # FFN intermediate size
NUM_HEADS = 4
NUM_LAYERS = 2
LN_EPS = 1e-12   # BERT layer-norm eps


# --------------------------- fused forward kernel ----------------------------
def l2p_fused_kernel(x_ref, prompt_ref,
                     wqkv_ref, bqkv_ref, wo_ref, bo_ref,
                     ln1_g_ref, ln1_b_ref,
                     w1_ref, b1_ref, w2_ref, b2_ref,
                     ln2_g_ref, ln2_b_ref,
                     wp_ref, bp_ref, wc_ref, bc_ref,
                     o_ref, *, num_heads, num_layers):
    """Entire L2P forward for the full batch in one kernel invocation."""
    x = x_ref[...].astype(jnp.float32)                    # (B, S, H)
    prompt = prompt_ref[...].astype(jnp.float32)          # (P, H)
    Bt, Ss, Hd = x.shape
    Pp = prompt.shape[0]
    L = Pp + Ss
    hd = Hd // num_heads
    scale = 1.0 / math.sqrt(hd)

    # --- torch.cat((trainable_vector, x), dim=1): prepend prompt on seq axis
    prompt_b = jnp.broadcast_to(prompt[None], (Bt, Pp, Hd))
    h3 = jnp.concatenate([prompt_b, x], axis=1)           # (B, L, H)
    h2d = h3.reshape(Bt * L, Hd)                          # token-major (BL, H)

    def layernorm(t, gamma, beta):
        mu = jnp.mean(t, axis=-1, keepdims=True)
        var = jnp.mean((t - mu) ** 2, axis=-1, keepdims=True)
        return (t - mu) * jax.lax.rsqrt(var + LN_EPS) * gamma + beta

    for layer in range(num_layers):                       # static unroll (2)
        # --- fused QKV projection on the flattened token matrix ---
        qkv = (jnp.dot(h2d, wqkv_ref[layer], preferred_element_type=jnp.float32)
               + bqkv_ref[layer])                         # (BL, 3H)
        q = qkv[:, 0 * Hd:1 * Hd].reshape(Bt, L, Hd)
        k = qkv[:, 1 * Hd:2 * Hd].reshape(Bt, L, Hd)
        v = qkv[:, 2 * Hd:3 * Hd].reshape(Bt, L, Hd)

        wo = wo_ref[layer]                                # (H, H)
        attn2d = jnp.zeros((Bt * L, Hd), jnp.float32)
        for hi in range(num_heads):                       # static unroll (4)
            sl = slice(hi * hd, (hi + 1) * hd)
            qh = q[:, :, sl]                              # (B, L, hd)
            kh = k[:, :, sl]
            vh = v[:, :, sl]
            s = jnp.einsum('bqd,bkd->bqk', qh, kh,
                           preferred_element_type=jnp.float32) * scale
            s = s - jnp.max(s, axis=-1, keepdims=True)
            p = jnp.exp(s)
            inv = pl.reciprocal(jnp.sum(p, axis=-1, keepdims=True), approx=True)
            p = p * inv
            ctx = jnp.einsum('bqk,bkd->bqd', p, vh,
                             preferred_element_type=jnp.float32)  # (B, L, hd)
            # concat(ctx_heads) @ Wo  ==  sum_h ctx_h @ Wo[h*hd:(h+1)*hd, :]
            attn2d = attn2d + jnp.dot(ctx.reshape(Bt * L, hd), wo[sl, :],
                                      preferred_element_type=jnp.float32)
        attn2d = attn2d + bo_ref[layer]

        # --- residual + layernorm 1 ---
        h2d = layernorm(h2d + attn2d, ln1_g_ref[layer], ln1_b_ref[layer])

        # --- feed-forward (GELU) ---
        # TODO(synk): HF BERT uses erf-based GELU; tanh approximation kept here
        # (matches previously verified lowering, ~1e-3 numeric deviation).
        f = (jnp.dot(h2d, w1_ref[layer], preferred_element_type=jnp.float32)
             + b1_ref[layer])
        f = jax.nn.gelu(f, approximate=True)
        f = (jnp.dot(f, w2_ref[layer], preferred_element_type=jnp.float32)
             + b2_ref[layer])

        # --- residual + layernorm 2 ---
        h2d = layernorm(h2d + f, ln2_g_ref[layer], ln2_b_ref[layer])

    # --- BERT pooler on position 0 (first prompt token after the concat) ---
    cls = h2d.reshape(Bt, L, Hd)[:, 0, :]                 # (B, H)
    pooled = jnp.tanh(jnp.dot(cls, wp_ref[...], preferred_element_type=jnp.float32)
                      + bp_ref[...])
    logits = (jnp.dot(pooled, wc_ref[...], preferred_element_type=jnp.float32)
              + bc_ref[...])
    o_ref[...] = jax.nn.sigmoid(logits).astype(o_ref.dtype)


# ------------------------------ L2P forward ----------------------------------
def l2p_forward(x, trainable_vector, params):
    Bt = x.shape[0]
    kernel = functools.partial(l2p_fused_kernel,
                               num_heads=NUM_HEADS, num_layers=NUM_LAYERS)
    # Single fused pallas_call: no grid, every operand fully resident in VMEM
    # (total footprint ~80 KiB -- far below any generation's VMEM limit).
    return pl.pallas_call(
        kernel,
        out_shape=jax.ShapeDtypeStruct((Bt, 1), jnp.float32),
    )(x, trainable_vector,
      params["wqkv"], params["bqkv"], params["wo"], params["bo"],
      params["ln1_g"], params["ln1_b"],
      params["w1"], params["b1"], params["w2"], params["b2"],
      params["ln2_g"], params["ln2_b"],
      params["wp"], params["bp"], params["wc"], params["bc"])


# --------------------------- deterministic init ------------------------------
def init_params(key):
    std = 0.02

    def dense(k, shape):
        return std * jax.random.normal(k, shape, jnp.float32)

    keys = jax.random.split(key, 4 * NUM_LAYERS + 2)
    wqkv = jnp.stack([dense(keys[4 * l + 0], (H, 3 * H)) for l in range(NUM_LAYERS)])
    wo = jnp.stack([dense(keys[4 * l + 1], (H, H)) for l in range(NUM_LAYERS)])
    w1 = jnp.stack([dense(keys[4 * l + 2], (H, F)) for l in range(NUM_LAYERS)])
    w2 = jnp.stack([dense(keys[4 * l + 3], (F, H)) for l in range(NUM_LAYERS)])

    return dict(
        # per-layer weights stacked on a leading layer axis (indexed statically
        # inside the fused kernel)
        wqkv=wqkv, bqkv=jnp.zeros((NUM_LAYERS, 1, 3 * H), jnp.float32),
        wo=wo, bo=jnp.zeros((NUM_LAYERS, 1, H), jnp.float32),
        ln1_g=jnp.ones((NUM_LAYERS, 1, H), jnp.float32),
        ln1_b=jnp.zeros((NUM_LAYERS, 1, H), jnp.float32),
        w1=w1, b1=jnp.zeros((NUM_LAYERS, 1, F), jnp.float32),
        w2=w2, b2=jnp.zeros((NUM_LAYERS, 1, H), jnp.float32),
        ln2_g=jnp.ones((NUM_LAYERS, 1, H), jnp.float32),
        ln2_b=jnp.zeros((NUM_LAYERS, 1, H), jnp.float32),
        # BERT pooler + nn.Linear(H, 1) classifier
        wp=dense(keys[-2], (H, H)), bp=jnp.zeros((1, H), jnp.float32),
        wc=dense(keys[-1], (H, 1)), bc=jnp.zeros((1, 1), jnp.float32),
    )


if __name__ == "__main__":
    root = jax.random.PRNGKey(0)
    k_params, k_x, k_prompt = jax.random.split(root, 3)

    params = init_params(k_params)
    x = jax.random.normal(k_x, (B, S, H), jnp.float32)               # embedded tokens
    trainable_vector = jax.random.normal(k_prompt, (P, H), jnp.float32)  # learnable prompt

    out = l2p_forward(x, trainable_vector, params)
    out = jax.block_until_ready(out)

    assert out.shape == (B, 1)
    assert bool(jnp.all(jnp.isfinite(out)))
    assert bool(jnp.all((out >= 0.0) & (out <= 1.0)))
    print("KERNEL_OK")
</pallas_src>

<mosaic_0001>
module attributes {stable_mosaic.version = 11 : i64} {
  func.func @l2p_fused_kernel(%arg0: memref<2x8x32xf32, #tpu.memory_space<vmem>>, %arg1: memref<8x32xf32, #tpu.memory_space<vmem>>, %arg2: memref<2x32x96xf32, #tpu.memory_space<vmem>>, %arg3: memref<2x1x96xf32, #tpu.memory_space<vmem>>, %arg4: memref<2x32x32xf32, #tpu.memory_space<vmem>>, %arg5: memref<2x1x32xf32, #tpu.memory_space<vmem>>, %arg6: memref<2x1x32xf32, #tpu.memory_space<vmem>>, %arg7: memref<2x1x32xf32, #tpu.memory_space<vmem>>, %arg8: memref<2x32x64xf32, #tpu.memory_space<vmem>>, %arg9: memref<2x1x64xf32, #tpu.memory_space<vmem>>, %arg10: memref<2x64x32xf32, #tpu.memory_space<vmem>>, %arg11: memref<2x1x32xf32, #tpu.memory_space<vmem>>, %arg12: memref<2x1x32xf32, #tpu.memory_space<vmem>>, %arg13: memref<2x1x32xf32, #tpu.memory_space<vmem>>, %arg14: memref<32x32xf32, #tpu.memory_space<vmem>>, %arg15: memref<1x32xf32, #tpu.memory_space<vmem>>, %arg16: memref<32x1xf32, #tpu.memory_space<vmem>>, %arg17: memref<1x1xf32, #tpu.memory_space<vmem>>, %arg18: memref<2x1xf32, #tpu.memory_space<vmem>>) attributes {dimension_semantics = [], scalar_prefetch = 0 : i64, scratch_operands = 0 : i64, tpu.core_type = #tpu.core_type<tc>} {
    %c0 = arith.constant 0 : index
    %c0_0 = arith.constant 0 : index
    %c0_1 = arith.constant 0 : index
    %0 = vector.load %arg0[%c0, %c0_0, %c0_1] : memref<2x8x32xf32, #tpu.memory_space<vmem>>, vector<2x8x32xf32>
    %c0_2 = arith.constant 0 : index
    %c0_3 = arith.constant 0 : index
    %1 = vector.load %arg1[%c0_2, %c0_3] : memref<8x32xf32, #tpu.memory_space<vmem>>, vector<8x32xf32>
    %2 = vector.shape_cast %1 : vector<8x32xf32> to vector<1x8x32xf32>
    %3 = vector.shape_cast %2 : vector<1x8x32xf32> to vector<1x8x32xf32>
    %4 = vector.broadcast %3 : vector<1x8x32xf32> to vector<2x8x32xf32>
    %5 = tpu.concatenate %4, %0 in 1 : vector<2x8x32xf32>, vector<2x8x32xf32> -> vector<2x16x32xf32>
    %6 = vector.shape_cast %5 : vector<2x16x32xf32> to vector<32x32xf32>
    %c0_4 = arith.constant 0 : index
    %c0_5 = arith.constant 0 : index
    %c0_6 = arith.constant 0 : index
    %7 = vector.load %arg2[%c0_4, %c0_5, %c0_6] : memref<2x32x96xf32, #tpu.memory_space<vmem>>, vector<1x32x96xf32>
    %8 = vector.shape_cast %7 : vector<1x32x96xf32> to vector<32x96xf32>
    %cst = arith.constant dense<0.000000e+00> : vector<32x96xf32>
    %9 = tpu.matmul %6, %8, %cst {dimension_numbers = #tpu.dot_dimension_numbers<[1], [0], [0], [1], [0, 0, 1, 1], [], []>} : vector<32x32xf32>, vector<32x96xf32>, vector<32x96xf32> -> vector<32x96xf32>
    %c0_7 = arith.constant 0 : index
    %c0_8 = arith.constant 0 : index
    %c0_9 = arith.constant 0 : index
    %10 = vector.load %arg3[%c0_7, %c0_8, %c0_9] : memref<2x1x96xf32, #tpu.memory_space<vmem>>, vector<1x1x96xf32>
    %11 = vector.shape_cast %10 : vector<1x1x96xf32> to vector<1x96xf32>
    %12 = vector.broadcast %11 : vector<1x96xf32> to vector<32x96xf32>
    %13 = arith.addf %9, %12 : vector<32x96xf32>
    %14 = vector.extract_strided_slice %13 {offsets = [0, 0], sizes = [32, 32], strides = [1, 1]} : vector<32x96xf32> to vector<32x32xf32>
    %15 = vector.shape_cast %14 : vector<32x32xf32> to vector<2x16x32xf32>
    %16 = vector.extract_strided_slice %13 {offsets = [0, 32], sizes = [32, 32], strides = [1, 1]} : vector<32x96xf32> to vector<32x32xf32>
    %17 = vector.shape_cast %16 : vector<32x32xf32> to vector<2x16x32xf32>
    %18 = vector.extract_strided_slice %13 {offsets = [0, 64], sizes = [32, 32], strides = [1, 1]} : vector<32x96xf32> to vector<32x32xf32>
    %19 = vector.shape_cast %18 : vector<32x32xf32> to vector<2x16x32xf32>
    %c0_10 = arith.constant 0 : index
    %c0_11 = arith.constant 0 : index
    %c0_12 = arith.constant 0 : index
    %20 = vector.load %arg4[%c0_10, %c0_11, %c0_12] : memref<2x32x32xf32, #tpu.memory_space<vmem>>, vector<1x32x32xf32>
    %21 = vector.shape_cast %20 : vector<1x32x32xf32> to vector<32x32xf32>
    %cst_13 = arith.constant 0.000000e+00 : f32
    %22 = vector.broadcast %cst_13 : f32 to vector<32x32xf32>
    %23 = vector.extract_strided_slice %15 {offsets = [0, 0, 0], sizes = [2, 16, 8], strides = [1, 1, 1]} : vector<2x16x32xf32> to vector<2x16x8xf32>
    %24 = vector.extract_strided_slice %17 {offsets = [0, 0, 0], sizes = [2, 16, 8], strides = [1, 1, 1]} : vector<2x16x32xf32> to vector<2x16x8xf32>
    %25 = vector.extract_strided_slice %19 {offsets = [0, 0, 0], sizes = [2, 16, 8], strides = [1, 1, 1]} : vector<2x16x32xf32> to vector<2x16x8xf32>
    "tpu.trace_start"() <{level = 10 : i32, message = "bqd,bkd->bqk"}> : () -> ()
    %cst_14 = arith.constant dense<0.000000e+00> : vector<2x16x16xf32>
    %26 = tpu.matmul %23, %24, %cst_14 {dimension_numbers = #tpu.dot_dimension_numbers<[2], [2], [1], [1], [0, 0, 0, 1, 1, 1], [0], [0]>} : vector<2x16x8xf32>, vector<2x16x8xf32>, vector<2x16x16xf32> -> vector<2x16x16xf32>
    "tpu.trace_stop"() : () -> ()
    %cst_15 = arith.constant 0.353553385 : f32
    %27 = vector.broadcast %cst_15 : f32 to vector<2x16x16xf32>
    %28 = arith.mulf %26, %27 : vector<2x16x16xf32>
    %cst_16 = arith.constant dense<0xFF800000> : vector<2x16xf32>
    %29 = vector.multi_reduction <maximumf>, %28, %cst_16 [2] : vector<2x16x16xf32> to vector<2x16xf32>
    %30 = vector.shape_cast %29 : vector<2x16xf32> to vector<2x16x1xf32>
    %31 = vector.broadcast %30 : vector<2x16x1xf32> to vector<2x16x16xf32>
    %32 = arith.subf %28, %31 : vector<2x16x16xf32>
    %33 = math.exp %32 : vector<2x16x16xf32>
    %cst_17 = arith.constant dense<0.000000e+00> : vector<2x16xf32>
    %34 = vector.multi_reduction <add>, %33, %cst_17 [2] : vector<2x16x16xf32> to vector<2x16xf32>
    %35 = vector.shape_cast %34 : vector<2x16xf32> to vector<2x16x1xf32>
    %36 = tpu.reciprocal %35 {approx = true} : vector<2x16x1xf32> -> vector<2x16x1xf32>
    %37 = vector.broadcast %36 : vector<2x16x1xf32> to vector<2x16x16xf32>
    %38 = arith.mulf %33, %37 : vector<2x16x16xf32>
    "tpu.trace_start"() <{level = 10 : i32, message = "bqk,bkd->bqd"}> : () -> ()
    %cst_18 = arith.constant dense<0.000000e+00> : vector<2x16x8xf32>
    %39 = tpu.matmul %38, %25, %cst_18 {dimension_numbers = #tpu.dot_dimension_numbers<[2], [1], [1], [2], [0, 0, 0, 1, 1, 2], [0], [0]>} : vector<2x16x16xf32>, vector<2x16x8xf32>, vector<2x16x8xf32> -> vector<2x16x8xf32>
    "tpu.trace_stop"() : () -> ()
    %40 = vector.shape_cast %39 : vector<2x16x8xf32> to vector<32x8xf32>
    %41 = vector.extract_strided_slice %21 {offsets = [0, 0], sizes = [8, 32], strides = [1, 1]} : vector<32x32xf32> to vector<8x32xf32>
    %cst_19 = arith.constant dense<0.000000e+00> : vector<32x32xf32>
    %42 = tpu.matmul %40, %41, %cst_19 {dimension_numbers = #tpu.dot_dimension_numbers<[1], [0], [0], [1], [0, 0, 1, 1], [], []>} : vector<32x8xf32>, vector<8x32xf32>, vector<32x32xf32> -> vector<32x32xf32>
    %43 = arith.addf %22, %42 : vector<32x32xf32>
    %44 = vector.extract_strided_slice %15 {offsets = [0, 0, 8], sizes = [2, 16, 8], strides = [1, 1, 1]} : vector<2x16x32xf32> to vector<2x16x8xf32>
    %45 = vector.extract_strided_slice %17 {offsets = [0, 0, 8], sizes = [2, 16, 8], strides = [1, 1, 1]} : vector<2x16x32xf32> to vector<2x16x8xf32>
    %46 = vector.extract_strided_slice %19 {offsets = [0, 0, 8], sizes = [2, 16, 8], strides = [1, 1, 1]} : vector<2x16x32xf32> to vector<2x16x8xf32>
    "tpu.trace_start"() <{level = 10 : i32, message = "bqd,bkd->bqk"}> : () -> ()
    %cst_20 = arith.constant dense<0.000000e+00> : vector<2x16x16xf32>
    %47 = tpu.matmul %44, %45, %cst_20 {dimension_numbers = #tpu.dot_dimension_numbers<[2], [2], [1], [1], [0, 0, 0, 1, 1, 1], [0], [0]>} : vector<2x16x8xf32>, vector<2x16x8xf32>, vector<2x16x16xf32> -> vector<2x16x16xf32>
    "tpu.trace_stop"() : () -> ()
    %cst_21 = arith.constant 0.353553385 : f32
    %48 = vector.broadcast %cst_21 : f32 to vector<2x16x16xf32>
    %49 = arith.mulf %47, %48 : vector<2x16x16xf32>
    %cst_22 = arith.constant dense<0xFF800000> : vector<2x16xf32>
    %50 = vector.multi_reduction <maximumf>, %49, %cst_22 [2] : vector<2x16x16xf32> to vector<2x16xf32>
    %51 = vector.shape_cast %50 : vector<2x16xf32> to vector<2x16x1xf32>
    %52 = vector.broadcast %51 : vector<2x16x1xf32> to vector<2x16x16xf32>
    %53 = arith.subf %49, %52 : vector<2x16x16xf32>
    %54 = math.exp %53 : vector<2x16x16xf32>
    %cst_23 = arith.constant dense<0.000000e+00> : vector<2x16xf32>
    %55 = vector.multi_reduction <add>, %54, %cst_23 [2] : vector<2x16x16xf32> to vector<2x16xf32>
    %56 = vector.shape_cast %55 : vector<2x16xf32> to vector<2x16x1xf32>
    %57 = tpu.reciprocal %56 {approx = true} : vector<2x16x1xf32> -> vector<2x16x1xf32>
    %58 = vector.broadcast %57 : vector<2x16x1xf32> to vector<2x16x16xf32>
    %59 = arith.mulf %54, %58 : vector<2x16x16xf32>
    "tpu.trace_start"() <{level = 10 : i32, message = "bqk,bkd->bqd"}> : () -> ()
    %cst_24 = arith.constant dense<0.000000e+00> : vector<2x16x8xf32>
    %60 = tpu.matmul %59, %46, %cst_24 {dimension_numbers = #tpu.dot_dimension_numbers<[2], [1], [1], [2], [0, 0, 0, 1, 1, 2], [0], [0]>} : vector<2x16x16xf32>, vector<2x16x8xf32>, vector<2x16x8xf32> -> vector<2x16x8xf32>
    "tpu.trace_stop"() : () -> ()
    %61 = vector.shape_cast %60 : vector<2x16x8xf32> to vector<32x8xf32>
    %62 = vector.extract_strided_slice %21 {offsets = [8, 0], sizes = [8, 32], strides = [1, 1]} : vector<32x32xf32> to vector<8x32xf32>
    %cst_25 = arith.constant dense<0.000000e+00> : vector<32x32xf32>
    %63 = tpu.matmul %61, %62, %cst_25 {dimension_numbers = #tpu.dot_dimension_numbers<[1], [0], [0], [1], [0, 0, 1, 1], [], []>} : vector<32x8xf32>, vector<8x32xf32>, vector<32x32xf32> -> vector<32x32xf32>
    %64 = arith.addf %43, %63 : vector<32x32xf32>
    %65 = vector.extract_strided_slice %15 {offsets = [0, 0, 16], sizes = [2, 16, 8], strides = [1, 1, 1]} : vector<2x16x32xf32> to vector<2x16x8xf32>
    %66 = vector.extract_strided_slice %17 {offsets = [0, 0, 16], sizes = [2, 16, 8], strides = [1, 1, 1]} : vector<2x16x32xf32> to vector<2x16x8xf32>
    %67 = vector.extract_strided_slice %19 {offsets = [0, 0, 16], sizes = [2, 16, 8], strides = [1, 1, 1]} : vector<2x16x32xf32> to vector<2x16x8xf32>
    "tpu.trace_start"() <{level = 10 : i32, message = "bqd,bkd->bqk"}> : () -> ()
    %cst_26 = arith.constant dense<0.000000e+00> : vector<2x16x16xf32>
    %68 = tpu.matmul %65, %66, %cst_26 {dimension_numbers = #tpu.dot_dimension_numbers<[2], [2], [1], [1], [0, 0, 0, 1, 1, 1], [0], [0]>} : vector<2x16x8xf32>, vector<2x16x8xf32>, vector<2x16x16xf32> -> vector<2x16x16xf32>
    "tpu.trace_stop"() : () -> ()
    %cst_27 = arith.constant 0.353553385 : f32
    %69 = vector.broadcast %cst_27 : f32 to vector<2x16x16xf32>
    %70 = arith.mulf %68, %69 : vector<2x16x16xf32>
    %cst_28 = arith.constant dense<0xFF800000> : vector<2x16xf32>
    %71 = vector.multi_reduction <maximumf>, %70, %cst_28 [2] : vector<2x16x16xf32> to vector<2x16xf32>
    %72 = vector.shape_cast %71 : vector<2x16xf32> to vector<2x16x1xf32>
    %73 = vector.broadcast %72 : vector<2x16x1xf32> to vector<2x16x16xf32>
    %74 = arith.subf %70, %73 : vector<2x16x16xf32>
    %75 = math.exp %74 : vector<2x16x16xf32>
    %cst_29 = arith.constant dense<0.000000e+00> : vector<2x16xf32>
    %76 = vector.multi_reduction <add>, %75, %cst_29 [2] : vector<2x16x16xf32> to vector<2x16xf32>
    %77 = vector.shape_cast %76 : vector<2x16xf32> to vector<2x16x1xf32>
    %78 = tpu.reciprocal %77 {approx = true} : vector<2x16x1xf32> -> vector<2x16x1xf32>
    %79 = vector.broadcast %78 : vector<2x16x1xf32> to vector<2x16x16xf32>
    %80 = arith.mulf %75, %79 : vector<2x16x16xf32>
    "tpu.trace_start"() <{level = 10 : i32, message = "bqk,bkd->bqd"}> : () -> ()
    %cst_30 = arith.constant dense<0.000000e+00> : vector<2x16x8xf32>
    %81 = tpu.matmul %80, %67, %cst_30 {dimension_numbers = #tpu.dot_dimension_numbers<[2], [1], [1], [2], [0, 0, 0, 1, 1, 2], [0], [0]>} : vector<2x16x16xf32>, vector<2x16x8xf32>, vector<2x16x8xf32> -> vector<2x16x8xf32>
    "tpu.trace_stop"() : () -> ()
    %82 = vector.shape_cast %81 : vector<2x16x8xf32> to vector<32x8xf32>
    %83 = vector.extract_strided_slice %21 {offsets = [16, 0], sizes = [8, 32], strides = [1, 1]} : vector<32x32xf32> to vector<8x32xf32>
    %cst_31 = arith.constant dense<0.000000e+00> : vector<32x32xf32>
    %84 = tpu.matmul %82, %83, %cst_31 {dimension_numbers = #tpu.dot_dimension_numbers<[1], [0], [0], [1], [0, 0, 1, 1], [], []>} : vector<32x8xf32>, vector<8x32xf32>, vector<32x32xf32> -> vector<32x32xf32>
    %85 = arith.addf %64, %84 : vector<32x32xf32>
    %86 = vector.extract_strided_slice %15 {offsets = [0, 0, 24], sizes = [2, 16, 8], strides = [1, 1, 1]} : vector<2x16x32xf32> to vector<2x16x8xf32>
    %87 = vector.extract_strided_slice %17 {offsets = [0, 0, 24], sizes = [2, 16, 8], strides = [1, 1, 1]} : vector<2x16x32xf32> to vector<2x16x8xf32>
    %88 = vector.extract_strided_slice %19 {offsets = [0, 0, 24], sizes = [2, 16, 8], strides = [1, 1, 1]} : vector<2x16x32xf32> to vector<2x16x8xf32>
    "tpu.trace_start"() <{level = 10 : i32, message = "bqd,bkd->bqk"}> : () -> ()
    %cst_32 = arith.constant dense<0.000000e+00> : vector<2x16x16xf32>
    %89 = tpu.matmul %86, %87, %cst_32 {dimension_numbers = #tpu.dot_dimension_numbers<[2], [2], [1], [1], [0, 0, 0, 1, 1, 1], [0], [0]>} : vector<2x16x8xf32>, vector<2x16x8xf32>, vector<2x16x16xf32> -> vector<2x16x16xf32>
    "tpu.trace_stop"() : () -> ()
    %cst_33 = arith.constant 0.353553385 : f32
    %90 = vector.broadcast %cst_33 : f32 to vector<2x16x16xf32>
    %91 = arith.mulf %89, %90 : vector<2x16x16xf32>
    %cst_34 = arith.constant dense<0xFF800000> : vector<2x16xf32>
    %92 = vector.multi_reduction <maximumf>, %91, %cst_34 [2] : vector<2x16x16xf32> to vector<2x16xf32>
    %93 = vector.shape_cast %92 : vector<2x16xf32> to vector<2x16x1xf32>
    %94 = vector.broadcast %93 : vector<2x16x1xf32> to vector<2x16x16xf32>
    %95 = arith.subf %91, %94 : vector<2x16x16xf32>
    %96 = math.exp %95 : vector<2x16x16xf32>
    %cst_35 = arith.constant dense<0.000000e+00> : vector<2x16xf32>
    %97 = vector.multi_reduction <add>, %96, %cst_35 [2] : vector<2x16x16xf32> to vector<2x16xf32>
    %98 = vector.shape_cast %97 : vector<2x16xf32> to vector<2x16x1xf32>
    %99 = tpu.reciprocal %98 {approx = true} : vector<2x16x1xf32> -> vector<2x16x1xf32>
    %100 = vector.broadcast %99 : vector<2x16x1xf32> to vector<2x16x16xf32>
    %101 = arith.mulf %96, %100 : vector<2x16x16xf32>
    "tpu.trace_start"() <{level = 10 : i32, message = "bqk,bkd->bqd"}> : () -> ()
    %cst_36 = arith.constant dense<0.000000e+00> : vector<2x16x8xf32>
    %102 = tpu.matmul %101, %88, %cst_36 {dimension_numbers = #tpu.dot_dimension_numbers<[2], [1], [1], [2], [0, 0, 0, 1, 1, 2], [0], [0]>} : vector<2x16x16xf32>, vector<2x16x8xf32>, vector<2x16x8xf32> -> vector<2x16x8xf32>
    "tpu.trace_stop"() : () -> ()
    %103 = vector.shape_cast %102 : vector<2x16x8xf32> to vector<32x8xf32>
    %104 = vector.extract_strided_slice %21 {offsets = [24, 0], sizes = [8, 32], strides = [1, 1]} : vector<32x32xf32> to vector<8x32xf32>
    %cst_37 = arith.constant dense<0.000000e+00> : vector<32x32xf32>
    %105 = tpu.matmul %103, %104, %cst_37 {dimension_numbers = #tpu.dot_dimension_numbers<[1], [0], [0], [1], [0, 0, 1, 1], [], []>} : vector<32x8xf32>, vector<8x32xf32>, vector<32x32xf32> -> vector<32x32xf32>
    %106 = arith.addf %85, %105 : vector<32x32xf32>
    %c0_38 = arith.constant 0 : index
    %c0_39 = arith.constant 0 : index
    %c0_40 = arith.constant 0 : index
    %107 = vector.load %arg5[%c0_38, %c0_39, %c0_40] : memref<2x1x32xf32, #tpu.memory_space<vmem>>, vector<1x1x32xf32>
    %108 = vector.shape_cast %107 : vector<1x1x32xf32> to vector<1x32xf32>
    %109 = vector.broadcast %108 : vector<1x32xf32> to vector<32x32xf32>
    %110 = arith.addf %106, %109 : vector<32x32xf32>
    %111 = arith.addf %6, %110 : vector<32x32xf32>
    %c0_41 = arith.constant 0 : index
    %c0_42 = arith.constant 0 : index
    %c0_43 = arith.constant 0 : index
    %112 = vector.load %arg6[%c0_41, %c0_42, %c0_43] : memref<2x1x32xf32, #tpu.memory_space<vmem>>, vector<1x1x32xf32>
    %113 = vector.shape_cast %112 : vector<1x1x32xf32> to vector<1x32xf32>
    %c0_44 = arith.constant 0 : index
    %c0_45 = arith.constant 0 : index
    %c0_46 = arith.constant 0 : index
    %114 = vector.load %arg7[%c0_44, %c0_45, %c0_46] : memref<2x1x32xf32, #tpu.memory_space<vmem>>, vector<1x1x32xf32>
    %115 = vector.shape_cast %114 : vector<1x1x32xf32> to vector<1x32xf32>
    %cst_47 = arith.constant dense<0.000000e+00> : vector<32xf32>
    %116 = vector.multi_reduction <add>, %111, %cst_47 [1] : vector<32x32xf32> to vector<32xf32>
    %117 = vector.shape_cast %116 : vector<32xf32> to vector<32x1xf32>
    %cst_48 = arith.constant 3.200000e+01 : f32
    %118 = vector.broadcast %cst_48 : f32 to vector<32x1xf32>
    %119 = arith.divf %117, %118 : vector<32x1xf32>
    %120 = vector.broadcast %119 : vector<32x1xf32> to vector<32x32xf32>
    %121 = arith.subf %111, %120 : vector<32x32xf32>
    %122 = arith.mulf %121, %121 : vector<32x32xf32>
    %cst_49 = arith.constant dense<0.000000e+00> : vector<32xf32>
    %123 = vector.multi_reduction <add>, %122, %cst_49 [1] : vector<32x32xf32> to vector<32xf32>
    %124 = vector.shape_cast %123 : vector<32xf32> to vector<32x1xf32>
    %cst_50 = arith.constant 3.200000e+01 : f32
    %125 = vector.broadcast %cst_50 : f32 to vector<32x1xf32>
    %126 = arith.divf %124, %125 : vector<32x1xf32>
    %127 = vector.broadcast %119 : vector<32x1xf32> to vector<32x32xf32>
    %128 = arith.subf %111, %127 : vector<32x32xf32>
    %cst_51 = arith.constant 9.99999996E-13 : f32
    %129 = vector.broadcast %cst_51 : f32 to vector<32x1xf32>
    %130 = arith.addf %126, %129 : vector<32x1xf32>
    %131 = math.rsqrt %130 : vector<32x1xf32>
    %132 = vector.broadcast %131 : vector<32x1xf32> to vector<32x32xf32>
    %133 = arith.mulf %128, %132 : vector<32x32xf32>
    %134 = vector.broadcast %113 : vector<1x32xf32> to vector<32x32xf32>
    %135 = arith.mulf %133, %134 : vector<32x32xf32>
    %136 = vector.broadcast %115 : vector<1x32xf32> to vector<32x32xf32>
    %137 = arith.addf %135, %136 : vector<32x32xf32>
    %c0_52 = arith.constant 0 : index
    %c0_53 = arith.constant 0 : index
    %c0_54 = arith.constant 0 : index
    %138 = vector.load %arg8[%c0_52, %c0_53, %c0_54] : memref<2x32x64xf32, #tpu.memory_space<vmem>>, vector<1x32x64xf32>
    %139 = vector.shape_cast %138 : vector<1x32x64xf32> to vector<32x64xf32>
    %cst_55 = arith.constant dense<0.000000e+00> : vector<32x64xf32>
    %140 = tpu.matmul %137, %139, %cst_55 {dimension_numbers = #tpu.dot_dimension_numbers<[1], [0], [0], [1], [0, 0, 1, 1], [], []>} : vector<32x32xf32>, vector<32x64xf32>, vector<32x64xf32> -> vector<32x64xf32>
    %c0_56 = arith.constant 0 : index
    %c0_57 = arith.constant 0 : index
    %c0_58 = arith.constant 0 : index
    %141 = vector.load %arg9[%c0_56, %c0_57, %c0_58] : memref<2x1x64xf32, #tpu.memory_space<vmem>>, vector<1x1x64xf32>
    %142 = vector.shape_cast %141 : vector<1x1x64xf32> to vector<1x64xf32>
    %143 = vector.broadcast %142 : vector<1x64xf32> to vector<32x64xf32>
    %144 = arith.addf %140, %143 : vector<32x64xf32>
    %145 = arith.mulf %144, %144 : vector<32x64xf32>
    %146 = arith.mulf %144, %145 : vector<32x64xf32>
    %cst_59 = arith.constant 4.471500e-02 : f32
    %147 = vector.broadcast %cst_59 : f32 to vector<32x64xf32>
    %148 = arith.mulf %147, %146 : vector<32x64xf32>
    %149 = arith.addf %144, %148 : vector<32x64xf32>
    %cst_60 = arith.constant 0.797884583 : f32
    %150 = vector.broadcast %cst_60 : f32 to vector<32x64xf32>
    %151 = arith.mulf %150, %149 : vector<32x64xf32>
    %152 = math.tanh %151 : vector<32x64xf32>
    %cst_61 = arith.constant 1.000000e+00 : f32
    %153 = vector.broadcast %cst_61 : f32 to vector<32x64xf32>
    %154 = arith.addf %153, %152 : vector<32x64xf32>
    %cst_62 = arith.constant 5.000000e-01 : f32
    %155 = vector.broadcast %cst_62 : f32 to vector<32x64xf32>
    %156 = arith.mulf %155, %154 : vector<32x64xf32>
    %157 = arith.mulf %144, %156 : vector<32x64xf32>
    %c0_63 = arith.constant 0 : index
    %c0_64 = arith.constant 0 : index
    %c0_65 = arith.constant 0 : index
    %158 = vector.load %arg10[%c0_63, %c0_64, %c0_65] : memref<2x64x32xf32, #tpu.memory_space<vmem>>, vector<1x64x32xf32>
    %159 = vector.shape_cast %158 : vector<1x64x32xf32> to vector<64x32xf32>
    %cst_66 = arith.constant dense<0.000000e+00> : vector<32x32xf32>
    %160 = tpu.matmul %157, %159, %cst_66 {dimension_numbers = #tpu.dot_dimension_numbers<[1], [0], [0], [1], [0, 0, 1, 1], [], []>} : vector<32x64xf32>, vector<64x32xf32>, vector<32x32xf32> -> vector<32x32xf32>
    %c0_67 = arith.constant 0 : index
    %c0_68 = arith.constant 0 : index
    %c0_69 = arith.constant 0 : index
    %161 = vector.load %arg11[%c0_67, %c0_68, %c0_69] : memref<2x1x32xf32, #tpu.memory_space<vmem>>, vector<1x1x32xf32>
    %162 = vector.shape_cast %161 : vector<1x1x32xf32> to vector<1x32xf32>
    %163 = vector.broadcast %162 : vector<1x32xf32> to vector<32x32xf32>
    %164 = arith.addf %160, %163 : vector<32x32xf32>
    %165 = arith.addf %137, %164 : vector<32x32xf32>
    %c0_70 = arith.constant 0 : index
    %c0_71 = arith.constant 0 : index
    %c0_72 = arith.constant 0 : index
    %166 = vector.load %arg12[%c0_70, %c0_71, %c0_72] : memref<2x1x32xf32, #tpu.memory_space<vmem>>, vector<1x1x32xf32>
    %167 = vector.shape_cast %166 : vector<1x1x32xf32> to vector<1x32xf32>
    %c0_73 = arith.constant 0 : index
    %c0_74 = arith.constant 0 : index
    %c0_75 = arith.constant 0 : index
    %168 = vector.load %arg13[%c0_73, %c0_74, %c0_75] : memref<2x1x32xf32, #tpu.memory_space<vmem>>, vector<1x1x32xf32>
    %169 = vector.shape_cast %168 : vector<1x1x32xf32> to vector<1x32xf32>
    %cst_76 = arith.constant dense<0.000000e+00> : vector<32xf32>
    %170 = vector.multi_reduction <add>, %165, %cst_76 [1] : vector<32x32xf32> to vector<32xf32>
    %171 = vector.shape_cast %170 : vector<32xf32> to vector<32x1xf32>
    %cst_77 = arith.constant 3.200000e+01 : f32
    %172 = vector.broadcast %cst_77 : f32 to vector<32x1xf32>
    %173 = arith.divf %171, %172 : vector<32x1xf32>
    %174 = vector.broadcast %173 : vector<32x1xf32> to vector<32x32xf32>
    %175 = arith.subf %165, %174 : vector<32x32xf32>
    %176 = arith.mulf %175, %175 : vector<32x32xf32>
    %cst_78 = arith.constant dense<0.000000e+00> : vector<32xf32>
    %177 = vector.multi_reduction <add>, %176, %cst_78 [1] : vector<32x32xf32> to vector<32xf32>
    %178 = vector.shape_cast %177 : vector<32xf32> to vector<32x1xf32>
    %cst_79 = arith.constant 3.200000e+01 : f32
    %179 = vector.broadcast %cst_79 : f32 to vector<32x1xf32>
    %180 = arith.divf %178, %179 : vector<32x1xf32>
    %181 = vector.broadcast %173 : vector<32x1xf32> to vector<32x32xf32>
    %182 = arith.subf %165, %181 : vector<32x32xf32>
    %cst_80 = arith.constant 9.99999996E-13 : f32
    %183 = vector.broadcast %cst_80 : f32 to vector<32x1xf32>
    %184 = arith.addf %180, %183 : vector<32x1xf32>
    %185 = math.rsqrt %184 : vector<32x1xf32>
    %186 = vector.broadcast %185 : vector<32x1xf32> to vector<32x32xf32>
    %187 = arith.mulf %182, %186 : vector<32x32xf32>
    %188 = vector.broadcast %167 : vector<1x32xf32> to vector<32x32xf32>
    %189 = arith.mulf %187, %188 : vector<32x32xf32>
    %190 = vector.broadcast %169 : vector<1x32xf32> to vector<32x32xf32>
    %191 = arith.addf %189, %190 : vector<32x32xf32>
    %c1 = arith.constant 1 : index
    %c0_81 = arith.constant 0 : index
    %c0_82 = arith.constant 0 : index
    %192 = vector.load %arg2[%c1, %c0_81, %c0_82] : memref<2x32x96xf32, #tpu.memory_space<vmem>>, vector<1x32x96xf32>
    %193 = vector.shape_cast %192 : vector<1x32x96xf32> to vector<32x96xf32>
    %cst_83 = arith.constant dense<0.000000e+00> : vector<32x96xf32>
    %194 = tpu.matmul %191, %193, %cst_83 {dimension_numbers = #tpu.dot_dimension_numbers<[1], [0], [0], [1], [0, 0, 1, 1], [], []>} : vector<32x32xf32>, vector<32x96xf32>, vector<32x96xf32> -> vector<32x96xf32>
    %c1_84 = arith.constant 1 : index
    %c0_85 = arith.constant 0 : index
    %c0_86 = arith.constant 0 : index
    %195 = vector.load %arg3[%c1_84, %c0_85, %c0_86] : memref<2x1x96xf32, #tpu.memory_space<vmem>>, vector<1x1x96xf32>
    %196 = vector.shape_cast %195 : vector<1x1x96xf32> to vector<1x96xf32>
    %197 = vector.broadcast %196 : vector<1x96xf32> to vector<32x96xf32>
    %198 = arith.addf %194, %197 : vector<32x96xf32>
    %199 = vector.extract_strided_slice %198 {offsets = [0, 0], sizes = [32, 32], strides = [1, 1]} : vector<32x96xf32> to vector<32x32xf32>
    %200 = vector.shape_cast %199 : vector<32x32xf32> to vector<2x16x32xf32>
    %201 = vector.extract_strided_slice %198 {offsets = [0, 32], sizes = [32, 32], strides = [1, 1]} : vector<32x96xf32> to vector<32x32xf32>
    %202 = vector.shape_cast %201 : vector<32x32xf32> to vector<2x16x32xf32>
    %203 = vector.extract_strided_slice %198 {offsets = [0, 64], sizes = [32, 32], strides = [1, 1]} : vector<32x96xf32> to vector<32x32xf32>
    %204 = vector.shape_cast %203 : vector<32x32xf32> to vector<2x16x32xf32>
    %c1_87 = arith.constant 1 : index
    %c0_88 = arith.constant 0 : index
    %c0_89 = arith.constant 0 : index
    %205 = vector.load %arg4[%c1_87, %c0_88, %c0_89] : memref<2x32x32xf32, #tpu.memory_space<vmem>>, vector<1x32x32xf32>
    %206 = vector.shape_cast %205 : vector<1x32x32xf32> to vector<32x32xf32>
    %cst_90 = arith.constant 0.000000e+00 : f32
    %207 = vector.broadcast %cst_90 : f32 to vector<32x32xf32>
    %208 = vector.extract_strided_slice %200 {offsets = [0, 0, 0], sizes = [2, 16, 8], strides = [1, 1, 1]} : vector<2x16x32xf32> to vector<2x16x8xf32>
    %209 = vector.extract_strided_slice %202 {offsets = [0, 0, 0], sizes = [2, 16, 8], strides = [1, 1, 1]} : vector<2x16x32xf32> to vector<2x16x8xf32>
    %210 = vector.extract_strided_slice %204 {offsets = [0, 0, 0], sizes = [2, 16, 8], strides = [1, 1, 1]} : vector<2x16x32xf32> to vector<2x16x8xf32>
    "tpu.trace_start"() <{level = 10 : i32, message = "bqd,bkd->bqk"}> : () -> ()
    %cst_91 = arith.constant dense<0.000000e+00> : vector<2x16x16xf32>
    %211 = tpu.matmul %208, %209, %cst_91 {dimension_numbers = #tpu.dot_dimension_numbers<[2], [2], [1], [1], [0, 0, 0, 1, 1, 1], [0], [0]>} : vector<2x16x8xf32>, vector<2x16x8xf32>, vector<2x16x16xf32> -> vector<2x16x16xf32>
    "tpu.trace_stop"() : () -> ()
    %cst_92 = arith.constant 0.353553385 : f32
    %212 = vector.broadcast %cst_92 : f32 to vector<2x16x16xf32>
    %213 = arith.mulf %211, %212 : vector<2x16x16xf32>
    %cst_93 = arith.constant dense<0xFF800000> : vector<2x16xf32>
    %214 = vector.multi_reduction <maximumf>, %213, %cst_93 [2] : vector<2x16x16xf32> to vector<2x16xf32>
    %215 = vector.shape_cast %214 : vector<2x16xf32> to vector<2x16x1xf32>
    %216 = vector.broadcast %215 : vector<2x16x1xf32> to vector<2x16x16xf32>
    %217 = arith.subf %213, %216 : vector<2x16x16xf32>
    %218 = math.exp %217 : vector<2x16x16xf32>
    %cst_94 = arith.constant dense<0.000000e+00> : vector<2x16xf32>
    %219 = vector.multi_reduction <add>, %218, %cst_94 [2] : vector<2x16x16xf32> to vector<2x16xf32>
    %220 = vector.shape_cast %219 : vector<2x16xf32> to vector<2x16x1xf32>
    %221 = tpu.reciprocal %220 {approx = true} : vector<2x16x1xf32> -> vector<2x16x1xf32>
    %222 = vector.broadcast %221 : vector<2x16x1xf32> to vector<2x16x16xf32>
    %223 = arith.mulf %218, %222 : vector<2x16x16xf32>
    "tpu.trace_start"() <{level = 10 : i32, message = "bqk,bkd->bqd"}> : () -> ()
    %cst_95 = arith.constant dense<0.000000e+00> : vector<2x16x8xf32>
    %224 = tpu.matmul %223, %210, %cst_95 {dimension_numbers = #tpu.dot_dimension_numbers<[2], [1], [1], [2], [0, 0, 0, 1, 1, 2], [0], [0]>} : vector<2x16x16xf32>, vector<2x16x8xf32>, vector<2x16x8xf32> -> vector<2x16x8xf32>
    "tpu.trace_stop"() : () -> ()
    %225 = vector.shape_cast %224 : vector<2x16x8xf32> to vector<32x8xf32>
    %226 = vector.extract_strided_slice %206 {offsets = [0, 0], sizes = [8, 32], strides = [1, 1]} : vector<32x32xf32> to vector<8x32xf32>
    %cst_96 = arith.constant dense<0.000000e+00> : vector<32x32xf32>
    %227 = tpu.matmul %225, %226, %cst_96 {dimension_numbers = #tpu.dot_dimension_numbers<[1], [0], [0], [1], [0, 0, 1, 1], [], []>} : vector<32x8xf32>, vector<8x32xf32>, vector<32x32xf32> -> vector<32x32xf32>
    %228 = arith.addf %207, %227 : vector<32x32xf32>
    %229 = vector.extract_strided_slice %200 {offsets = [0, 0, 8], sizes = [2, 16, 8], strides = [1, 1, 1]} : vector<2x16x32xf32> to vector<2x16x8xf32>
    %230 = vector.extract_strided_slice %202 {offsets = [0, 0, 8], sizes = [2, 16, 8], strides = [1, 1, 1]} : vector<2x16x32xf32> to vector<2x16x8xf32>
    %231 = vector.extract_strided_slice %204 {offsets = [0, 0, 8], sizes = [2, 16, 8], strides = [1, 1, 1]} : vector<2x16x32xf32> to vector<2x16x8xf32>
    "tpu.trace_start"() <{level = 10 : i32, message = "bqd,bkd->bqk"}> : () -> ()
    %cst_97 = arith.constant dense<0.000000e+00> : vector<2x16x16xf32>
    %232 = tpu.matmul %229, %230, %cst_97 {dimension_numbers = #tpu.dot_dimension_numbers<[2], [2], [1], [1], [0, 0, 0, 1, 1, 1], [0], [0]>} : vector<2x16x8xf32>, vector<2x16x8xf32>, vector<2x16x16xf32> -> vector<2x16x16xf32>
    "tpu.trace_stop"() : () -> ()
    %cst_98 = arith.constant 0.353553385 : f32
    %233 = vector.broadcast %cst_98 : f32 to vector<2x16x16xf32>
    %234 = arith.mulf %232, %233 : vector<2x16x16xf32>
    %cst_99 = arith.constant dense<0xFF800000> : vector<2x16xf32>
    %235 = vector.multi_reduction <maximumf>, %234, %cst_99 [2] : vector<2x16x16xf32> to vector<2x16xf32>
    %236 = vector.shape_cast %235 : vector<2x16xf32> to vector<2x16x1xf32>
    %237 = vector.broadcast %236 : vector<2x16x1xf32> to vector<2x16x16xf32>
    %238 = arith.subf %234, %237 : vector<2x16x16xf32>
    %239 = math.exp %238 : vector<2x16x16xf32>
    %cst_100 = arith.constant dense<0.000000e+00> : vector<2x16xf32>
    %240 = vector.multi_reduction <add>, %239, %cst_100 [2] : vector<2x16x16xf32> to vector<2x16xf32>
    %241 = vector.shape_cast %240 : vector<2x16xf32> to vector<2x16x1xf32>
    %242 = tpu.reciprocal %241 {approx = true} : vector<2x16x1xf32> -> vector<2x16x1xf32>
    %243 = vector.broadcast %242 : vector<2x16x1xf32> to vector<2x16x16xf32>
    %244 = arith.mulf %239, %243 : vector<2x16x16xf32>
    "tpu.trace_start"() <{level = 10 : i32, message = "bqk,bkd->bqd"}> : () -> ()
    %cst_101 = arith.constant dense<0.000000e+00> : vector<2x16x8xf32>
    %245 = tpu.matmul %244, %231, %cst_101 {dimension_numbers = #tpu.dot_dimension_numbers<[2], [1], [1], [2], [0, 0, 0, 1, 1, 2], [0], [0]>} : vector<2x16x16xf32>, vector<2x16x8xf32>, vector<2x16x8xf32> -> vector<2x16x8xf32>
    "tpu.trace_stop"() : () -> ()
    %246 = vector.shape_cast %245 : vector<2x16x8xf32> to vector<32x8xf32>
    %247 = vector.extract_strided_slice %206 {offsets = [8, 0], sizes = [8, 32], strides = [1, 1]} : vector<32x32xf32> to vector<8x32xf32>
    %cst_102 = arith.constant dense<0.000000e+00> : vector<32x32xf32>
    %248 = tpu.matmul %246, %247, %cst_102 {dimension_numbers = #tpu.dot_dimension_numbers<[1], [0], [0], [1], [0, 0, 1, 1], [], []>} : vector<32x8xf32>, vector<8x32xf32>, vector<32x32xf32> -> vector<32x32xf32>
    %249 = arith.addf %228, %248 : vector<32x32xf32>
    %250 = vector.extract_strided_slice %200 {offsets = [0, 0, 16], sizes = [2, 16, 8], strides = [1, 1, 1]} : vector<2x16x32xf32> to vector<2x16x8xf32>
    %251 = vector.extract_strided_slice %202 {offsets = [0, 0, 16], sizes = [2, 16, 8], strides = [1, 1, 1]} : vector<2x16x32xf32> to vector<2x16x8xf32>
    %252 = vector.extract_strided_slice %204 {offsets = [0, 0, 16], sizes = [2, 16, 8], strides = [1, 1, 1]} : vector<2x16x32xf32> to vector<2x16x8xf32>
    "tpu.trace_start"() <{level = 10 : i32, message = "bqd,bkd->bqk"}> : () -> ()
    %cst_103 = arith.constant dense<0.000000e+00> : vector<2x16x16xf32>
    %253 = tpu.matmul %250, %251, %cst_103 {dimension_numbers = #tpu.dot_dimension_numbers<[2], [2], [1], [1], [0, 0, 0, 1, 1, 1], [0], [0]>} : vector<2x16x8xf32>, vector<2x16x8xf32>, vector<2x16x16xf32> -> vector<2x16x16xf32>
    "tpu.trace_stop"() : () -> ()
    %cst_104 = arith.constant 0.353553385 : f32
    %254 = vector.broadcast %cst_104 : f32 to vector<2x16x16xf32>
    %255 = arith.mulf %253, %254 : vector<2x16x16xf32>
    %cst_105 = arith.constant dense<0xFF800000> : vector<2x16xf32>
    %256 = vector.multi_reduction <maximumf>, %255, %cst_105 [2] : vector<2x16x16xf32> to vector<2x16xf32>
    %257 = vector.shape_cast %256 : vector<2x16xf32> to vector<2x16x1xf32>
    %258 = vector.broadcast %257 : vector<2x16x1xf32> to vector<2x16x16xf32>
    %259 = arith.subf %255, %258 : vector<2x16x16xf32>
    %260 = math.exp %259 : vector<2x16x16xf32>
    %cst_106 = arith.constant dense<0.000000e+00> : vector<2x16xf32>
    %261 = vector.multi_reduction <add>, %260, %cst_106 [2] : vector<2x16x16xf32> to vector<2x16xf32>
    %262 = vector.shape_cast %261 : vector<2x16xf32> to vector<2x16x1xf32>
    %263 = tpu.reciprocal %262 {approx = true} : vector<2x16x1xf32> -> vector<2x16x1xf32>
    %264 = vector.broadcast %263 : vector<2x16x1xf32> to vector<2x16x16xf32>
    %265 = arith.mulf %260, %264 : vector<2x16x16xf32>
    "tpu.trace_start"() <{level = 10 : i32, message = "bqk,bkd->bqd"}> : () -> ()
    %cst_107 = arith.constant dense<0.000000e+00> : vector<2x16x8xf32>
    %266 = tpu.matmul %265, %252, %cst_107 {dimension_numbers = #tpu.dot_dimension_numbers<[2], [1], [1], [2], [0, 0, 0, 1, 1, 2], [0], [0]>} : vector<2x16x16xf32>, vector<2x16x8xf32>, vector<2x16x8xf32> -> vector<2x16x8xf32>
    "tpu.trace_stop"() : () -> ()
    %267 = vector.shape_cast %266 : vector<2x16x8xf32> to vector<32x8xf32>
    %268 = vector.extract_strided_slice %206 {offsets = [16, 0], sizes = [8, 32], strides = [1, 1]} : vector<32x32xf32> to vector<8x32xf32>
    %cst_108 = arith.constant dense<0.000000e+00> : vector<32x32xf32>
    %269 = tpu.matmul %267, %268, %cst_108 {dimension_numbers = #tpu.dot_dimension_numbers<[1], [0], [0], [1], [0, 0, 1, 1], [], []>} : vector<32x8xf32>, vector<8x32xf32>, vector<32x32xf32> -> vector<32x32xf32>
    %270 = arith.addf %249, %269 : vector<32x32xf32>
    %271 = vector.extract_strided_slice %200 {offsets = [0, 0, 24], sizes = [2, 16, 8], strides = [1, 1, 1]} : vector<2x16x32xf32> to vector<2x16x8xf32>
    %272 = vector.extract_strided_slice %202 {offsets = [0, 0, 24], sizes = [2, 16, 8], strides = [1, 1, 1]} : vector<2x16x32xf32> to vector<2x16x8xf32>
    %273 = vector.extract_strided_slice %204 {offsets = [0, 0, 24], sizes = [2, 16, 8], strides = [1, 1, 1]} : vector<2x16x32xf32> to vector<2x16x8xf32>
    "tpu.trace_start"() <{level = 10 : i32, message = "bqd,bkd->bqk"}> : () -> ()
    %cst_109 = arith.constant dense<0.000000e+00> : vector<2x16x16xf32>
    %274 = tpu.matmul %271, %272, %cst_109 {dimension_numbers = #tpu.dot_dimension_numbers<[2], [2], [1], [1], [0, 0, 0, 1, 1, 1], [0], [0]>} : vector<2x16x8xf32>, vector<2x16x8xf32>, vector<2x16x16xf32> -> vector<2x16x16xf32>
    "tpu.trace_stop"() : () -> ()
    %cst_110 = arith.constant 0.353553385 : f32
    %275 = vector.broadcast %cst_110 : f32 to vector<2x16x16xf32>
    %276 = arith.mulf %274, %275 : vector<2x16x16xf32>
    %cst_111 = arith.constant dense<0xFF800000> : vector<2x16xf32>
    %277 = vector.multi_reduction <maximumf>, %276, %cst_111 [2] : vector<2x16x16xf32> to vector<2x16xf32>
    %278 = vector.shape_cast %277 : vector<2x16xf32> to vector<2x16x1xf32>
    %279 = vector.broadcast %278 : vector<2x16x1xf32> to vector<2x16x16xf32>
    %280 = arith.subf %276, %279 : vector<2x16x16xf32>
    %281 = math.exp %280 : vector<2x16x16xf32>
    %cst_112 = arith.constant dense<0.000000e+00> : vector<2x16xf32>
    %282 = vector.multi_reduction <add>, %281, %cst_112 [2] : vector<2x16x16xf32> to vector<2x16xf32>
    %283 = vector.shape_cast %282 : vector<2x16xf32> to vector<2x16x1xf32>
    %284 = tpu.reciprocal %283 {approx = true} : vector<2x16x1xf32> -> vector<2x16x1xf32>
    %285 = vector.broadcast %284 : vector<2x16x1xf32> to vector<2x16x16xf32>
    %286 = arith.mulf %281, %285 : vector<2x16x16xf32>
    "tpu.trace_start"() <{level = 10 : i32, message = "bqk,bkd->bqd"}> : () -> ()
    %cst_113 = arith.constant dense<0.000000e+00> : vector<2x16x8xf32>
    %287 = tpu.matmul %286, %273, %cst_113 {dimension_numbers = #tpu.dot_dimension_numbers<[2], [1], [1], [2], [0, 0, 0, 1, 1, 2], [0], [0]>} : vector<2x16x16xf32>, vector<2x16x8xf32>, vector<2x16x8xf32> -> vector<2x16x8xf32>
    "tpu.trace_stop"() : () -> ()
    %288 = vector.shape_cast %287 : vector<2x16x8xf32> to vector<32x8xf32>
    %289 = vector.extract_strided_slice %206 {offsets = [24, 0], sizes = [8, 32], strides = [1, 1]} : vector<32x32xf32> to vector<8x32xf32>
    %cst_114 = arith.constant dense<0.000000e+00> : vector<32x32xf32>
    %290 = tpu.matmul %288, %289, %cst_114 {dimension_numbers = #tpu.dot_dimension_numbers<[1], [0], [0], [1], [0, 0, 1, 1], [], []>} : vector<32x8xf32>, vector<8x32xf32>, vector<32x32xf32> -> vector<32x32xf32>
    %291 = arith.addf %270, %290 : vector<32x32xf32>
    %c1_115 = arith.constant 1 : index
    %c0_116 = arith.constant 0 : index
    %c0_117 = arith.constant 0 : index
    %292 = vector.load %arg5[%c1_115, %c0_116, %c0_117] : memref<2x1x32xf32, #tpu.memory_space<vmem>>, vector<1x1x32xf32>
    %293 = vector.shape_cast %292 : vector<1x1x32xf32> to vector<1x32xf32>
    %294 = vector.broadcast %293 : vector<1x32xf32> to vector<32x32xf32>
    %295 = arith.addf %291, %294 : vector<32x32xf32>
    %296 = arith.addf %191, %295 : vector<32x32xf32>
    %c1_118 = arith.constant 1 : index
    %c0_119 = arith.constant 0 : index
    %c0_120 = arith.constant 0 : index
    %297 = vector.load %arg6[%c1_118, %c0_119, %c0_120] : memref<2x1x32xf32, #tpu.memory_space<vmem>>, vector<1x1x32xf32>
    %298 = vector.shape_cast %297 : vector<1x1x32xf32> to vector<1x32xf32>
    %c1_121 = arith.constant 1 : index
    %c0_122 = arith.constant 0 : index
    %c0_123 = arith.constant 0 : index
    %299 = vector.load %arg7[%c1_121, %c0_122, %c0_123] : memref<2x1x32xf32, #tpu.memory_space<vmem>>, vector<1x1x32xf32>
    %300 = vector.shape_cast %299 : vector<1x1x32xf32> to vector<1x32xf32>
    %cst_124 = arith.constant dense<0.000000e+00> : vector<32xf32>
    %301 = vector.multi_reduction <add>, %296, %cst_124 [1] : vector<32x32xf32> to vector<32xf32>
    %302 = vector.shape_cast %301 : vector<32xf32> to vector<32x1xf32>
    %cst_125 = arith.constant 3.200000e+01 : f32
    %303 = vector.broadcast %cst_125 : f32 to vector<32x1xf32>
    %304 = arith.divf %302, %303 : vector<32x1xf32>
    %305 = vector.broadcast %304 : vector<32x1xf32> to vector<32x32xf32>
    %306 = arith.subf %296, %305 : vector<32x32xf32>
    %307 = arith.mulf %306, %306 : vector<32x32xf32>
    %cst_126 = arith.constant dense<0.000000e+00> : vector<32xf32>
    %308 = vector.multi_reduction <add>, %307, %cst_126 [1] : vector<32x32xf32> to vector<32xf32>
    %309 = vector.shape_cast %308 : vector<32xf32> to vector<32x1xf32>
    %cst_127 = arith.constant 3.200000e+01 : f32
    %310 = vector.broadcast %cst_127 : f32 to vector<32x1xf32>
    %311 = arith.divf %309, %310 : vector<32x1xf32>
    %312 = vector.broadcast %304 : vector<32x1xf32> to vector<32x32xf32>
    %313 = arith.subf %296, %312 : vector<32x32xf32>
    %cst_128 = arith.constant 9.99999996E-13 : f32
    %314 = vector.broadcast %cst_128 : f32 to vector<32x1xf32>
    %315 = arith.addf %311, %314 : vector<32x1xf32>
    %316 = math.rsqrt %315 : vector<32x1xf32>
    %317 = vector.broadcast %316 : vector<32x1xf32> to vector<32x32xf32>
    %318 = arith.mulf %313, %317 : vector<32x32xf32>
    %319 = vector.broadcast %298 : vector<1x32xf32> to vector<32x32xf32>
    %320 = arith.mulf %318, %319 : vector<32x32xf32>
    %321 = vector.broadcast %300 : vector<1x32xf32> to vector<32x32xf32>
    %322 = arith.addf %320, %321 : vector<32x32xf32>
    %c1_129 = arith.constant 1 : index
    %c0_130 = arith.constant 0 : index
    %c0_131 = arith.constant 0 : index
    %323 = vector.load %arg8[%c1_129, %c0_130, %c0_131] : memref<2x32x64xf32, #tpu.memory_space<vmem>>, vector<1x32x64xf32>
    %324 = vector.shape_cast %323 : vector<1x32x64xf32> to vector<32x64xf32>
    %cst_132 = arith.constant dense<0.000000e+00> : vector<32x64xf32>
    %325 = tpu.matmul %322, %324, %cst_132 {dimension_numbers = #tpu.dot_dimension_numbers<[1], [0], [0], [1], [0, 0, 1, 1], [], []>} : vector<32x32xf32>, vector<32x64xf32>, vector<32x64xf32> -> vector<32x64xf32>
    %c1_133 = arith.constant 1 : index
    %c0_134 = arith.constant 0 : index
    %c0_135 = arith.constant 0 : index
    %326 = vector.load %arg9[%c1_133, %c0_134, %c0_135] : memref<2x1x64xf32, #tpu.memory_space<vmem>>, vector<1x1x64xf32>
    %327 = vector.shape_cast %326 : vector<1x1x64xf32> to vector<1x64xf32>
    %328 = vector.broadcast %327 : vector<1x64xf32> to vector<32x64xf32>
    %329 = arith.addf %325, %328 : vector<32x64xf32>
    %330 = arith.mulf %329, %329 : vector<32x64xf32>
    %331 = arith.mulf %329, %330 : vector<32x64xf32>
    %cst_136 = arith.constant 4.471500e-02 : f32
    %332 = vector.broadcast %cst_136 : f32 to vector<32x64xf32>
    %333 = arith.mulf %332, %331 : vector<32x64xf32>
    %334 = arith.addf %329, %333 : vector<32x64xf32>
    %cst_137 = arith.constant 0.797884583 : f32
    %335 = vector.broadcast %cst_137 : f32 to vector<32x64xf32>
    %336 = arith.mulf %335, %334 : vector<32x64xf32>
    %337 = math.tanh %336 : vector<32x64xf32>
    %cst_138 = arith.constant 1.000000e+00 : f32
    %338 = vector.broadcast %cst_138 : f32 to vector<32x64xf32>
    %339 = arith.addf %338, %337 : vector<32x64xf32>
    %cst_139 = arith.constant 5.000000e-01 : f32
    %340 = vector.broadcast %cst_139 : f32 to vector<32x64xf32>
    %341 = arith.mulf %340, %339 : vector<32x64xf32>
    %342 = arith.mulf %329, %341 : vector<32x64xf32>
    %c1_140 = arith.constant 1 : index
    %c0_141 = arith.constant 0 : index
    %c0_142 = arith.constant 0 : index
    %343 = vector.load %arg10[%c1_140, %c0_141, %c0_142] : memref<2x64x32xf32, #tpu.memory_space<vmem>>, vector<1x64x32xf32>
    %344 = vector.shape_cast %343 : vector<1x64x32xf32> to vector<64x32xf32>
    %cst_143 = arith.constant dense<0.000000e+00> : vector<32x32xf32>
    %345 = tpu.matmul %342, %344, %cst_143 {dimension_numbers = #tpu.dot_dimension_numbers<[1], [0], [0], [1], [0, 0, 1, 1], [], []>} : vector<32x64xf32>, vector<64x32xf32>, vector<32x32xf32> -> vector<32x32xf32>
    %c1_144 = arith.constant 1 : index
    %c0_145 = arith.constant 0 : index
    %c0_146 = arith.constant 0 : index
    %346 = vector.load %arg11[%c1_144, %c0_145, %c0_146] : memref<2x1x32xf32, #tpu.memory_space<vmem>>, vector<1x1x32xf32>
    %347 = vector.shape_cast %346 : vector<1x1x32xf32> to vector<1x32xf32>
    %348 = vector.broadcast %347 : vector<1x32xf32> to vector<32x32xf32>
    %349 = arith.addf %345, %348 : vector<32x32xf32>
    %350 = arith.addf %322, %349 : vector<32x32xf32>
    %c1_147 = arith.constant 1 : index
    %c0_148 = arith.constant 0 : index
    %c0_149 = arith.constant 0 : index
    %351 = vector.load %arg12[%c1_147, %c0_148, %c0_149] : memref<2x1x32xf32, #tpu.memory_space<vmem>>, vector<1x1x32xf32>
    %352 = vector.shape_cast %351 : vector<1x1x32xf32> to vector<1x32xf32>
    %c1_150 = arith.constant 1 : index
    %c0_151 = arith.constant 0 : index
    %c0_152 = arith.constant 0 : index
    %353 = vector.load %arg13[%c1_150, %c0_151, %c0_152] : memref<2x1x32xf32, #tpu.memory_space<vmem>>, vector<1x1x32xf32>
    %354 = vector.shape_cast %353 : vector<1x1x32xf32> to vector<1x32xf32>
    %cst_153 = arith.constant dense<0.000000e+00> : vector<32xf32>
    %355 = vector.multi_reduction <add>, %350, %cst_153 [1] : vector<32x32xf32> to vector<32xf32>
    %356 = vector.shape_cast %355 : vector<32xf32> to vector<32x1xf32>
    %cst_154 = arith.constant 3.200000e+01 : f32
    %357 = vector.broadcast %cst_154 : f32 to vector<32x1xf32>
    %358 = arith.divf %356, %357 : vector<32x1xf32>
    %359 = vector.broadcast %358 : vector<32x1xf32> to vector<32x32xf32>
    %360 = arith.subf %350, %359 : vector<32x32xf32>
    %361 = arith.mulf %360, %360 : vector<32x32xf32>
    %cst_155 = arith.constant dense<0.000000e+00> : vector<32xf32>
    %362 = vector.multi_reduction <add>, %361, %cst_155 [1] : vector<32x32xf32> to vector<32xf32>
    %363 = vector.shape_cast %362 : vector<32xf32> to vector<32x1xf32>
    %cst_156 = arith.constant 3.200000e+01 : f32
    %364 = vector.broadcast %cst_156 : f32 to vector<32x1xf32>
    %365 = arith.divf %363, %364 : vector<32x1xf32>
    %366 = vector.broadcast %358 : vector<32x1xf32> to vector<32x32xf32>
    %367 = arith.subf %350, %366 : vector<32x32xf32>
    %cst_157 = arith.constant 9.99999996E-13 : f32
    %368 = vector.broadcast %cst_157 : f32 to vector<32x1xf32>
    %369 = arith.addf %365, %368 : vector<32x1xf32>
    %370 = math.rsqrt %369 : vector<32x1xf32>
    %371 = vector.broadcast %370 : vector<32x1xf32> to vector<32x32xf32>
    %372 = arith.mulf %367, %371 : vector<32x32xf32>
    %373 = vector.broadcast %352 : vector<1x32xf32> to vector<32x32xf32>
    %374 = arith.mulf %372, %373 : vector<32x32xf32>
    %375 = vector.broadcast %354 : vector<1x32xf32> to vector<32x32xf32>
    %376 = arith.addf %374, %375 : vector<32x32xf32>
    %377 = vector.shape_cast %376 : vector<32x32xf32> to vector<2x16x32xf32>
    %378 = vector.extract_strided_slice %377 {offsets = [0, 0, 0], sizes = [2, 1, 32], strides = [1, 1, 1]} : vector<2x16x32xf32> to vector<2x1x32xf32>
    %379 = vector.shape_cast %378 : vector<2x1x32xf32> to vector<2x32xf32>
    %c0_158 = arith.constant 0 : index
    %c0_159 = arith.constant 0 : index
    %380 = vector.load %arg14[%c0_158, %c0_159] : memref<32x32xf32, #tpu.memory_space<vmem>>, vector<32x32xf32>
    %cst_160 = arith.constant dense<0.000000e+00> : vector<2x32xf32>
    %381 = tpu.matmul %379, %380, %cst_160 {dimension_numbers = #tpu.dot_dimension_numbers<[1], [0], [0], [1], [0, 0, 1, 1], [], []>} : vector<2x32xf32>, vector<32x32xf32>, vector<2x32xf32> -> vector<2x32xf32>
    %c0_161 = arith.constant 0 : index
    %c0_162 = arith.constant 0 : index
    %382 = vector.load %arg15[%c0_161, %c0_162] : memref<1x32xf32, #tpu.memory_space<vmem>>, vector<1x32xf32>
    %383 = vector.broadcast %382 : vector<1x32xf32> to vector<2x32xf32>
    %384 = arith.addf %381, %383 : vector<2x32xf32>
    %385 = math.tanh %384 : vector<2x32xf32>
    %c0_163 = arith.constant 0 : index
    %c0_164 = arith.constant 0 : index
    %386 = vector.load %arg16[%c0_163, %c0_164] : memref<32x1xf32, #tpu.memory_space<vmem>>, vector<32x1xf32>
    %cst_165 = arith.constant dense<0.000000e+00> : vector<2x1xf32>
    %387 = tpu.matmul %385, %386, %cst_165 {dimension_numbers = #tpu.dot_dimension_numbers<[1], [0], [0], [1], [0, 0, 1, 1], [], []>} : vector<2x32xf32>, vector<32x1xf32>, vector<2x1xf32> -> vector<2x1xf32>
    %c0_166 = arith.constant 0 : index
    %c0_167 = arith.constant 0 : index
    %388 = vector.load %arg17[%c0_166, %c0_167] : memref<1x1xf32, #tpu.memory_space<vmem>>, vector<1x1xf32>
    %389 = vector.broadcast %388 : vector<1x1xf32> to vector<2x1xf32>
    %390 = arith.addf %387, %389 : vector<2x1xf32>
    %391 = arith.negf %390 : vector<2x1xf32>
    %392 = math.exp %391 : vector<2x1xf32>
    %cst_168 = arith.constant 1.000000e+00 : f32
    %393 = vector.broadcast %cst_168 : f32 to vector<2x1xf32>
    %394 = arith.addf %393, %392 : vector<2x1xf32>
    %395 = arith.divf %393, %394 : vector<2x1xf32>
    %c0_169 = arith.constant 0 : index
    %c0_170 = arith.constant 0 : index
    %396 = vector.load %arg18[%c0_169, %c0_170] : memref<2x1xf32, #tpu.memory_space<vmem>>, vector<2x1xf32>
    tpu.vector_store %arg18[%c0_169, %c0_170], %395 {strides = array<i32>} : memref<2x1xf32, #tpu.memory_space<vmem>>, vector<2x1xf32>,
    return
  }
}

</mosaic_0001>

<llo_original>
// kernel: tpu_custom_call.1
$region0: #{tpu_custom_call.1}
  #allocation0 [shape = 'u32[]', space=smem, size = 0x4, offset = 0x4, fixed_abs, tag = 'smem constant byte address 0x4 - core index']
  #allocation1 [shape = 'u32[144,128]{1,0:T(1,128)}', space=vmem, size = 0x12000, scoped, tag = 'internal scratch']
  #allocation2 [shape = 'f32[1,1]{1,0:T(1,128)S(1)}', space=vmem, size = 0x200, scoped, tag = 'scoped memory for tpu_custom_call.1']
  %s0 = inlined_call_operand.hbm [shape: f32[2,8,32], index: 0, kind: input, shape index: {}]
  %s1 = inlined_call_operand.vmem [shape: f32[8,32], index: 1, kind: input, shape index: {}]
  %s2 = inlined_call_operand.vmem [shape: f32[2,32,96], index: 2, kind: input, shape index: {}]
  %s3 = inlined_call_operand.vmem [shape: f32[2,1,96], index: 3, kind: input, shape index: {}]
  %s4 = inlined_call_operand.vmem [shape: f32[2,32,32], index: 4, kind: input, shape index: {}]
  %s5 = inlined_call_operand.hbm [shape: f32[2,1,32], index: 5, kind: input, shape index: {}]
  %s6 = inlined_call_operand.hbm [shape: f32[2,1,32], index: 6, kind: input, shape index: {}]
  %s7 = inlined_call_operand.hbm [shape: f32[2,1,32], index: 7, kind: input, shape index: {}]
  %s8 = inlined_call_operand.vmem [shape: f32[2,32,64], index: 8, kind: input, shape index: {}]
  %s9 = inlined_call_operand.hbm [shape: f32[2,1,64], index: 9, kind: input, shape index: {}]
  %s10 = inlined_call_operand.vmem [shape: f32[2,64,32], index: 10, kind: input, shape index: {}]
  %s11 = inlined_call_operand.vmem [shape: f32[2,1,32], index: 11, kind: input, shape index: {}]
  %s12 = inlined_call_operand.vmem [shape: f32[2,1,32], index: 12, kind: input, shape index: {}]
  %s13 = inlined_call_operand.vmem [shape: f32[2,1,32], index: 13, kind: input, shape index: {}]
  %s14 = inlined_call_operand.hbm [shape: f32[32,32], index: 14, kind: input, shape index: {}]
  %s15 = inlined_call_operand.vmem [shape: f32[1,32], index: 15, kind: input, shape index: {}]
  %s16 = inlined_call_operand.vmem [shape: f32[32,1], index: 16, kind: input, shape index: {}]
  %s17 = inlined_call_operand.<no memory space> [shape: f32[1,1], index: 17, kind: input, shape index: {}]
  %s18 = inlined_call_operand.vmem [shape: f32[2,1], index: 18, kind: output, shape index: {}]
  %s19 = sld [smem:[#allocation0]]
  $region106: #{tpu_custom_call.1} parent=0
    _
  %s21 = ssub.s32 1, %s19
  %s22 = scalar_select 0, %s21, %s19
  %v23 = vstv %s17
  %24 = vst [vmem:[#allocation2] sm:$0x1] %v23
  $region1: #{tpu_custom_call.1} parent=0
    #allocation3 [shape = 'u8[8192]{0}', space=vmem, size = 0x2000, scoped, tag = 'input window, operand 0, single buffered']
    #allocation4 [shape = 's32[1]{0}', space=sflag, size = 0x4, scoped, tag = 'scoped memory for tpu_custom_call.1']
    #allocation5 [shape = 'u8[1024]{0}', space=vmem, size = 0x400, scoped, tag = 'input window, operand 5, single buffered']
    #allocation6 [shape = 's32[1]{0}', space=sflag, size = 0x4, scoped, tag = 'scoped memory for tpu_custom_call.1']
    #allocation7 [shape = 'u8[1024]{0}', space=vmem, size = 0x400, scoped, tag = 'input window, operand 6, single buffered']
    #allocation8 [shape = 'u8[1024]{0}', space=vmem, size = 0x400, scoped, tag = 'input window, operand 7, single buffered']
    #allocation9 [shape = 's32[1]{0}', space=sflag, size = 0x4, scoped, tag = 'scoped memory for tpu_custom_call.1']
    #allocation10 [shape = 'u8[1024]{0}', space=vmem, size = 0x400, scoped, tag = 'input window, operand 9, single buffered']
    #allocation11 [shape = 'u8[16384]{0}', space=vmem, size = 0x4000, scoped, tag = 'input window, operand 14, single buffered']
    #allocation12 [shape = 's32[1]{0}', space=sflag, size = 0x4, scoped, tag = 'scoped memory for tpu_custom_call.1']
    %25 = vsyncpa [#allocation4], 0
    %26 = vsyncpa [#allocation6], 0
    %27 = vsyncpa [#allocation9], 0
    %28 = vsyncpa [#allocation12], 0
    // Predicated region
    $region2: #{tpu_custom_call.1} parent=1 // pred_check
      _
    $region3: #{tpu_custom_call.1} parent=1 // pred_check_branch
      %30 = sbr.rel (0) target = $region5
    $region4: #{tpu_custom_call.1} parent=1 // pred_region
      %s32 = ssub.s32 256, 256
      %33 = vsyncadd [#allocation4], %s32
      %s34 = sshll.u32 [#allocation3], 4
      %s35 = int_to_ptr.vmem [resolvable:$true] %s34
      %40 = dma.hbm_to_vmem [thread:$0]  %s0, 256, %s35, [#allocation4], 128, 128, 8
    $region5: #{tpu_custom_call.1} parent=1 // pred_fallthru
      _
    // Predicated region
    $region6: #{tpu_custom_call.1} parent=1 // pred_check
      _
    $region7: #{tpu_custom_call.1} parent=1 // pred_check_branch
      %42 = sbr.rel (0) target = $region9
    $region8: #{tpu_custom_call.1} parent=1 // pred_region
      _
    $region9: #{tpu_custom_call.1} parent=1 // pred_fallthru
      _
    // Predicated region
    $region10: #{tpu_custom_call.1} parent=1 // pred_check
      _
    $region11: #{tpu_custom_call.1} parent=1 // pred_check_branch
      %44 = sbr.rel (0) target = $region13
    $region12: #{tpu_custom_call.1} parent=1 // pred_region
      _
    $region13: #{tpu_custom_call.1} parent=1 // pred_fallthru
      _
    // Predicated region
    $region14: #{tpu_custom_call.1} parent=1 // pred_check
      _
    $region15: #{tpu_custom_call.1} parent=1 // pred_check_branch
      %46 = sbr.rel (0) target = $region17
    $region16: #{tpu_custom_call.1} parent=1 // pred_region
      _
    $region17: #{tpu_custom_call.1} parent=1 // pred_fallthru
      _
    // Predicated region
    $region18: #{tpu_custom_call.1} parent=1 // pred_check
      _
    $region19: #{tpu_custom_call.1} parent=1 // pred_check_branch
      %48 = sbr.rel (0) target = $region21
    $region20: #{tpu_custom_call.1} parent=1 // pred_region
      _
    $region21: #{tpu_custom_call.1} parent=1 // pred_fallthru
      _
    // Predicated region
    $region22: #{tpu_custom_call.1} parent=1 // pred_check
      _
    $region23: #{tpu_custom_call.1} parent=1 // pred_check_branch
      %50 = sbr.rel (0) target = $region25
    $region24: #{tpu_custom_call.1} parent=1 // pred_region
      %s52 = ssub.s32 32, 32
      %53 = vsyncadd [#allocation6], %s52
      %s54 = sshll.u32 [#allocation5], 4
      %s55 = int_to_ptr.vmem [resolvable:$true] %s54
      %60 = dma.hbm_to_vmem [thread:$0]  %s5, 32, %s55, [#allocation6], 16, 16, 1
    $region25: #{tpu_custom_call.1} parent=1 // pred_fallthru
      _
    // Predicated region
    $region26: #{tpu_custom_call.1} parent=1 // pred_check
      _
    $region27: #{tpu_custom_call.1} parent=1 // pred_check_branch
      %62 = sbr.rel (0) target = $region29
    $region28: #{tpu_custom_call.1} parent=1 // pred_region
      %s64 = ssub.s32 32, 32
      %65 = vsyncadd [#allocation6], %s64
      %s66 = sshll.u32 [#allocation7], 4
      %s67 = int_to_ptr.vmem [resolvable:$true] %s66
      %72 = dma.hbm_to_vmem [thread:$0]  %s6, 32, %s67, [#allocation6], 16, 16, 1
    $region29: #{tpu_custom_call.1} parent=1 // pred_fallthru
      _
    // Predicated region
    $region30: #{tpu_custom_call.1} parent=1 // pred_check
      _
    $region31: #{tpu_custom_call.1} parent=1 // pred_check_branch
      %74 = sbr.rel (0) target = $region33
    $region32: #{tpu_custom_call.1} parent=1 // pred_region
      %s76 = ssub.s32 32, 32
      %77 = vsyncadd [#allocation9], %s76
      %s78 = sshll.u32 [#allocation8], 4
      %s79 = int_to_ptr.vmem [resolvable:$true] %s78
      %84 = dma.hbm_to_vmem [thread:$0]  %s7, 32, %s79, [#allocation9], 16, 16, 1
    $region33: #{tpu_custom_call.1} parent=1 // pred_fallthru
      _
    // Predicated region
    $region34: #{tpu_custom_call.1} parent=1 // pred_check
      _
    $region35: #{tpu_custom_call.1} parent=1 // pred_check_branch
      %86 = sbr.rel (0) target = $region37
    $region36: #{tpu_custom_call.1} parent=1 // pred_region
      _
    $region37: #{tpu_custom_call.1} parent=1 // pred_fallthru
      _
    // Predicated region
    $region38: #{tpu_custom_call.1} parent=1 // pred_check
      _
    $region39: #{tpu_custom_call.1} parent=1 // pred_check_branch
      %88 = sbr.rel (0) target = $region41
    $region40: #{tpu_custom_call.1} parent=1 // pred_region
      %s90 = ssub.s32 32, 32
      %91 = vsyncadd [#allocation9], %s90
      %s92 = sshll.u32 [#allocation10], 4
      %s93 = int_to_ptr.vmem [resolvable:$true] %s92
      %98 = dma.hbm_to_vmem [thread:$0]  %s9, 32, %s93, [#allocation9], 16, 16, 1
    $region41: #{tpu_custom_call.1} parent=1 // pred_fallthru
      _
    // Predicated region
    $region42: #{tpu_custom_call.1} parent=1 // pred_check
      _
    $region43: #{tpu_custom_call.1} parent=1 // pred_check_branch
      %100 = sbr.rel (0) target = $region45
    $region44: #{tpu_custom_call.1} parent=1 // pred_region
      _
    $region45: #{tpu_custom_call.1} parent=1 // pred_fallthru
      _
    // Predicated region
    $region46: #{tpu_custom_call.1} parent=1 // pred_check
      _
    $region47: #{tpu_custom_call.1} parent=1 // pred_check_branch
      %102 = sbr.rel (0) target = $region49
    $region48: #{tpu_custom_call.1} parent=1 // pred_region
      _
    $region49: #{tpu_custom_call.1} parent=1 // pred_fallthru
      _
    // Predicated region
    $region50: #{tpu_custom_call.1} parent=1 // pred_check
      _
    $region51: #{tpu_custom_call.1} parent=1 // pred_check_branch
      %104 = sbr.rel (0) target = $region53
    $region52: #{tpu_custom_call.1} parent=1 // pred_region
      _
    $region53: #{tpu_custom_call.1} parent=1 // pred_fallthru
      _
    // Predicated region
    $region54: #{tpu_custom_call.1} parent=1 // pred_check
      _
    $region55: #{tpu_custom_call.1} parent=1 // pred_check_branch
      %106 = sbr.rel (0) target = $region57
    $region56: #{tpu_custom_call.1} parent=1 // pred_region
      _
    $region57: #{tpu_custom_call.1} parent=1 // pred_fallthru
      _
    // Predicated region
    $region58: #{tpu_custom_call.1} parent=1 // pred_check
      _
    $region59: #{tpu_custom_call.1} parent=1 // pred_check_branch
      %108 = sbr.rel (0) target = $region61
    $region60: #{tpu_custom_call.1} parent=1 // pred_region
      %s110 = ssub.s32 512, 512
      %111 = vsyncadd [#allocation12], %s110
      %s112 = sshll.u32 [#allocation11], 4
      %s113 = int_to_ptr.vmem [resolvable:$true] %s112
      %118 = dma.hbm_to_vmem [thread:$0]  %s14, 512, %s113, [#allocation12], 128, 128, 8
    $region61: #{tpu_custom_call.1} parent=1 // pred_fallthru
      _
    // Predicated region
    $region62: #{tpu_custom_call.1} parent=1 // pred_check
      _
    $region63: #{tpu_custom_call.1} parent=1 // pred_check_branch
      %120 = sbr.rel (0) target = $region65
    $region64: #{tpu_custom_call.1} parent=1 // pred_region
      _
    $region65: #{tpu_custom_call.1} parent=1 // pred_fallthru
      _
    // Predicated region
    $region66: #{tpu_custom_call.1} parent=1 // pred_check
      _
    $region67: #{tpu_custom_call.1} parent=1 // pred_check_branch
      %122 = sbr.rel (0) target = $region69
    $region68: #{tpu_custom_call.1} parent=1 // pred_region
      _
    $region69: #{tpu_custom_call.1} parent=1 // pred_fallthru
      _
    // Predicated region
    $region70: #{tpu_custom_call.1} parent=1 // pred_check
      _
    $region71: #{tpu_custom_call.1} parent=1 // pred_check_branch
      %124 = sbr.rel (0) target = $region73
    $region72: #{tpu_custom_call.1} parent=1 // pred_region
      _
    $region73: #{tpu_custom_call.1} parent=1 // pred_fallthru
      _
    // Predicated region
    $region74: #{tpu_custom_call.1} parent=1 // pred_check
      _
    $region75: #{tpu_custom_call.1} parent=1 // pred_check_branch
      %126 = sbr.rel (0) target = $region77
    $region76: #{tpu_custom_call.1} parent=1 // pred_region
      %127 = dma.done [#allocation4], 256
    $region77: #{tpu_custom_call.1} parent=1 // pred_fallthru
      _
    // Predicated region
    $region78: #{tpu_custom_call.1} parent=1 // pred_check
      _
    $region79: #{tpu_custom_call.1} parent=1 // pred_check_branch
      %129 = sbr.rel (0) target = $region81
    $region80: #{tpu_custom_call.1} parent=1 // pred_region
      %130 = dma.done [#allocation6], 32
    $region81: #{tpu_custom_call.1} parent=1 // pred_fallthru
      _
    // Predicated region
    $region82: #{tpu_custom_call.1} parent=1 // pred_check
      _
    $region83: #{tpu_custom_call.1} parent=1 // pred_check_branch
      %132 = sbr.rel (0) target = $region85
    $region84: #{tpu_custom_call.1} parent=1 // pred_region
      %133 = dma.done [#allocation6], 32
    $region85: #{tpu_custom_call.1} parent=1 // pred_fallthru
      _
    // Predicated region
    $region86: #{tpu_custom_call.1} parent=1 // pred_check
      _
    $region87: #{tpu_custom_call.1} parent=1 // pred_check_branch
      %135 = sbr.rel (0) target = $region89
    $region88: #{tpu_custom_call.1} parent=1 // pred_region
      %136 = dma.done [#allocation9], 32
    $region89: #{tpu_custom_call.1} parent=1 // pred_fallthru
      _
    // Predicated region
    $region90: #{tpu_custom_call.1} parent=1 // pred_check
      _
    $region91: #{tpu_custom_call.1} parent=1 // pred_check_branch
      %138 = sbr.rel (0) target = $region93
    $region92: #{tpu_custom_call.1} parent=1 // pred_region
      %139 = dma.done [#allocation9], 32
    $region93: #{tpu_custom_call.1} parent=1 // pred_fallthru
      _
    // Predicated region
    $region94: #{tpu_custom_call.1} parent=1 // pred_check
      _
    $region95: #{tpu_custom_call.1} parent=1 // pred_check_branch
      %141 = sbr.rel (0) target = $region97
    $region96: #{tpu_custom_call.1} parent=1 // pred_region
      %142 = dma.done [#allocation12], 512
    $region97: #{tpu_custom_call.1} parent=1 // pred_fallthru
      _
    %v143 = vld [vmem:[#allocation3] sm:$0xff]
    %v144 = vld [vmem:[#allocation3 + $0x8] sm:$0xff]
    %v145 = vld [vmem:[%s1] sm:$0xff]
    %v146 = vld [vmem:[%s2] sm:$0xff]
    %v147 = vld [vmem:[%s2 + $0x8] sm:$0xff]
    %v148 = vld [vmem:[%s2 + $0x10] sm:$0xff]
    %v149 = vld [vmem:[%s2 + $0x18] sm:$0xff]
    %v150 = vld [vmem:[%s3] sm:$0x1]
    %v152 = vlaneseq
    %v153 = vshrl.u32 %v152, 7
    %v154 = vsub.s32 0, %v153
    %v155 = vrot.slane %v150, %v154
    %vm157 = vcmask 261120
    %v159 = vsel %vm157, %v145, 0
    %v162 = vsel %vm157, %v143, 0
    %v165 = vsel %vm157, %v144, 0
    %167 = vmatprep.subr.mxu0 0.0
    %168 = vmatpush1.msra.mxu0 %v146
    %169 = vmatprep.subr.mxu0 0.0
    %170 = vmatpush1.msra.mxu0 %v147
    %171 = vmatprep.subr.mxu0 0.0
    %172 = vmatpush1.msra.mxu0 %v148
    %173 = vmatprep.subr.mxu0 0.0
    %174 = vmatpush1.msra.mxu0 %v149
    %175 = vmatprep.subr.mxu0 0.0
    %176 = vmatpush1.msra.mxu0 0.0
    %177 = vmatprep.subr.mxu0 0.0
    %178 = vmatpush1.msra.mxu0 0.0
    %179 = vmatprep.subr.mxu0 0.0
    %180 = vmatpush1.msra.mxu0 0.0
    %181 = vmatprep.subr.mxu0 0.0
    %182 = vmatpush1.msra.mxu0 0.0
    %183 = vmatprep.subr.mxu0 0.0
    %184 = vmatpush1.msra.mxu0 0.0
    %185 = vmatprep.subr.mxu0 0.0
    %186 = vmatpush1.msra.mxu0 0.0
    %187 = vmatprep.subr.mxu0 0.0
    %188 = vmatpush1.msra.mxu0 0.0
    %189 = vmatprep.subr.mxu0 0.0
    %190 = vmatpush1.msra.mxu0 0.0
    %191 = vmatprep.subr.mxu0 0.0
    %192 = vmatpush1.msra.mxu0 0.0
    %193 = vmatprep.subr.mxu0 0.0
    %194 = vmatpush1.msra.mxu0 0.0
    %195 = vmatprep.subr.mxu0 0.0
    %196 = vmatpush1.msra.mxu0 0.0
    %197 = vmatprep.subr.mxu0 0.0
    %198 = vmatpush1.msra.mxu0 0.0
    %199 = vmatprep.subr.mxu0 0.0
    %200 = vmatpush1.msra.mxu0 0.0
    %201 = vmatprep.subr.mxu0 0.0
    %202 = vmatpush1.msra.mxu0 0.0
    %203 = vmatprep.subr.mxu0 0.0
    %204 = vmatpush1.msra.mxu0 0.0
    %205 = vmatprep.subr.mxu0 0.0
    %206 = vmatpush1.msra.mxu0 0.0
    %207 = vmatprep.subr.mxu0 0.0
    %208 = vmatpush1.msra.mxu0 0.0
    %209 = vmatprep.subr.mxu0 0.0
    %210 = vmatpush1.msra.mxu0 0.0
    %211 = vmatprep.subr.mxu0 0.0
    %212 = vmatpush1.msra.mxu0 0.0
    %213 = vmatprep.subr.mxu0 0.0
    %214 = vmatpush1.msra.mxu0 0.0
    %215 = vmatprep.subr.mxu0 0.0
    %216 = vmatpush1.msra.mxu0 0.0
    %217 = vmatprep.subr.mxu0 0.0
    %218 = vmatpush1.msra.mxu0 0.0
    %219 = vmatprep.subr.mxu0 0.0
    %220 = vmatpush1.msra.mxu0 0.0
    %221 = vmatprep.subr.mxu0 0.0
    %222 = vmatpush1.msra.mxu0 0.0
    %223 = vmatprep.subr.mxu0 0.0
    %224 = vmatpush1.msra.mxu0 0.0
    %225 = vmatprep.subr.mxu0 0.0
    %226 = vmatpush1.msra.mxu0 0.0
    %227 = vmatprep.subr.mxu0 0.0
    %228 = vmatpush1.msra.mxu0 0.0
    %229 = vmatprep.subr.mxu0 0.0
    %230 = vmatpush1.msra.mxu0 0.0
    %231 = vmatprep.mubr.f32.mxu0 0.0
    %232 = vmatmul.mubr.f32.gmra.mrb[0].mxu0 %v159
    %v233 = vpop.f32.mrb[0].mxu0
    %v234 = vadd.f32 %v155, %v233
    %v235 = vpop.f32.mrb[0].mxu0
    %236 = vmatprep.mubr.f32.mxu0 0.0
    %237 = vmatmul.mubr.f32.gmra.mrb[0].mxu0 %v162
    %v238 = vpop.f32.mrb[0].mxu0
    %v239 = vadd.f32 %v155, %v238
    %v240 = vpop.f32.mrb[0].mxu0
    %241 = vmatprep.mubr.f32.mxu0 0.0
    %242 = vmatmul.mubr.f32.gmra.mrb[0].mxu0 %v159
    %v243 = vpop.f32.mrb[0].mxu0
    %v244 = vadd.f32 %v155, %v243
    %v245 = vpop.f32.mrb[0].mxu0
    %246 = vmatprep.mubr.f32.mxu0 0.0
    %247 = vmatmul.mubr.f32.gmra.mrb[0].mxu0 %v165
    %v248 = vpop.f32.mrb[0].mxu0
    %v249 = vadd.f32 %v155, %v248
    %v250 = vpop.f32.mrb[0].mxu0
    %251 = vdwg.mxu0
    %v252 = vld [vmem:[%s4] sm:$0xff]
    %v253 = vld [vmem:[%s4 + $0x8] sm:$0xff]
    %v254 = vld [vmem:[%s4 + $0x10] sm:$0xff]
    %v255 = vld [vmem:[%s4 + $0x18] sm:$0xff]
    %258 = vrot.lane.b32.xlu0 %v234, 96
    %v259 = vpop.permute.xlu0 %258
    %260 = vrot.lane.b32.xlu0 %v239, 96
    %v261 = vpop.permute.xlu0 %260
    %vm262 = vcmask 64512
    %v263 = vsel %vm262, %v234, 0
    %v265 = vsel %vm262, %v239, 0
    %v267 = vsel %vm262, %v259, 0
    %v269 = vsel %vm262, %v261, 0
    %271 = vmatprep.subr.mxu0 0.0
    %272 = vmatpush1.xpose.msra.mxu0 %v267
    %273 = vmatprep.subr.mxu0 0.0
    %274 = vmatpush1.xpose.msra.mxu0 %v269
    %275 = vmatprep.subr.mxu0 0.0
    %276 = vmatpush1.xpose.msra.mxu0 0.0
    %277 = vmatprep.subr.mxu0 0.0
    %278 = vmatpush1.xpose.msra.mxu0 0.0
    %279 = vmatprep.subr.mxu0 0.0
    %280 = vmatpush1.xpose.msra.mxu0 0.0
    %281 = vmatprep.subr.mxu0 0.0
    %282 = vmatpush1.xpose.msra.mxu0 0.0
    %283 = vmatprep.subr.mxu0 0.0
    %284 = vmatpush1.xpose.msra.mxu0 0.0
    %285 = vmatprep.subr.mxu0 0.0
    %286 = vmatpush1.xpose.msra.mxu0 0.0
    %287 = vmatprep.subr.mxu0 0.0
    %288 = vmatpush1.xpose.msra.mxu0 0.0
    %289 = vmatprep.subr.mxu0 0.0
    %290 = vmatpush1.xpose.msra.mxu0 0.0
    %291 = vmatprep.subr.mxu0 0.0
    %292 = vmatpush1.xpose.msra.mxu0 0.0
    %293 = vmatprep.subr.mxu0 0.0
    %294 = vmatpush1.xpose.msra.mxu0 0.0
    %295 = vmatprep.subr.mxu0 0.0
    %296 = vmatpush1.xpose.msra.mxu0 0.0
    %297 = vmatprep.subr.mxu0 0.0
    %298 = vmatpush1.xpose.msra.mxu0 0.0
    %299 = vmatprep.subr.mxu0 0.0
    %300 = vmatpush1.xpose.msra.mxu0 0.0
    %301 = vmatprep.subr.mxu0 0.0
    %302 = vmatpush1.xpose.msra.mxu0 0.0
    %303 = vmatprep.subr.mxu0 0.0
    %304 = vmatpush1.xpose.msra.mxu0 0.0
    %305 = vmatprep.subr.mxu0 0.0
    %306 = vmatpush1.xpose.msra.mxu0 0.0
    %307 = vmatprep.subr.mxu0 0.0
    %308 = vmatpush1.xpose.msra.mxu0 0.0
    %309 = vmatprep.subr.mxu0 0.0
    %310 = vmatpush1.xpose.msra.mxu0 0.0
    %311 = vmatprep.subr.mxu0 0.0
    %312 = vmatpush1.xpose.msra.mxu0 0.0
    %313 = vmatprep.subr.mxu0 0.0
    %314 = vmatpush1.xpose.msra.mxu0 0.0
    %315 = vmatprep.subr.mxu0 0.0
    %316 = vmatpush1.xpose.msra.mxu0 0.0
    %317 = vmatprep.subr.mxu0 0.0
    %318 = vmatpush1.xpose.msra.mxu0 0.0
    %319 = vmatprep.subr.mxu0 0.0
    %320 = vmatpush1.xpose.msra.mxu0 0.0
    %321 = vmatprep.subr.mxu0 0.0
    %322 = vmatpush1.xpose.msra.mxu0 0.0
    %323 = vmatprep.subr.mxu0 0.0
    %324 = vmatpush1.xpose.msra.mxu0 0.0
    %325 = vmatprep.subr.mxu0 0.0
    %326 = vmatpush1.xpose.msra.mxu0 0.0
    %327 = vmatprep.subr.mxu0 0.0
    %328 = vmatpush1.xpose.msra.mxu0 0.0
    %329 = vmatprep.subr.mxu0 0.0
    %330 = vmatpush1.xpose.msra.mxu0 0.0
    %331 = vmatprep.subr.mxu0 0.0
    %332 = vmatpush1.xpose.msra.mxu0 0.0
    %333 = vmatprep.subr.mxu0 0.0
    %334 = vmatpush1.xpose.msra.mxu0 0.0
    %335 = vmatprep.mubr.f32.mxu0 0.0
    %336 = vmatmul.mubr.f32.gmra.mrb[0].mxu0 %v263
    %v337 = vpop.f32.mrb[0].mxu0
    %v338 = vadd.f32 0.0, %v337
    %v339 = vpop.f32.mrb[0].mxu0
    %340 = vmatprep.mubr.f32.mxu0 0.0
    %341 = vmatmul.mubr.f32.gmra.mrb[0].mxu0 %v265
    %v342 = vpop.f32.mrb[0].mxu0
    %v343 = vadd.f32 0.0, %v342
    %v344 = vpop.f32.mrb[0].mxu0
    %345 = vdwg.mxu0
    %348 = vrot.lane.b32.xlu0 %v244, 96
    %v349 = vpop.permute.xlu0 %348
    %350 = vrot.lane.b32.xlu0 %v249, 96
    %v351 = vpop.permute.xlu0 %350
    %v352 = vsel %vm262, %v244, 0
    %v354 = vsel %vm262, %v249, 0
    %v356 = vsel %vm262, %v349, 0
    %v358 = vsel %vm262, %v351, 0
    %360 = vmatprep.subr.mxu0 0.0
    %361 = vmatpush1.xpose.msra.mxu0 %v356
    %362 = vmatprep.subr.mxu0 0.0
    %363 = vmatpush1.xpose.msra.mxu0 %v358
    %364 = vmatprep.subr.mxu0 0.0
    %365 = vmatpush1.xpose.msra.mxu0 0.0
    %366 = vmatprep.subr.mxu0 0.0
    %367 = vmatpush1.xpose.msra.mxu0 0.0
    %368 = vmatprep.subr.mxu0 0.0
    %369 = vmatpush1.xpose.msra.mxu0 0.0
    %370 = vmatprep.subr.mxu0 0.0
    %371 = vmatpush1.xpose.msra.mxu0 0.0
    %372 = vmatprep.subr.mxu0 0.0
    %373 = vmatpush1.xpose.msra.mxu0 0.0
    %374 = vmatprep.subr.mxu0 0.0
    %375 = vmatpush1.xpose.msra.mxu0 0.0
    %376 = vmatprep.subr.mxu0 0.0
    %377 = vmatpush1.xpose.msra.mxu0 0.0
    %378 = vmatprep.subr.mxu0 0.0
    %379 = vmatpush1.xpose.msra.mxu0 0.0
    %380 = vmatprep.subr.mxu0 0.0
    %381 = vmatpush1.xpose.msra.mxu0 0.0
    %382 = vmatprep.subr.mxu0 0.0
    %383 = vmatpush1.xpose.msra.mxu0 0.0
    %384 = vmatprep.subr.mxu0 0.0
    %385 = vmatpush1.xpose.msra.mxu0 0.0
    %386 = vmatprep.subr.mxu0 0.0
    %387 = vmatpush1.xpose.msra.mxu0 0.0
    %388 = vmatprep.subr.mxu0 0.0
    %389 = vmatpush1.xpose.msra.mxu0 0.0
    %390 = vmatprep.subr.mxu0 0.0
    %391 = vmatpush1.xpose.msra.mxu0 0.0
    %392 = vmatprep.subr.mxu0 0.0
    %393 = vmatpush1.xpose.msra.mxu0 0.0
    %394 = vmatprep.subr.mxu0 0.0
    %395 = vmatpush1.xpose.msra.mxu0 0.0
    %396 = vmatprep.subr.mxu0 0.0
    %397 = vmatpush1.xpose.msra.mxu0 0.0
    %398 = vmatprep.subr.mxu0 0.0
    %399 = vmatpush1.xpose.msra.mxu0 0.0
    %400 = vmatprep.subr.mxu0 0.0
    %401 = vmatpush1.xpose.msra.mxu0 0.0
    %402 = vmatprep.subr.mxu0 0.0
    %403 = vmatpush1.xpose.msra.mxu0 0.0
    %404 = vmatprep.subr.mxu0 0.0
    %405 = vmatpush1.xpose.msra.mxu0 0.0
    %406 = vmatprep.subr.mxu0 0.0
    %407 = vmatpush1.xpose.msra.mxu0 0.0
    %408 = vmatprep.subr.mxu0 0.0
    %409 = vmatpush1.xpose.msra.mxu0 0.0
    %410 = vmatprep.subr.mxu0 0.0
    %411 = vmatpush1.xpose.msra.mxu0 0.0
    %412 = vmatprep.subr.mxu0 0.0
    %413 = vmatpush1.xpose.msra.mxu0 0.0
    %414 = vmatprep.subr.mxu0 0.0
    %415 = vmatpush1.xpose.msra.mxu0 0.0
    %416 = vmatprep.subr.mxu0 0.0
    %417 = vmatpush1.xpose.msra.mxu0 0.0
    %418 = vmatprep.subr.mxu0 0.0
    %419 = vmatpush1.xpose.msra.mxu0 0.0
    %420 = vmatprep.subr.mxu0 0.0
    %421 = vmatpush1.xpose.msra.mxu0 0.0
    %422 = vmatprep.subr.mxu0 0.0
    %423 = vmatpush1.xpose.msra.mxu0 0.0
    %424 = vmatprep.mubr.f32.mxu0 0.0
    %425 = vmatmul.mubr.f32.gmra.mrb[0].mxu0 %v352
    %v426 = vpop.f32.mrb[0].mxu0
    %v427 = vadd.f32 0.0, %v426
    %v428 = vpop.f32.mrb[0].mxu0
    %429 = vmatprep.mubr.f32.mxu0 0.0
    %430 = vmatmul.mubr.f32.gmra.mrb[0].mxu0 %v354
    %v431 = vpop.f32.mrb[0].mxu0
    %v432 = vadd.f32 0.0, %v431
    %v433 = vpop.f32.mrb[0].mxu0
    %434 = vdwg.mxu0
    %v435 = vmul.f32 %v338, 0.35355338
    %v436 = vmul.f32 %v343, 0.35355338
    %v437 = vmul.f32 %v427, 0.35355338
    %v438 = vmul.f32 %v432, 0.35355338
    %vm439 = vcmask 130048
    %v440 = vsel %vm439, %v435, -inf
    %441 = vmax.xlane.f32.xlu0 %v440
    %v442 = vpop.xlane.xlu0 %441
    %v443 = vsel %vm439, %v436, -inf
    %444 = vmax.xlane.f32.xlu0 %v443
    %v445 = vpop.xlane.xlu0 %444
    %v446 = vsel %vm439, %v437, -inf
    %447 = vmax.xlane.f32.xlu0 %v446
    %v448 = vpop.xlane.xlu0 %447
    %v449 = vsel %vm439, %v438, -inf
    %450 = vmax.xlane.f32.xlu0 %v449
    %v451 = vpop.xlane.xlu0 %450
    %v452 = vsub.f32 %v435, %v442
    %v453 = vsub.f32 %v436, %v445
    %v454 = vsub.f32 %v437, %v448
    %v455 = vsub.f32 %v438, %v451
    %v456 = vmul.f32 %v452, 1.442695
    %v457 = vpow.pop %v456
    %v458 = vmul.f32 %v453, 1.442695
    %v459 = vpow.pop %v458
    %v460 = vmul.f32 %v454, 1.442695
    %v461 = vpow.pop %v460
    %v462 = vmul.f32 %v455, 1.442695
    %v463 = vpow.pop %v462
    %v464 = vsel %vm439, %v457, 0.0
    %465 = vadd.xlane.f32.xlu0 %v464
    %v466 = vpop.xlane.xlu0 %465
    %v467 = vsel %vm439, %v459, 0.0
    %468 = vadd.xlane.f32.xlu0 %v467
    %v469 = vpop.xlane.xlu0 %468
    %v470 = vsel %vm439, %v461, 0.0
    %471 = vadd.xlane.f32.xlu0 %v470
    %v472 = vpop.xlane.xlu0 %471
    %v473 = vsel %vm439, %v463, 0.0
    %474 = vadd.xlane.f32.xlu0 %v473
    %v475 = vpop.xlane.xlu0 %474
    %v476 = vrcp.pop %v466
    %v477 = vrcp.pop %v469
    %v478 = vrcp.pop %v472
    %v479 = vrcp.pop %v475
    %v480 = vmul.f32 %v457, %v476
    %v481 = vmul.f32 %v459, %v477
    %v482 = vmul.f32 %v461, %v478
    %v483 = vmul.f32 %v463, %v479
    %484 = vrot.lane.b32.xlu0 %v234, 64
    %v485 = vpop.permute.xlu0 %484
    %486 = vrot.lane.b32.xlu0 %v239, 64
    %v487 = vpop.permute.xlu0 %486
    %v491 = vsel %vm439, %v480, 0
    %v494 = vsel %vm439, %v481, 0
    %496 = vmatprep.subr.mxu0 0.0
    %497 = vmatpush1.msra.mxu0 %v485
    %498 = vmatprep.subr.mxu0 0.0
    %499 = vmatpush1.msra.mxu0 %v487
    %500 = vmatprep.subr.mxu0 0.0
    %501 = vmatpush1.msra.mxu0 0.0
    %502 = vmatprep.subr.mxu0 0.0
    %503 = vmatpush1.msra.mxu0 0.0
    %504 = vmatprep.subr.mxu0 0.0
    %505 = vmatpush1.msra.mxu0 0.0
    %506 = vmatprep.subr.mxu0 0.0
    %507 = vmatpush1.msra.mxu0 0.0
    %508 = vmatprep.subr.mxu0 0.0
    %509 = vmatpush1.msra.mxu0 0.0
    %510 = vmatprep.subr.mxu0 0.0
    %511 = vmatpush1.msra.mxu0 0.0
    %512 = vmatprep.subr.mxu0 0.0
    %513 = vmatpush1.msra.mxu0 0.0
    %514 = vmatprep.subr.mxu0 0.0
    %515 = vmatpush1.msra.mxu0 0.0
    %516 = vmatprep.subr.mxu0 0.0
    %517 = vmatpush1.msra.mxu0 0.0
    %518 = vmatprep.subr.mxu0 0.0
    %519 = vmatpush1.msra.mxu0 0.0
    %520 = vmatprep.subr.mxu0 0.0
    %521 = vmatpush1.msra.mxu0 0.0
    %522 = vmatprep.subr.mxu0 0.0
    %523 = vmatpush1.msra.mxu0 0.0
    %524 = vmatprep.subr.mxu0 0.0
    %525 = vmatpush1.msra.mxu0 0.0
    %526 = vmatprep.subr.mxu0 0.0
    %527 = vmatpush1.msra.mxu0 0.0
    %528 = vmatprep.subr.mxu0 0.0
    %529 = vmatpush1.msra.mxu0 0.0
    %530 = vmatprep.subr.mxu0 0.0
    %531 = vmatpush1.msra.mxu0 0.0
    %532 = vmatprep.subr.mxu0 0.0
    %533 = vmatpush1.msra.mxu0 0.0
    %534 = vmatprep.subr.mxu0 0.0
    %535 = vmatpush1.msra.mxu0 0.0
    %536 = vmatprep.subr.mxu0 0.0
    %537 = vmatpush1.msra.mxu0 0.0
    %538 = vmatprep.subr.mxu0 0.0
    %539 = vmatpush1.msra.mxu0 0.0
    %540 = vmatprep.subr.mxu0 0.0
    %541 = vmatpush1.msra.mxu0 0.0
    %542 = vmatprep.subr.mxu0 0.0
    %543 = vmatpush1.msra.mxu0 0.0
    %544 = vmatprep.subr.mxu0 0.0
    %545 = vmatpush1.msra.mxu0 0.0
    %546 = vmatprep.subr.mxu0 0.0
    %547 = vmatpush1.msra.mxu0 0.0
    %548 = vmatprep.subr.mxu0 0.0
    %549 = vmatpush1.msra.mxu0 0.0
    %550 = vmatprep.subr.mxu0 0.0
    %551 = vmatpush1.msra.mxu0 0.0
    %552 = vmatprep.subr.mxu0 0.0
    %553 = vmatpush1.msra.mxu0 0.0
    %554 = vmatprep.subr.mxu0 0.0
    %555 = vmatpush1.msra.mxu0 0.0
    %556 = vmatprep.subr.mxu0 0.0
    %557 = vmatpush1.msra.mxu0 0.0
    %558 = vmatprep.subr.mxu0 0.0
    %559 = vmatpush1.msra.mxu0 0.0
    %560 = vmatprep.mubr.f32.mxu0 0.0
    %561 = vmatmul.mubr.f32.gmra.mrb[0].mxu0 %v491
    %v562 = vpop.f32.mrb[0].mxu0
    %v563 = vadd.f32 0.0, %v562
    %v564 = vpop.f32.mrb[0].mxu0
    %565 = vmatprep.mubr.f32.mxu0 0.0
    %566 = vmatmul.mubr.f32.gmra.mrb[0].mxu0 %v494
    %v567 = vpop.f32.mrb[0].mxu0
    %v568 = vadd.f32 0.0, %v567
    %v569 = vpop.f32.mrb[0].mxu0
    %570 = vdwg.mxu0
    %571 = vrot.lane.b32.xlu0 %v244, 64
    %v572 = vpop.permute.xlu0 %571
    %573 = vrot.lane.b32.xlu0 %v249, 64
    %v574 = vpop.permute.xlu0 %573
    %v578 = vsel %vm439, %v482, 0
    %v581 = vsel %vm439, %v483, 0
    %583 = vmatprep.subr.mxu0 0.0
    %584 = vmatpush1.msra.mxu0 %v572
    %585 = vmatprep.subr.mxu0 0.0
    %586 = vmatpush1.msra.mxu0 %v574
    %587 = vmatprep.subr.mxu0 0.0
    %588 = vmatpush1.msra.mxu0 0.0
    %589 = vmatprep.subr.mxu0 0.0
    %590 = vmatpush1.msra.mxu0 0.0
    %591 = vmatprep.subr.mxu0 0.0
    %592 = vmatpush1.msra.mxu0 0.0
    %593 = vmatprep.subr.mxu0 0.0
    %594 = vmatpush1.msra.mxu0 0.0
    %595 = vmatprep.subr.mxu0 0.0
    %596 = vmatpush1.msra.mxu0 0.0
    %597 = vmatprep.subr.mxu0 0.0
    %598 = vmatpush1.msra.mxu0 0.0
    %599 = vmatprep.subr.mxu0 0.0
    %600 = vmatpush1.msra.mxu0 0.0
    %601 = vmatprep.subr.mxu0 0.0
    %602 = vmatpush1.msra.mxu0 0.0
    %603 = vmatprep.subr.mxu0 0.0
    %604 = vmatpush1.msra.mxu0 0.0
    %605 = vmatprep.subr.mxu0 0.0
    %606 = vmatpush1.msra.mxu0 0.0
    %607 = vmatprep.subr.mxu0 0.0
    %608 = vmatpush1.msra.mxu0 0.0
    %609 = vmatprep.subr.mxu0 0.0
    %610 = vmatpush1.msra.mxu0 0.0
    %611 = vmatprep.subr.mxu0 0.0
    %612 = vmatpush1.msra.mxu0 0.0
    %613 = vmatprep.subr.mxu0 0.0
    %614 = vmatpush1.msra.mxu0 0.0
    %615 = vmatprep.subr.mxu0 0.0
    %616 = vmatpush1.msra.mxu0 0.0
    %617 = vmatprep.subr.mxu0 0.0
    %618 = vmatpush1.msra.mxu0 0.0
    %619 = vmatprep.subr.mxu0 0.0
    %620 = vmatpush1.msra.mxu0 0.0
    %621 = vmatprep.subr.mxu0 0.0
    %622 = vmatpush1.msra.mxu0 0.0
    %623 = vmatprep.subr.mxu0 0.0
    %624 = vmatpush1.msra.mxu0 0.0
    %625 = vmatprep.subr.mxu0 0.0
    %626 = vmatpush1.msra.mxu0 0.0
    %627 = vmatprep.subr.mxu0 0.0
    %628 = vmatpush1.msra.mxu0 0.0
    %629 = vmatprep.subr.mxu0 0.0
    %630 = vmatpush1.msra.mxu0 0.0
    %631 = vmatprep.subr.mxu0 0.0
    %632 = vmatpush1.msra.mxu0 0.0
    %633 = vmatprep.subr.mxu0 0.0
    %634 = vmatpush1.msra.mxu0 0.0
    %635 = vmatprep.subr.mxu0 0.0
    %636 = vmatpush1.msra.mxu0 0.0
    %637 = vmatprep.subr.mxu0 0.0
    %638 = vmatpush1.msra.mxu0 0.0
    %639 = vmatprep.subr.mxu0 0.0
    %640 = vmatpush1.msra.mxu0 0.0
    %641 = vmatprep.subr.mxu0 0.0
    %642 = vmatpush1.msra.mxu0 0.0
    %643 = vmatprep.subr.mxu0 0.0
    %644 = vmatpush1.msra.mxu0 0.0
    %645 = vmatprep.subr.mxu0 0.0
    %646 = vmatpush1.msra.mxu0 0.0
    %647 = vmatprep.mubr.f32.mxu0 0.0
    %648 = vmatmul.mubr.f32.gmra.mrb[0].mxu0 %v578
    %v649 = vpop.f32.mrb[0].mxu0
    %v650 = vadd.f32 0.0, %v649
    %v651 = vpop.f32.mrb[0].mxu0
    %652 = vmatprep.mubr.f32.mxu0 0.0
    %653 = vmatmul.mubr.f32.gmra.mrb[0].mxu0 %v581
    %v654 = vpop.f32.mrb[0].mxu0
    %v655 = vadd.f32 0.0, %v654
    %v656 = vpop.f32.mrb[0].mxu0
    %657 = vdwg.mxu0
    %658 = vrot.lane.b32.xlu0 %v234, 120
    %v659 = vpop.permute.xlu0 %658
    %660 = vrot.lane.b32.xlu0 %v239, 120
    %v661 = vpop.permute.xlu0 %660
    %662 = vrot.lane.b32.xlu0 %v234, 88
    %v663 = vpop.permute.xlu0 %662
    %664 = vrot.lane.b32.xlu0 %v239, 88
    %v665 = vpop.permute.xlu0 %664
    %v666 = vsel %vm262, %v659, 0
    %v668 = vsel %vm262, %v661, 0
    %v670 = vsel %vm262, %v663, 0
    %v672 = vsel %vm262, %v665, 0
    %674 = vmatprep.subr.mxu0 0.0
    %675 = vmatpush1.xpose.msra.mxu0 %v670
    %676 = vmatprep.subr.mxu0 0.0
    %677 = vmatpush1.xpose.msra.mxu0 %v672
    %678 = vmatprep.subr.mxu0 0.0
    %679 = vmatpush1.xpose.msra.mxu0 0.0
    %680 = vmatprep.subr.mxu0 0.0
    %681 = vmatpush1.xpose.msra.mxu0 0.0
    %682 = vmatprep.subr.mxu0 0.0
    %683 = vmatpush1.xpose.msra.mxu0 0.0
    %684 = vmatprep.subr.mxu0 0.0
    %685 = vmatpush1.xpose.msra.mxu0 0.0
    %686 = vmatprep.subr.mxu0 0.0
    %687 = vmatpush1.xpose.msra.mxu0 0.0
    %688 = vmatprep.subr.mxu0 0.0
    %689 = vmatpush1.xpose.msra.mxu0 0.0
    %690 = vmatprep.subr.mxu0 0.0
    %691 = vmatpush1.xpose.msra.mxu0 0.0
    %692 = vmatprep.subr.mxu0 0.0
    %693 = vmatpush1.xpose.msra.mxu0 0.0
    %694 = vmatprep.subr.mxu0 0.0
    %695 = vmatpush1.xpose.msra.mxu0 0.0
    %696 = vmatprep.subr.mxu0 0.0
    %697 = vmatpush1.xpose.msra.mxu0 0.0
    %698 = vmatprep.subr.mxu0 0.0
    %699 = vmatpush1.xpose.msra.mxu0 0.0
    %700 = vmatprep.subr.mxu0 0.0
    %701 = vmatpush1.xpose.msra.mxu0 0.0
    %702 = vmatprep.subr.mxu0 0.0
    %703 = vmatpush1.xpose.msra.mxu0 0.0
    %704 = vmatprep.subr.mxu0 0.0
    %705 = vmatpush1.xpose.msra.mxu0 0.0
    %706 = vmatprep.subr.mxu0 0.0
    %707 = vmatpush1.xpose.msra.mxu0 0.0
    %708 = vmatprep.subr.mxu0 0.0
    %709 = vmatpush1.xpose.msra.mxu0 0.0
    %710 = vmatprep.subr.mxu0 0.0
    %711 = vmatpush1.xpose.msra.mxu0 0.0
    %712 = vmatprep.subr.mxu0 0.0
    %713 = vmatpush1.xpose.msra.mxu0 0.0
    %714 = vmatprep.subr.mxu0 0.0
    %715 = vmatpush1.xpose.msra.mxu0 0.0
    %716 = vmatprep.subr.mxu0 0.0
    %717 = vmatpush1.xpose.msra.mxu0 0.0
    %718 = vmatprep.subr.mxu0 0.0
    %719 = vmatpush1.xpose.msra.mxu0 0.0
    %720 = vmatprep.subr.mxu0 0.0
    %721 = vmatpush1.xpose.msra.mxu0 0.0
    %722 = vmatprep.subr.mxu0 0.0
    %723 = vmatpush1.xpose.msra.mxu0 0.0
    %724 = vmatprep.subr.mxu0 0.0
    %725 = vmatpush1.xpose.msra.mxu0 0.0
    %726 = vmatprep.subr.mxu0 0.0
    %727 = vmatpush1.xpose.msra.mxu0 0.0
    %728 = vmatprep.subr.mxu0 0.0
    %729 = vmatpush1.xpose.msra.mxu0 0.0
    %730 = vmatprep.subr.mxu0 0.0
    %731 = vmatpush1.xpose.msra.mxu0 0.0
    %732 = vmatprep.subr.mxu0 0.0
    %733 = vmatpush1.xpose.msra.mxu0 0.0
    %734 = vmatprep.subr.mxu0 0.0
    %735 = vmatpush1.xpose.msra.mxu0 0.0
    %736 = vmatprep.subr.mxu0 0.0
    %737 = vmatpush1.xpose.msra.mxu0 0.0
    %738 = vmatprep.mubr.f32.mxu0 0.0
    %739 = vmatmul.mubr.f32.gmra.mrb[0].mxu0 %v666
    %v740 = vpop.f32.mrb[0].mxu0
    %v741 = vadd.f32 0.0, %v740
    %v742 = vpop.f32.mrb[0].mxu0
    %743 = vmatprep.mubr.f32.mxu0 0.0
    %744 = vmatmul.mubr.f32.gmra.mrb[0].mxu0 %v668
    %v745 = vpop.f32.mrb[0].mxu0
    %v746 = vadd.f32 0.0, %v745
    %v747 = vpop.f32.mrb[0].mxu0
    %748 = vdwg.mxu0
    %749 = vrot.lane.b32.xlu0 %v244, 120
    %v750 = vpop.permute.xlu0 %749
    %751 = vrot.lane.b32.xlu0 %v249, 120
    %v752 = vpop.permute.xlu0 %751
    %753 = vrot.lane.b32.xlu0 %v244, 88
    %v754 = vpop.permute.xlu0 %753
    %755 = vrot.lane.b32.xlu0 %v249, 88
    %v756 = vpop.permute.xlu0 %755
    %v757 = vsel %vm262, %v750, 0
    %v759 = vsel %vm262, %v752, 0
    %v761 = vsel %vm262, %v754, 0
    %v763 = vsel %vm262, %v756, 0
    %765 = vmatprep.subr.mxu0 0.0
    %766 = vmatpush1.xpose.msra.mxu0 %v761
    %767 = vmatprep.subr.mxu0 0.0
    %768 = vmatpush1.xpose.msra.mxu0 %v763
    %769 = vmatprep.subr.mxu0 0.0
    %770 = vmatpush1.xpose.msra.mxu0 0.0
    %771 = vmatprep.subr.mxu0 0.0
    %772 = vmatpush1.xpose.msra.mxu0 0.0
    %773 = vmatprep.subr.mxu0 0.0
    %774 = vmatpush1.xpose.msra.mxu0 0.0
    %775 = vmatprep.subr.mxu0 0.0
    %776 = vmatpush1.xpose.msra.mxu0 0.0
    %777 = vmatprep.subr.mxu0 0.0
    %778 = vmatpush1.xpose.msra.mxu0 0.0
    %779 = vmatprep.subr.mxu0 0.0
    %780 = vmatpush1.xpose.msra.mxu0 0.0
    %781 = vmatprep.subr.mxu0 0.0
    %782 = vmatpush1.xpose.msra.mxu0 0.0
    %783 = vmatprep.subr.mxu0 0.0
    %784 = vmatpush1.xpose.msra.mxu0 0.0
    %785 = vmatprep.subr.mxu0 0.0
    %786 = vmatpush1.xpose.msra.mxu0 0.0
    %787 = vmatprep.subr.mxu0 0.0
    %788 = vmatpush1.xpose.msra.mxu0 0.0
    %789 = vmatprep.subr.mxu0 0.0
    %790 = vmatpush1.xpose.msra.mxu0 0.0
    %791 = vmatprep.subr.mxu0 0.0
    %792 = vmatpush1.xpose.msra.mxu0 0.0
    %793 = vmatprep.subr.mxu0 0.0
    %794 = vmatpush1.xpose.msra.mxu0 0.0
    %795 = vmatprep.subr.mxu0 0.0
    %796 = vmatpush1.xpose.msra.mxu0 0.0
    %797 = vmatprep.subr.mxu0 0.0
    %798 = vmatpush1.xpose.msra.mxu0 0.0
    %799 = vmatprep.subr.mxu0 0.0
    %800 = vmatpush1.xpose.msra.mxu0 0.0
    %801 = vmatprep.subr.mxu0 0.0
    %802 = vmatpush1.xpose.msra.mxu0 0.0
    %803 = vmatprep.subr.mxu0 0.0
    %804 = vmatpush1.xpose.msra.mxu0 0.0
    %805 = vmatprep.subr.mxu0 0.0
    %806 = vmatpush1.xpose.msra.mxu0 0.0
    %807 = vmatprep.subr.mxu0 0.0
    %808 = vmatpush1.xpose.msra.mxu0 0.0
    %809 = vmatprep.subr.mxu0 0.0
    %810 = vmatpush1.xpose.msra.mxu0 0.0
    %811 = vmatprep.subr.mxu0 0.0
    %812 = vmatpush1.xpose.msra.mxu0 0.0
    %813 = vmatprep.subr.mxu0 0.0
    %814 = vmatpush1.xpose.msra.mxu0 0.0
    %815 = vmatprep.subr.mxu0 0.0
    %816 = vmatpush1.xpose.msra.mxu0 0.0
    %817 = vmatprep.subr.mxu0 0.0
    %818 = vmatpush1.xpose.msra.mxu0 0.0
    %819 = vmatprep.subr.mxu0 0.0
    %820 = vmatpush1.xpose.msra.mxu0 0.0
    %821 = vmatprep.subr.mxu0 0.0
    %822 = vmatpush1.xpose.msra.mxu0 0.0
    %823 = vmatprep.subr.mxu0 0.0
    %824 = vmatpush1.xpose.msra.mxu0 0.0
    %825 = vmatprep.subr.mxu0 0.0
    %826 = vmatpush1.xpose.msra.mxu0 0.0
    %827 = vmatprep.subr.mxu0 0.0
    %828 = vmatpush1.xpose.msra.mxu0 0.0
    %829 = vmatprep.mubr.f32.mxu0 0.0
    %830 = vmatmul.mubr.f32.gmra.mrb[0].mxu0 %v757
    %v831 = vpop.f32.mrb[0].mxu0
    %v832 = vadd.f32 0.0, %v831
    %v833 = vpop.f32.mrb[0].mxu0
    %834 = vmatprep.mubr.f32.mxu0 0.0
    %835 = vmatmul.mubr.f32.gmra.mrb[0].mxu0 %v759
    %v836 = vpop.f32.mrb[0].mxu0
    %v837 = vadd.f32 0.0, %v836
    %v838 = vpop.f32.mrb[0].mxu0
    %839 = vdwg.mxu0
    %v840 = vmul.f32 %v741, 0.35355338
    %v841 = vmul.f32 %v746, 0.35355338
    %v842 = vmul.f32 %v832, 0.35355338
    %v843 = vmul.f32 %v837, 0.35355338
    %v844 = vsel %vm439, %v840, -inf
    %845 = vmax.xlane.f32.xlu0 %v844
    %v846 = vpop.xlane.xlu0 %845
    %v847 = vsel %vm439, %v841, -inf
    %848 = vmax.xlane.f32.xlu0 %v847
    %v849 = vpop.xlane.xlu0 %848
    %v850 = vsel %vm439, %v842, -inf
    %851 = vmax.xlane.f32.xlu0 %v850
    %v852 = vpop.xlane.xlu0 %851
    %v853 = vsel %vm439, %v843, -inf
    %854 = vmax.xlane.f32.xlu0 %v853
    %v855 = vpop.xlane.xlu0 %854
    %v856 = vsub.f32 %v840, %v846
    %v857 = vsub.f32 %v841, %v849
    %v858 = vsub.f32 %v842, %v852
    %v859 = vsub.f32 %v843, %v855
    %v860 = vmul.f32 %v856, 1.442695
    %v861 = vpow.pop %v860
    %v862 = vmul.f32 %v857, 1.442695
    %v863 = vpow.pop %v862
    %v864 = vmul.f32 %v858, 1.442695
    %v865 = vpow.pop %v864
    %v866 = vmul.f32 %v859, 1.442695
    %v867 = vpow.pop %v866
    %v868 = vsel %vm439, %v861, 0.0
    %869 = vadd.xlane.f32.xlu0 %v868
    %v870 = vpop.xlane.xlu0 %869
    %v871 = vsel %vm439, %v863, 0.0
    %872 = vadd.xlane.f32.xlu0 %v871
    %v873 = vpop.xlane.xlu0 %872
    %v874 = vsel %vm439, %v865, 0.0
    %875 = vadd.xlane.f32.xlu0 %v874
    %v876 = vpop.xlane.xlu0 %875
    %v877 = vsel %vm439, %v867, 0.0
    %878 = vadd.xlane.f32.xlu0 %v877
    %v879 = vpop.xlane.xlu0 %878
    %v880 = vrcp.pop %v870
    %v881 = vrcp.pop %v873
    %v882 = vrcp.pop %v876
    %v883 = vrcp.pop %v879
    %v884 = vmul.f32 %v861, %v880
    %v885 = vmul.f32 %v863, %v881
    %v886 = vmul.f32 %v865, %v882
    %v887 = vmul.f32 %v867, %v883
    %888 = vrot.lane.b32.xlu0 %v234, 56
    %v889 = vpop.permute.xlu0 %888
    %890 = vrot.lane.b32.xlu0 %v239, 56
    %v891 = vpop.permute.xlu0 %890
    %v895 = vsel %vm439, %v884, 0
    %v898 = vsel %vm439, %v885, 0
    %900 = vmatprep.subr.mxu0 0.0
    %901 = vmatpush1.msra.mxu0 %v889
    %902 = vmatprep.subr.mxu0 0.0
    %903 = vmatpush1.msra.mxu0 %v891
    %904 = vmatprep.subr.mxu0 0.0
    %905 = vmatpush1.msra.mxu0 0.0
    %906 = vmatprep.subr.mxu0 0.0
    %907 = vmatpush1.msra.mxu0 0.0
    %908 = vmatprep.subr.mxu0 0.0
    %909 = vmatpush1.msra.mxu0 0.0
    %910 = vmatprep.subr.mxu0 0.0
    %911 = vmatpush1.msra.mxu0 0.0
    %912 = vmatprep.subr.mxu0 0.0
    %913 = vmatpush1.msra.mxu0 0.0
    %914 = vmatprep.subr.mxu0 0.0
    %915 = vmatpush1.msra.mxu0 0.0
    %916 = vmatprep.subr.mxu0 0.0
    %917 = vmatpush1.msra.mxu0 0.0
    %918 = vmatprep.subr.mxu0 0.0
    %919 = vmatpush1.msra.mxu0 0.0
    %920 = vmatprep.subr.mxu0 0.0
    %921 = vmatpush1.msra.mxu0 0.0
    %922 = vmatprep.subr.mxu0 0.0
    %923 = vmatpush1.msra.mxu0 0.0
    %924 = vmatprep.subr.mxu0 0.0
    %925 = vmatpush1.msra.mxu0 0.0
    %926 = vmatprep.subr.mxu0 0.0
    %927 = vmatpush1.msra.mxu0 0.0
    %928 = vmatprep.subr.mxu0 0.0
    %929 = vmatpush1.msra.mxu0 0.0
    %930 = vmatprep.subr.mxu0 0.0
    %931 = vmatpush1.msra.mxu0 0.0
    %932 = vmatprep.subr.mxu0 0.0
    %933 = vmatpush1.msra.mxu0 0.0
    %934 = vmatprep.subr.mxu0 0.0
    %935 = vmatpush1.msra.mxu0 0.0
    %936 = vmatprep.subr.mxu0 0.0
    %937 = vmatpush1.msra.mxu0 0.0
    %938 = vmatprep.subr.mxu0 0.0
    %939 = vmatpush1.msra.mxu0 0.0
    %940 = vmatprep.subr.mxu0 0.0
    %941 = vmatpush1.msra.mxu0 0.0
    %942 = vmatprep.subr.mxu0 0.0
    %943 = vmatpush1.msra.mxu0 0.0
    %944 = vmatprep.subr.mxu0 0.0
    %945 = vmatpush1.msra.mxu0 0.0
    %946 = vmatprep.subr.mxu0 0.0
    %947 = vmatpush1.msra.mxu0 0.0
    %948 = vmatprep.subr.mxu0 0.0
    %949 = vmatpush1.msra.mxu0 0.0
    %950 = vmatprep.subr.mxu0 0.0
    %951 = vmatpush1.msra.mxu0 0.0
    %952 = vmatprep.subr.mxu0 0.0
    %953 = vmatpush1.msra.mxu0 0.0
    %954 = vmatprep.subr.mxu0 0.0
    %955 = vmatpush1.msra.mxu0 0.0
    %956 = vmatprep.subr.mxu0 0.0
    %957 = vmatpush1.msra.mxu0 0.0
    %958 = vmatprep.subr.mxu0 0.0
    %959 = vmatpush1.msra.mxu0 0.0
    %960 = vmatprep.subr.mxu0 0.0
    %961 = vmatpush1.msra.mxu0 0.0
    %962 = vmatprep.subr.mxu0 0.0
    %963 = vmatpush1.msra.mxu0 0.0
    %964 = vmatprep.mubr.f32.mxu0 0.0
    %965 = vmatmul.mubr.f32.gmra.mrb[0].mxu0 %v895
    %v966 = vpop.f32.mrb[0].mxu0
    %v967 = vadd.f32 0.0, %v966
    %v968 = vpop.f32.mrb[0].mxu0
    %969 = vmatprep.mubr.f32.mxu0 0.0
    %970 = vmatmul.mubr.f32.gmra.mrb[0].mxu0 %v898
    %v971 = vpop.f32.mrb[0].mxu0
    %v972 = vadd.f32 0.0, %v971
    %v973 = vpop.f32.mrb[0].mxu0
    %974 = vdwg.mxu0
    %975 = vrot.lane.b32.xlu0 %v244, 56
    %v976 = vpop.permute.xlu0 %975
    %977 = vrot.lane.b32.xlu0 %v249, 56
    %v978 = vpop.permute.xlu0 %977
    %v982 = vsel %vm439, %v886, 0
    %v985 = vsel %vm439, %v887, 0
    %987 = vmatprep.subr.mxu0 0.0
    %988 = vmatpush1.msra.mxu0 %v976
    %989 = vmatprep.subr.mxu0 0.0
    %990 = vmatpush1.msra.mxu0 %v978
    %991 = vmatprep.subr.mxu0 0.0
    %992 = vmatpush1.msra.mxu0 0.0
    %993 = vmatprep.subr.mxu0 0.0
    %994 = vmatpush1.msra.mxu0 0.0
    %995 = vmatprep.subr.mxu0 0.0
    %996 = vmatpush1.msra.mxu0 0.0
    %997 = vmatprep.subr.mxu0 0.0
    %998 = vmatpush1.msra.mxu0 0.0
    %999 = vmatprep.subr.mxu0 0.0
    %1000 = vmatpush1.msra.mxu0 0.0
    %1001 = vmatprep.subr.mxu0 0.0
    %1002 = vmatpush1.msra.mxu0 0.0
    %1003 = vmatprep.subr.mxu0 0.0
    %1004 = vmatpush1.msra.mxu0 0.0
    %1005 = vmatprep.subr.mxu0 0.0
    %1006 = vmatpush1.msra.mxu0 0.0
    %1007 = vmatprep.subr.mxu0 0.0
    %1008 = vmatpush1.msra.mxu0 0.0
    %1009 = vmatprep.subr.mxu0 0.0
    %1010 = vmatpush1.msra.mxu0 0.0
    %1011 = vmatprep.subr.mxu0 0.0
    %1012 = vmatpush1.msra.mxu0 0.0
    %1013 = vmatprep.subr.mxu0 0.0
    %1014 = vmatpush1.msra.mxu0 0.0
    %1015 = vmatprep.subr.mxu0 0.0
    %1016 = vmatpush1.msra.mxu0 0.0
    %1017 = vmatprep.subr.mxu0 0.0
    %1018 = vmatpush1.msra.mxu0 0.0
    %1019 = vmatprep.subr.mxu0 0.0
    %1020 = vmatpush1.msra.mxu0 0.0
    %1021 = vmatprep.subr.mxu0 0.0
    %1022 = vmatpush1.msra.mxu0 0.0
    %1023 = vmatprep.subr.mxu0 0.0
    %1024 = vmatpush1.msra.mxu0 0.0
    %1025 = vmatprep.subr.mxu0 0.0
    %1026 = vmatpush1.msra.mxu0 0.0
    %1027 = vmatprep.subr.mxu0 0.0
    %1028 = vmatpush1.msra.mxu0 0.0
    %1029 = vmatprep.subr.mxu0 0.0
    %1030 = vmatpush1.msra.mxu0 0.0
    %1031 = vmatprep.subr.mxu0 0.0
    %1032 = vmatpush1.msra.mxu0 0.0
    %1033 = vmatprep.subr.mxu0 0.0
    %1034 = vmatpush1.msra.mxu0 0.0
    %1035 = vmatprep.subr.mxu0 0.0
    %1036 = vmatpush1.msra.mxu0 0.0
    %1037 = vmatprep.subr.mxu0 0.0
    %1038 = vmatpush1.msra.mxu0 0.0
    %1039 = vmatprep.subr.mxu0 0.0
    %1040 = vmatpush1.msra.mxu0 0.0
    %1041 = vmatprep.subr.mxu0 0.0
    %1042 = vmatpush1.msra.mxu0 0.0
    %1043 = vmatprep.subr.mxu0 0.0
    %1044 = vmatpush1.msra.mxu0 0.0
    %1045 = vmatprep.subr.mxu0 0.0
    %1046 = vmatpush1.msra.mxu0 0.0
    %1047 = vmatprep.subr.mxu0 0.0
    %1048 = vmatpush1.msra.mxu0 0.0
    %1049 = vmatprep.subr.mxu0 0.0
    %1050 = vmatpush1.msra.mxu0 0.0
    %1051 = vmatprep.mubr.f32.mxu0 0.0
    %1052 = vmatmul.mubr.f32.gmra.mrb[0].mxu0 %v982
    %v1053 = vpop.f32.mrb[0].mxu0
    %v1054 = vadd.f32 0.0, %v1053
    %v1055 = vpop.f32.mrb[0].mxu0
    %1056 = vmatprep.mubr.f32.mxu0 0.0
    %1057 = vmatmul.mubr.f32.gmra.mrb[0].mxu0 %v985
    %v1058 = vpop.f32.mrb[0].mxu0
    %v1059 = vadd.f32 0.0, %v1058
    %v1060 = vpop.f32.mrb[0].mxu0
    %1061 = vdwg.mxu0
    %v1063 = vsel %vm262, %v967, 0
    %v1066 = vsel %vm262, %v972, 0
    %v1069 = vsel %vm262, %v1054, 0
    %v1072 = vsel %vm262, %v1059, 0
    %1074 = vmatprep.subr.mxu0 0.0
    %1075 = vmatpush1.msra.mxu0 %v253
    %1076 = vmatprep.subr.mxu0 0.0
    %1077 = vmatpush1.msra.mxu0 0.0
    %1078 = vmatprep.subr.mxu0 0.0
    %1079 = vmatpush1.msra.mxu0 0.0
    %1080 = vmatprep.subr.mxu0 0.0
    %1081 = vmatpush1.msra.mxu0 0.0
    %1082 = vmatprep.subr.mxu0 0.0
    %1083 = vmatpush1.msra.mxu0 0.0
    %1084 = vmatprep.subr.mxu0 0.0
    %1085 = vmatpush1.msra.mxu0 0.0
    %1086 = vmatprep.subr.mxu0 0.0
    %1087 = vmatpush1.msra.mxu0 0.0
    %1088 = vmatprep.subr.mxu0 0.0
    %1089 = vmatpush1.msra.mxu0 0.0
    %1090 = vmatprep.subr.mxu0 0.0
    %1091 = vmatpush1.msra.mxu0 0.0
    %1092 = vmatprep.subr.mxu0 0.0
    %1093 = vmatpush1.msra.mxu0 0.0
    %1094 = vmatprep.subr.mxu0 0.0
    %1095 = vmatpush1.msra.mxu0 0.0
    %1096 = vmatprep.subr.mxu0 0.0
    %1097 = vmatpush1.msra.mxu0 0.0
    %1098 = vmatprep.subr.mxu0 0.0
    %1099 = vmatpush1.msra.mxu0 0.0
    %1100 = vmatprep.subr.mxu0 0.0
    %1101 = vmatpush1.msra.mxu0 0.0
    %1102 = vmatprep.subr.mxu0 0.0
    %1103 = vmatpush1.msra.mxu0 0.0
    %1104 = vmatprep.subr.mxu0 0.0
    %1105 = vmatpush1.msra.mxu0 0.0
    %1106 = vmatprep.subr.mxu0 0.0
    %1107 = vmatpush1.msra.mxu0 0.0
    %1108 = vmatprep.subr.mxu0 0.0
    %1109 = vmatpush1.msra.mxu0 0.0
    %1110 = vmatprep.subr.mxu0 0.0
    %1111 = vmatpush1.msra.mxu0 0.0
    %1112 = vmatprep.subr.mxu0 0.0
    %1113 = vmatpush1.msra.mxu0 0.0
    %1114 = vmatprep.subr.mxu0 0.0
    %1115 = vmatpush1.msra.mxu0 0.0
    %1116 = vmatprep.subr.mxu0 0.0
    %1117 = vmatpush1.msra.mxu0 0.0
    %1118 = vmatprep.subr.mxu0 0.0
    %1119 = vmatpush1.msra.mxu0 0.0
    %1120 = vmatprep.subr.mxu0 0.0
    %1121 = vmatpush1.msra.mxu0 0.0
    %1122 = vmatprep.subr.mxu0 0.0
    %1123 = vmatpush1.msra.mxu0 0.0
    %1124 = vmatprep.subr.mxu0 0.0
    %1125 = vmatpush1.msra.mxu0 0.0
    %1126 = vmatprep.subr.mxu0 0.0
    %1127 = vmatpush1.msra.mxu0 0.0
    %1128 = vmatprep.subr.mxu0 0.0
    %1129 = vmatpush1.msra.mxu0 0.0
    %1130 = vmatprep.subr.mxu0 0.0
    %1131 = vmatpush1.msra.mxu0 0.0
    %1132 = vmatprep.subr.mxu0 0.0
    %1133 = vmatpush1.msra.mxu0 0.0
    %1134 = vmatprep.subr.mxu0 0.0
    %1135 = vmatpush1.msra.mxu0 0.0
    %1136 = vmatprep.subr.mxu0 0.0
    %1137 = vmatpush1.msra.mxu0 0.0
    %1138 = vmatprep.mubr.f32.mxu0 0.0
    %1139 = vmatmul.mubr.f32.gmra.mrb[0].mxu0 %v1063
    %v1140 = vpop.f32.mrb[0].mxu0
    %v1141 = vadd.f32 0.0, %v1140
    %v1142 = vpop.f32.mrb[0].mxu0
    %1143 = vmatprep.mubr.f32.mxu0 0.0
    %1144 = vmatmul.mubr.f32.gmra.mrb[0].mxu0 %v1066
    %v1145 = vpop.f32.mrb[0].mxu0
    %v1146 = vadd.f32 0.0, %v1145
    %v1147 = vpop.f32.mrb[0].mxu0
    %1148 = vmatprep.mubr.f32.mxu0 0.0
    %1149 = vmatmul.mubr.f32.gmra.mrb[0].mxu0 %v1069
    %v1150 = vpop.f32.mrb[0].mxu0
    %v1151 = vadd.f32 0.0, %v1150
    %v1152 = vpop.f32.mrb[0].mxu0
    %1153 = vmatprep.mubr.f32.mxu0 0.0
    %1154 = vmatmul.mubr.f32.gmra.mrb[0].mxu0 %v1072
    %v1155 = vpop.f32.mrb[0].mxu0
    %v1156 = vadd.f32 0.0, %v1155
    %v1157 = vpop.f32.mrb[0].mxu0
    %1158 = vdwg.mxu0
    %v1160 = vsel %vm262, %v563, 0
    %v1163 = vsel %vm262, %v568, 0
    %v1166 = vsel %vm262, %v650, 0
    %v1169 = vsel %vm262, %v655, 0
    %1171 = vmatprep.subr.mxu0 0.0
    %1172 = vmatpush1.msra.mxu0 %v252
    %1173 = vmatprep.subr.mxu0 0.0
    %1174 = vmatpush1.msra.mxu0 0.0
    %1175 = vmatprep.subr.mxu0 0.0
    %1176 = vmatpush1.msra.mxu0 0.0
    %1177 = vmatprep.subr.mxu0 0.0
    %1178 = vmatpush1.msra.mxu0 0.0
    %1179 = vmatprep.subr.mxu0 0.0
    %1180 = vmatpush1.msra.mxu0 0.0
    %1181 = vmatprep.subr.mxu0 0.0
    %1182 = vmatpush1.msra.mxu0 0.0
    %1183 = vmatprep.subr.mxu0 0.0
    %1184 = vmatpush1.msra.mxu0 0.0
    %1185 = vmatprep.subr.mxu0 0.0
    %1186 = vmatpush1.msra.mxu0 0.0
    %1187 = vmatprep.subr.mxu0 0.0
    %1188 = vmatpush1.msra.mxu0 0.0
    %1189 = vmatprep.subr.mxu0 0.0
    %1190 = vmatpush1.msra.mxu0 0.0
    %1191 = vmatprep.subr.mxu0 0.0
    %1192 = vmatpush1.msra.mxu0 0.0
    %1193 = vmatprep.subr.mxu0 0.0
    %1194 = vmatpush1.msra.mxu0 0.0
    %1195 = vmatprep.subr.mxu0 0.0
    %1196 = vmatpush1.msra.mxu0 0.0
    %1197 = vmatprep.subr.mxu0 0.0
    %1198 = vmatpush1.msra.mxu0 0.0
    %1199 = vmatprep.subr.mxu0 0.0
    %1200 = vmatpush1.msra.mxu0 0.0
    %1201 = vmatprep.subr.mxu0 0.0
    %1202 = vmatpush1.msra.mxu0 0.0
    %1203 = vmatprep.subr.mxu0 0.0
    %1204 = vmatpush1.msra.mxu0 0.0
    %1205 = vmatprep.subr.mxu0 0.0
    %1206 = vmatpush1.msra.mxu0 0.0
    %1207 = vmatprep.subr.mxu0 0.0
    %1208 = vmatpush1.msra.mxu0 0.0
    %1209 = vmatprep.subr.mxu0 0.0
    %1210 = vmatpush1.msra.mxu0 0.0
    %1211 = vmatprep.subr.mxu0 0.0
    %1212 = vmatpush1.msra.mxu0 0.0
    %1213 = vmatprep.subr.mxu0 0.0
    %1214 = vmatpush1.msra.mxu0 0.0
    %1215 = vmatprep.subr.mxu0 0.0
    %1216 = vmatpush1.msra.mxu0 0.0
    %1217 = vmatprep.subr.mxu0 0.0
    %1218 = vmatpush1.msra.mxu0 0.0
    %1219 = vmatprep.subr.mxu0 0.0
    %1220 = vmatpush1.msra.mxu0 0.0
    %1221 = vmatprep.subr.mxu0 0.0
    %1222 = vmatpush1.msra.mxu0 0.0
    %1223 = vmatprep.subr.mxu0 0.0
    %1224 = vmatpush1.msra.mxu0 0.0
    %1225 = vmatprep.subr.mxu0 0.0
    %1226 = vmatpush1.msra.mxu0 0.0
    %1227 = vmatprep.subr.mxu0 0.0
    %1228 = vmatpush1.msra.mxu0 0.0
    %1229 = vmatprep.subr.mxu0 0.0
    %1230 = vmatpush1.msra.mxu0 0.0
    %1231 = vmatprep.subr.mxu0 0.0
    %1232 = vmatpush1.msra.mxu0 0.0
    %1233 = vmatprep.subr.mxu0 0.0
    %1234 = vmatpush1.msra.mxu0 0.0
    %1235 = vmatprep.mubr.f32.mxu0 0.0
    %1236 = vmatmul.mubr.f32.gmra.mrb[0].mxu0 %v1160
    %v1237 = vpop.f32.mrb[0].mxu0
    %v1238 = vadd.f32 %v1141, %v1237
    %v1239 = vpop.f32.mrb[0].mxu0
    %1240 = vmatprep.mubr.f32.mxu0 0.0
    %1241 = vmatmul.mubr.f32.gmra.mrb[0].mxu0 %v1163
    %v1242 = vpop.f32.mrb[0].mxu0
    %v1243 = vadd.f32 %v1146, %v1242
    %v1244 = vpop.f32.mrb[0].mxu0
    %1245 = vmatprep.mubr.f32.mxu0 0.0
    %1246 = vmatmul.mubr.f32.gmra.mrb[0].mxu0 %v1166
    %v1247 = vpop.f32.mrb[0].mxu0
    %v1248 = vadd.f32 %v1151, %v1247
    %v1249 = vpop.f32.mrb[0].mxu0
    %1250 = vmatprep.mubr.f32.mxu0 0.0
    %1251 = vmatmul.mubr.f32.gmra.mrb[0].mxu0 %v1169
    %v1252 = vpop.f32.mrb[0].mxu0
    %v1253 = vadd.f32 %v1156, %v1252
    %v1254 = vpop.f32.mrb[0].mxu0
    %1255 = vdwg.mxu0
    %1256 = vrot.lane.b32.xlu0 %v234, 112
    %v1257 = vpop.permute.xlu0 %1256
    %1258 = vrot.lane.b32.xlu0 %v239, 112
    %v1259 = vpop.permute.xlu0 %1258
    %1260 = vrot.lane.b32.xlu0 %v234, 80
    %v1261 = vpop.permute.xlu0 %1260
    %1262 = vrot.lane.b32.xlu0 %v239, 80
    %v1263 = vpop.permute.xlu0 %1262
    %v1264 = vsel %vm262, %v1257, 0
    %v1266 = vsel %vm262, %v1259, 0
    %v1268 = vsel %vm262, %v1261, 0
    %v1270 = vsel %vm262, %v1263, 0
    %1272 = vmatprep.subr.mxu0 0.0
    %1273 = vmatpush1.xpose.msra.mxu0 %v1268
    %1274 = vmatprep.subr.mxu0 0.0
    %1275 = vmatpush1.xpose.msra.mxu0 %v1270
    %1276 = vmatprep.subr.mxu0 0.0
    %1277 = vmatpush1.xpose.msra.mxu0 0.0
    %1278 = vmatprep.subr.mxu0 0.0
    %1279 = vmatpush1.xpose.msra.mxu0 0.0
    %1280 = vmatprep.subr.mxu0 0.0
    %1281 = vmatpush1.xpose.msra.mxu0 0.0
    %1282 = vmatprep.subr.mxu0 0.0
    %1283 = vmatpush1.xpose.msra.mxu0 0.0
    %1284 = vmatprep.subr.mxu0 0.0
    %1285 = vmatpush1.xpose.msra.mxu0 0.0
    %1286 = vmatprep.subr.mxu0 0.0
    %1287 = vmatpush1.xpose.msra.mxu0 0.0
    %1288 = vmatprep.subr.mxu0 0.0
    %1289 = vmatpush1.xpose.msra.mxu0 0.0
    %1290 = vmatprep.subr.mxu0 0.0
    %1291 = vmatpush1.xpose.msra.mxu0 0.0
    %1292 = vmatprep.subr.mxu0 0.0
    %1293 = vmatpush1.xpose.msra.mxu0 0.0
    %1294 = vmatprep.subr.mxu0 0.0
    %1295 = vmatpush1.xpose.msra.mxu0 0.0
    %1296 = vmatprep.subr.mxu0 0.0
    %1297 = vmatpush1.xpose.msra.mxu0 0.0
    %1298 = vmatprep.subr.mxu0 0.0
    %1299 = vmatpush1.xpose.msra.mxu0 0.0
    %1300 = vmatprep.subr.mxu0 0.0
    %1301 = vmatpush1.xpose.msra.mxu0 0.0
    %1302 = vmatprep.subr.mxu0 0.0
    %1303 = vmatpush1.xpose.msra.mxu0 0.0
    %1304 = vmatprep.subr.mxu0 0.0
    %1305 = vmatpush1.xpose.msra.mxu0 0.0
    %1306 = vmatprep.subr.mxu0 0.0
    %1307 = vmatpush1.xpose.msra.mxu0 0.0
    %1308 = vmatprep.subr.mxu0 0.0
    %1309 = vmatpush1.xpose.msra.mxu0 0.0
    %1310 = vmatprep.subr.mxu0 0.0
    %1311 = vmatpush1.xpose.msra.mxu0 0.0
    %1312 = vmatprep.subr.mxu0 0.0
    %1313 = vmatpush1.xpose.msra.mxu0 0.0
    %1314 = vmatprep.subr.mxu0 0.0
    %1315 = vmatpush1.xpose.msra.mxu0 0.0
    %1316 = vmatprep.subr.mxu0 0.0
    %1317 = vmatpush1.xpose.msra.mxu0 0.0
    %1318 = vmatprep.subr.mxu0 0.0
    %1319 = vmatpush1.xpose.msra.mxu0 0.0
    %1320 = vmatprep.subr.mxu0 0.0
    %1321 = vmatpush1.xpose.msra.mxu0 0.0
    %1322 = vmatprep.subr.mxu0 0.0
    %1323 = vmatpush1.xpose.msra.mxu0 0.0
    %1324 = vmatprep.subr.mxu0 0.0
    %1325 = vmatpush1.xpose.msra.mxu0 0.0
    %1326 = vmatprep.subr.mxu0 0.0
    %1327 = vmatpush1.xpose.msra.mxu0 0.0
    %1328 = vmatprep.subr.mxu0 0.0
    %1329 = vmatpush1.xpose.msra.mxu0 0.0
    %1330 = vmatprep.subr.mxu0 0.0
    %1331 = vmatpush1.xpose.msra.mxu0 0.0
    %1332 = vmatprep.subr.mxu0 0.0
    %1333 = vmatpush1.xpose.msra.mxu0 0.0
    %1334 = vmatprep.subr.mxu0 0.0
    %1335 = vmatpush1.xpose.msra.mxu0 0.0
    %1336 = vmatprep.mubr.f32.mxu0 0.0
    %1337 = vmatmul.mubr.f32.gmra.mrb[0].mxu0 %v1264
    %v1338 = vpop.f32.mrb[0].mxu0
    %v1339 = vadd.f32 0.0, %v1338
    %v1340 = vpop.f32.mrb[0].mxu0
    %1341 = vmatprep.mubr.f32.mxu0 0.0
    %1342 = vmatmul.mubr.f32.gmra.mrb[0].mxu0 %v1266
    %v1343 = vpop.f32.mrb[0].mxu0
    %v1344 = vadd.f32 0.0, %v1343
    %v1345 = vpop.f32.mrb[0].mxu0
    %1346 = vdwg.mxu0
    %1347 = vrot.lane.b32.xlu0 %v244, 112
    %v1348 = vpop.permute.xlu0 %1347
    %1349 = vrot.lane.b32.xlu0 %v249, 112
    %v1350 = vpop.permute.xlu0 %1349
    %1351 = vrot.lane.b32.xlu0 %v244, 80
    %v1352 = vpop.permute.xlu0 %1351
    %1353 = vrot.lane.b32.xlu0 %v249, 80
    %v1354 = vpop.permute.xlu0 %1353
    %v1355 = vsel %vm262, %v1348, 0
    %v1357 = vsel %vm262, %v1350, 0
    %v1359 = vsel %vm262, %v1352, 0
    %v1361 = vsel %vm262, %v1354, 0
    %1363 = vmatprep.subr.mxu0 0.0
    %1364 = vmatpush1.xpose.msra.mxu0 %v1359
    %1365 = vmatprep.subr.mxu0 0.0
    %1366 = vmatpush1.xpose.msra.mxu0 %v1361
    %1367 = vmatprep.subr.mxu0 0.0
    %1368 = vmatpush1.xpose.msra.mxu0 0.0
    %1369 = vmatprep.subr.mxu0 0.0
    %1370 = vmatpush1.xpose.msra.mxu0 0.0
    %1371 = vmatprep.subr.mxu0 0.0
    %1372 = vmatpush1.xpose.msra.mxu0 0.0
    %1373 = vmatprep.subr.mxu0 0.0
    %1374 = vmatpush1.xpose.msra.mxu0 0.0
    %1375 = vmatprep.subr.mxu0 0.0
    %1376 = vmatpush1.xpose.msra.mxu0 0.0
    %1377 = vmatprep.subr.mxu0 0.0
    %1378 = vmatpush1.xpose.msra.mxu0 0.0
    %1379 = vmatprep.subr.mxu0 0.0
    %1380 = vmatpush1.xpose.msra.mxu0 0.0
    %1381 = vmatprep.subr.mxu0 0.0
    %1382 = vmatpush1.xpose.msra.mxu0 0.0
    %1383 = vmatprep.subr.mxu0 0.0
    %1384 = vmatpush1.xpose.msra.mxu0 0.0
    %1385 = vmatprep.subr.mxu0 0.0
    %1386 = vmatpush1.xpose.msra.mxu0 0.0
    %1387 = vmatprep.subr.mxu0 0.0
    %1388 = vmatpush1.xpose.msra.mxu0 0.0
    %1389 = vmatprep.subr.mxu0 0.0
    %1390 = vmatpush1.xpose.msra.mxu0 0.0
    %1391 = vmatprep.subr.mxu0 0.0
    %1392 = vmatpush1.xpose.msra.mxu0 0.0
    %1393 = vmatprep.subr.mxu0 0.0
    %1394 = vmatpush1.xpose.msra.mxu0 0.0
    %1395 = vmatprep.subr.mxu0 0.0
    %1396 = vmatpush1.xpose.msra.mxu0 0.0
    %1397 = vmatprep.subr.mxu0 0.0
    %1398 = vmatpush1.xpose.msra.mxu0 0.0
    %1399 = vmatprep.subr.mxu0 0.0
    %1400 = vmatpush1.xpose.msra.mxu0 0.0
    %1401 = vmatprep.subr.mxu0 0.0
    %1402 = vmatpush1.xpose.msra.mxu0 0.0
    %1403 = vmatprep.subr.mxu0 0.0
    %1404 = vmatpush1.xpose.msra.mxu0 0.0
    %1405 = vmatprep.subr.mxu0 0.0
    %1406 = vmatpush1.xpose.msra.mxu0 0.0
    %1407 = vmatprep.subr.mxu0 0.0
    %1408 = vmatpush1.xpose.msra.mxu0 0.0
    %1409 = vmatprep.subr.mxu0 0.0
    %1410 = vmatpush1.xpose.msra.mxu0 0.0
    %1411 = vmatprep.subr.mxu0 0.0
    %1412 = vmatpush1.xpose.msra.mxu0 0.0
    %1413 = vmatprep.subr.mxu0 0.0
    %1414 = vmatpush1.xpose.msra.mxu0 0.0
    %1415 = vmatprep.subr.mxu0 0.0
    %1416 = vmatpush1.xpose.msra.mxu0 0.0
    %1417 = vmatprep.subr.mxu0 0.0
    %1418 = vmatpush1.xpose.msra.mxu0 0.0
    %1419 = vmatprep.subr.mxu0 0.0
    %1420 = vmatpush1.xpose.msra.mxu0 0.0
    %1421 = vmatprep.subr.mxu0 0.0
    %1422 = vmatpush1.xpose.msra.mxu0 0.0
    %1423 = vmatprep.subr.mxu0 0.0
    %1424 = vmatpush1.xpose.msra.mxu0 0.0
    %1425 = vmatprep.subr.mxu0 0.0
    %1426 = vmatpush1.xpose.msra.mxu0 0.0
    %1427 = vmatprep.mubr.f32.mxu0 0.0
    %1428 = vmatmul.mubr.f32.gmra.mrb[0].mxu0 %v1355
    %v1429 = vpop.f32.mrb[0].mxu0
    %v1430 = vadd.f32 0.0, %v1429
    %v1431 = vpop.f32.mrb[0].mxu0
    %1432 = vmatprep.mubr.f32.mxu0 0.0
    %1433 = vmatmul.mubr.f32.gmra.mrb[0].mxu0 %v1357
    %v1434 = vpop.f32.mrb[0].mxu0
    %v1435 = vadd.f32 0.0, %v1434
    %v1436 = vpop.f32.mrb[0].mxu0
    %1437 = vdwg.mxu0
    %v1438 = vmul.f32 %v1339, 0.35355338
    %v1439 = vmul.f32 %v1344, 0.35355338
    %v1440 = vmul.f32 %v1430, 0.35355338
    %v1441 = vmul.f32 %v1435, 0.35355338
    %v1442 = vsel %vm439, %v1438, -inf
    %1443 = vmax.xlane.f32.xlu0 %v1442
    %v1444 = vpop.xlane.xlu0 %1443
    %v1445 = vsel %vm439, %v1439, -inf
    %1446 = vmax.xlane.f32.xlu0 %v1445
    %v1447 = vpop.xlane.xlu0 %1446
    %v1448 = vsel %vm439, %v1440, -inf
    %1449 = vmax.xlane.f32.xlu0 %v1448
    %v1450 = vpop.xlane.xlu0 %1449
    %v1451 = vsel %vm439, %v1441, -inf
    %1452 = vmax.xlane.f32.xlu0 %v1451
    %v1453 = vpop.xlane.xlu0 %1452
    %v1454 = vsub.f32 %v1438, %v1444
    %v1455 = vsub.f32 %v1439, %v1447
    %v1456 = vsub.f32 %v1440, %v1450
    %v1457 = vsub.f32 %v1441, %v1453
    %v1458 = vmul.f32 %v1454, 1.442695
    %v1459 = vpow.pop %v1458
    %v1460 = vmul.f32 %v1455, 1.442695
    %v1461 = vpow.pop %v1460
    %v1462 = vmul.f32 %v1456, 1.442695
    %v1463 = vpow.pop %v1462
    %v1464 = vmul.f32 %v1457, 1.442695
    %v1465 = vpow.pop %v1464
    %v1466 = vsel %vm439, %v1459, 0.0
    %1467 = vadd.xlane.f32.xlu0 %v1466
    %v1468 = vpop.xlane.xlu0 %1467
    %v1469 = vsel %vm439, %v1461, 0.0
    %1470 = vadd.xlane.f32.xlu0 %v1469
    %v1471 = vpop.xlane.xlu0 %1470
    %v1472 = vsel %vm439, %v1463, 0.0
    %1473 = vadd.xlane.f32.xlu0 %v1472
    %v1474 = vpop.xlane.xlu0 %1473
    %v1475 = vsel %vm439, %v1465, 0.0
    %1476 = vadd.xlane.f32.xlu0 %v1475
    %v1477 = vpop.xlane.xlu0 %1476
    %v1478 = vrcp.pop %v1468
    %v1479 = vrcp.pop %v1471
    %v1480 = vrcp.pop %v1474
    %v1481 = vrcp.pop %v1477
    %v1482 = vmul.f32 %v1459, %v1478
    %v1483 = vmul.f32 %v1461, %v1479
    %v1484 = vmul.f32 %v1463, %v1480
    %v1485 = vmul.f32 %v1465, %v1481
    %1486 = vrot.lane.b32.xlu0 %v234, 48
    %v1487 = vpop.permute.xlu0 %1486
    %1488 = vrot.lane.b32.xlu0 %v239, 48
    %v1489 = vpop.permute.xlu0 %1488
    %v1493 = vsel %vm439, %v1482, 0
    %v1496 = vsel %vm439, %v1483, 0
    %1498 = vmatprep.subr.mxu0 0.0
    %1499 = vmatpush1.msra.mxu0 %v1487
    %1500 = vmatprep.subr.mxu0 0.0
    %1501 = vmatpush1.msra.mxu0 %v1489
    %1502 = vmatprep.subr.mxu0 0.0
    %1503 = vmatpush1.msra.mxu0 0.0
    %1504 = vmatprep.subr.mxu0 0.0
    %1505 = vmatpush1.msra.mxu0 0.0
    %1506 = vmatprep.subr.mxu0 0.0
    %1507 = vmatpush1.msra.mxu0 0.0
    %1508 = vmatprep.subr.mxu0 0.0
    %1509 = vmatpush1.msra.mxu0 0.0
    %1510 = vmatprep.subr.mxu0 0.0
    %1511 = vmatpush1.msra.mxu0 0.0
    %1512 = vmatprep.subr.mxu0 0.0
    %1513 = vmatpush1.msra.mxu0 0.0
    %1514 = vmatprep.subr.mxu0 0.0
    %1515 = vmatpush1.msra.mxu0 0.0
    %1516 = vmatprep.subr.mxu0 0.0
    %1517 = vmatpush1.msra.mxu0 0.0
    %1518 = vmatprep.subr.mxu0 0.0
    %1519 = vmatpush1.msra.mxu0 0.0
    %1520 = vmatprep.subr.mxu0 0.0
    %1521 = vmatpush1.msra.mxu0 0.0
    %1522 = vmatprep.subr.mxu0 0.0
    %1523 = vmatpush1.msra.mxu0 0.0
    %1524 = vmatprep.subr.mxu0 0.0
    %1525 = vmatpush1.msra.mxu0 0.0
    %1526 = vmatprep.subr.mxu0 0.0
    %1527 = vmatpush1.msra.mxu0 0.0
    %1528 = vmatprep.subr.mxu0 0.0
    %1529 = vmatpush1.msra.mxu0 0.0
    %1530 = vmatprep.subr.mxu0 0.0
    %1531 = vmatpush1.msra.mxu0 0.0
    %1532 = vmatprep.subr.mxu0 0.0
    %1533 = vmatpush1.msra.mxu0 0.0
    %1534 = vmatprep.subr.mxu0 0.0
    %1535 = vmatpush1.msra.mxu0 0.0
    %1536 = vmatprep.subr.mxu0 0.0
    %1537 = vmatpush1.msra.mxu0 0.0
    %1538 = vmatprep.subr.mxu0 0.0
    %1539 = vmatpush1.msra.mxu0 0.0
    %1540 = vmatprep.subr.mxu0 0.0
    %1541 = vmatpush1.msra.mxu0 0.0
    %1542 = vmatprep.subr.mxu0 0.0
    %1543 = vmatpush1.msra.mxu0 0.0
    %1544 = vmatprep.subr.mxu0 0.0
    %1545 = vmatpush1.msra.mxu0 0.0
    %1546 = vmatprep.subr.mxu0 0.0
    %1547 = vmatpush1.msra.mxu0 0.0
    %1548 = vmatprep.subr.mxu0 0.0
    %1549 = vmatpush1.msra.mxu0 0.0
    %1550 = vmatprep.subr.mxu0 0.0
    %1551 = vmatpush1.msra.mxu0 0.0
    %1552 = vmatprep.subr.mxu0 0.0
    %1553 = vmatpush1.msra.mxu0 0.0
    %1554 = vmatprep.subr.mxu0 0.0
    %1555 = vmatpush1.msra.mxu0 0.0
    %1556 = vmatprep.subr.mxu0 0.0
    %1557 = vmatpush1.msra.mxu0 0.0
    %1558 = vmatprep.subr.mxu0 0.0
    %1559 = vmatpush1.msra.mxu0 0.0
    %1560 = vmatprep.subr.mxu0 0.0
    %1561 = vmatpush1.msra.mxu0 0.0
    %1562 = vmatprep.mubr.f32.mxu0 0.0
    %1563 = vmatmul.mubr.f32.gmra.mrb[0].mxu0 %v1493
    %v1564 = vpop.f32.mrb[0].mxu0
    %v1565 = vadd.f32 0.0, %v1564
    %v1566 = vpop.f32.mrb[0].mxu0
    %1567 = vmatprep.mubr.f32.mxu0 0.0
    %1568 = vmatmul.mubr.f32.gmra.mrb[0].mxu0 %v1496
    %v1569 = vpop.f32.mrb[0].mxu0
    %v1570 = vadd.f32 0.0, %v1569
    %v1571 = vpop.f32.mrb[0].mxu0
    %1572 = vdwg.mxu0
    %1573 = vrot.lane.b32.xlu0 %v244, 48
    %v1574 = vpop.permute.xlu0 %1573
    %1575 = vrot.lane.b32.xlu0 %v249, 48
    %v1576 = vpop.permute.xlu0 %1575
    %v1580 = vsel %vm439, %v1484, 0
    %v1583 = vsel %vm439, %v1485, 0
    %1585 = vmatprep.subr.mxu0 0.0
    %1586 = vmatpush1.msra.mxu0 %v1574
    %1587 = vmatprep.subr.mxu0 0.0
    %1588 = vmatpush1.msra.mxu0 %v1576
    %1589 = vmatprep.subr.mxu0 0.0
    %1590 = vmatpush1.msra.mxu0 0.0
    %1591 = vmatprep.subr.mxu0 0.0
    %1592 = vmatpush1.msra.mxu0 0.0
    %1593 = vmatprep.subr.mxu0 0.0
    %1594 = vmatpush1.msra.mxu0 0.0
    %1595 = vmatprep.subr.mxu0 0.0
    %1596 = vmatpush1.msra.mxu0 0.0
    %1597 = vmatprep.subr.mxu0 0.0
    %1598 = vmatpush1.msra.mxu0 0.0
    %1599 = vmatprep.subr.mxu0 0.0
    %1600 = vmatpush1.msra.mxu0 0.0
    %1601 = vmatprep.subr.mxu0 0.0
    %1602 = vmatpush1.msra.mxu0 0.0
    %1603 = vmatprep.subr.mxu0 0.0
    %1604 = vmatpush1.msra.mxu0 0.0
    %1605 = vmatprep.subr.mxu0 0.0
    %1606 = vmatpush1.msra.mxu0 0.0
    %1607 = vmatprep.subr.mxu0 0.0
    %1608 = vmatpush1.msra.mxu0 0.0
    %1609 = vmatprep.subr.mxu0 0.0
    %1610 = vmatpush1.msra.mxu0 0.0
    %1611 = vmatprep.subr.mxu0 0.0
    %1612 = vmatpush1.msra.mxu0 0.0
    %1613 = vmatprep.subr.mxu0 0.0
    %1614 = vmatpush1.msra.mxu0 0.0
    %1615 = vmatprep.subr.mxu0 0.0
    %1616 = vmatpush1.msra.mxu0 0.0
    %1617 = vmatprep.subr.mxu0 0.0
    %1618 = vmatpush1.msra.mxu0 0.0
    %1619 = vmatprep.subr.mxu0 0.0
    %1620 = vmatpush1.msra.mxu0 0.0
    %1621 = vmatprep.subr.mxu0 0.0
    %1622 = vmatpush1.msra.mxu0 0.0
    %1623 = vmatprep.subr.mxu0 0.0
    %1624 = vmatpush1.msra.mxu0 0.0
    %1625 = vmatprep.subr.mxu0 0.0
    %1626 = vmatpush1.msra.mxu0 0.0
    %1627 = vmatprep.subr.mxu0 0.0
    %1628 = vmatpush1.msra.mxu0 0.0
    %1629 = vmatprep.subr.mxu0 0.0
    %1630 = vmatpush1.msra.mxu0 0.0
    %1631 = vmatprep.subr.mxu0 0.0
    %1632 = vmatpush1.msra.mxu0 0.0
    %1633 = vmatprep.subr.mxu0 0.0
    %1634 = vmatpush1.msra.mxu0 0.0
    %1635 = vmatprep.subr.mxu0 0.0
    %1636 = vmatpush1.msra.mxu0 0.0
    %1637 = vmatprep.subr.mxu0 0.0
    %1638 = vmatpush1.msra.mxu0 0.0
    %1639 = vmatprep.subr.mxu0 0.0
    %1640 = vmatpush1.msra.mxu0 0.0
    %1641 = vmatprep.subr.mxu0 0.0
    %1642 = vmatpush1.msra.mxu0 0.0
    %1643 = vmatprep.subr.mxu0 0.0
    %1644 = vmatpush1.msra.mxu0 0.0
    %1645 = vmatprep.subr.mxu0 0.0
    %1646 = vmatpush1.msra.mxu0 0.0
    %1647 = vmatprep.subr.mxu0 0.0
    %1648 = vmatpush1.msra.mxu0 0.0
    %1649 = vmatprep.mubr.f32.mxu0 0.0
    %1650 = vmatmul.mubr.f32.gmra.mrb[0].mxu0 %v1580
    %v1651 = vpop.f32.mrb[0].mxu0
    %v1652 = vadd.f32 0.0, %v1651
    %v1653 = vpop.f32.mrb[0].mxu0
    %1654 = vmatprep.mubr.f32.mxu0 0.0
    %1655 = vmatmul.mubr.f32.gmra.mrb[0].mxu0 %v1583
    %v1656 = vpop.f32.mrb[0].mxu0
    %v1657 = vadd.f32 0.0, %v1656
    %v1658 = vpop.f32.mrb[0].mxu0
    %1659 = vdwg.mxu0
    %v1661 = vsel %vm262, %v1565, 0
    %v1664 = vsel %vm262, %v1570, 0
    %v1667 = vsel %vm262, %v1652, 0
    %v1670 = vsel %vm262, %v1657, 0
    %1672 = vmatprep.subr.mxu0 0.0
    %1673 = vmatpush1.msra.mxu0 %v254
    %1674 = vmatprep.subr.mxu0 0.0
    %1675 = vmatpush1.msra.mxu0 0.0
    %1676 = vmatprep.subr.mxu0 0.0
    %1677 = vmatpush1.msra.mxu0 0.0
    %1678 = vmatprep.subr.mxu0 0.0
    %1679 = vmatpush1.msra.mxu0 0.0
    %1680 = vmatprep.subr.mxu0 0.0
    %1681 = vmatpush1.msra.mxu0 0.0
    %1682 = vmatprep.subr.mxu0 0.0
    %1683 = vmatpush1.msra.mxu0 0.0
    %1684 = vmatprep.subr.mxu0 0.0
    %1685 = vmatpush1.msra.mxu0 0.0
    %1686 = vmatprep.subr.mxu0 0.0
    %1687 = vmatpush1.msra.mxu0 0.0
    %1688 = vmatprep.subr.mxu0 0.0
    %1689 = vmatpush1.msra.mxu0 0.0
    %1690 = vmatprep.subr.mxu0 0.0
    %1691 = vmatpush1.msra.mxu0 0.0
    %1692 = vmatprep.subr.mxu0 0.0
    %1693 = vmatpush1.msra.mxu0 0.0
    %1694 = vmatprep.subr.mxu0 0.0
    %1695 = vmatpush1.msra.mxu0 0.0
    %1696 = vmatprep.subr.mxu0 0.0
    %1697 = vmatpush1.msra.mxu0 0.0
    %1698 = vmatprep.subr.mxu0 0.0
    %1699 = vmatpush1.msra.mxu0 0.0
    %1700 = vmatprep.subr.mxu0 0.0
    %1701 = vmatpush1.msra.mxu0 0.0
    %1702 = vmatprep.subr.mxu0 0.0
    %1703 = vmatpush1.msra.mxu0 0.0
    %1704 = vmatprep.subr.mxu0 0.0
    %1705 = vmatpush1.msra.mxu0 0.0
    %1706 = vmatprep.subr.mxu0 0.0
    %1707 = vmatpush1.msra.mxu0 0.0
    %1708 = vmatprep.subr.mxu0 0.0
    %1709 = vmatpush1.msra.mxu0 0.0
    %1710 = vmatprep.subr.mxu0 0.0
    %1711 = vmatpush1.msra.mxu0 0.0
    %1712 = vmatprep.subr.mxu0 0.0
    %1713 = vmatpush1.msra.mxu0 0.0
    %1714 = vmatprep.subr.mxu0 0.0
    %1715 = vmatpush1.msra.mxu0 0.0
    %1716 = vmatprep.subr.mxu0 0.0
    %1717 = vmatpush1.msra.mxu0 0.0
    %1718 = vmatprep.subr.mxu0 0.0
    %1719 = vmatpush1.msra.mxu0 0.0
    %1720 = vmatprep.subr.mxu0 0.0
    %1721 = vmatpush1.msra.mxu0 0.0
    %1722 = vmatprep.subr.mxu0 0.0
    %1723 = vmatpush1.msra.mxu0 0.0
    %1724 = vmatprep.subr.mxu0 0.0
    %1725 = vmatpush1.msra.mxu0 0.0
    %1726 = vmatprep.subr.mxu0 0.0
    %1727 = vmatpush1.msra.mxu0 0.0
    %1728 = vmatprep.subr.mxu0 0.0
    %1729 = vmatpush1.msra.mxu0 0.0
    %1730 = vmatprep.subr.mxu0 0.0
    %1731 = vmatpush1.msra.mxu0 0.0
    %1732 = vmatprep.subr.mxu0 0.0
    %1733 = vmatpush1.msra.mxu0 0.0
    %1734 = vmatprep.subr.mxu0 0.0
    %1735 = vmatpush1.msra.mxu0 0.0
    %1736 = vmatprep.mubr.f32.mxu0 0.0
    %1737 = vmatmul.mubr.f32.gmra.mrb[0].mxu0 %v1661
    %v1738 = vpop.f32.mrb[0].mxu0
    %v1739 = vadd.f32 0.0, %v1738
    %v1740 = vpop.f32.mrb[0].mxu0
    %1741 = vmatprep.mubr.f32.mxu0 0.0
    %1742 = vmatmul.mubr.f32.gmra.mrb[0].mxu0 %v1664
    %v1743 = vpop.f32.mrb[0].mxu0
    %v1744 = vadd.f32 0.0, %v1743
    %v1745 = vpop.f32.mrb[0].mxu0
    %1746 = vmatprep.mubr.f32.mxu0 0.0
    %1747 = vmatmul.mubr.f32.gmra.mrb[0].mxu0 %v1667
    %v1748 = vpop.f32.mrb[0].mxu0
    %v1749 = vadd.f32 0.0, %v1748
    %v1750 = vpop.f32.mrb[0].mxu0
    %1751 = vmatprep.mubr.f32.mxu0 0.0
    %1752 = vmatmul.mubr.f32.gmra.mrb[0].mxu0 %v1670
    %v1753 = vpop.f32.mrb[0].mxu0
    %v1754 = vadd.f32 0.0, %v1753
    %v1755 = vpop.f32.mrb[0].mxu0
    %1756 = vdwg.mxu0
    %v1757 = vadd.f32 %v1238, %v1739
    %v1758 = vadd.f32 %v1243, %v1744
    %v1759 = vadd.f32 %v1248, %v1749
    %v1760 = vadd.f32 %v1253, %v1754
    %1761 = vrot.lane.b32.xlu0 %v234, 104
    %v1762 = vpop.permute.xlu0 %1761
    %1763 = vrot.lane.b32.xlu0 %v239, 104
    %v1764 = vpop.permute.xlu0 %1763
    %1765 = vrot.lane.b32.xlu0 %v234, 72
    %v1766 = vpop.permute.xlu0 %1765
    %1767 = vrot.lane.b32.xlu0 %v239, 72
    %v1768 = vpop.permute.xlu0 %1767
    %v1769 = vsel %vm262, %v1762, 0
    %v1771 = vsel %vm262, %v1764, 0
    %v1773 = vsel %vm262, %v1766, 0
    %v1775 = vsel %vm262, %v1768, 0
    %1777 = vmatprep.subr.mxu0 0.0
    %1778 = vmatpush1.xpose.msra.mxu0 %v1773
    %1779 = vmatprep.subr.mxu0 0.0
    %1780 = vmatpush1.xpose.msra.mxu0 %v1775
    %1781 = vmatprep.subr.mxu0 0.0
    %1782 = vmatpush1.xpose.msra.mxu0 0.0
    %1783 = vmatprep.subr.mxu0 0.0
    %1784 = vmatpush1.xpose.msra.mxu0 0.0
    %1785 = vmatprep.subr.mxu0 0.0
    %1786 = vmatpush1.xpose.msra.mxu0 0.0
    %1787 = vmatprep.subr.mxu0 0.0
    %1788 = vmatpush1.xpose.msra.mxu0 0.0
    %1789 = vmatprep.subr.mxu0 0.0
    %1790 = vmatpush1.xpose.msra.mxu0 0.0
    %1791 = vmatprep.subr.mxu0 0.0
    %1792 = vmatpush1.xpose.msra.mxu0 0.0
    %1793 = vmatprep.subr.mxu0 0.0
    %1794 = vmatpush1.xpose.msra.mxu0 0.0
    %1795 = vmatprep.subr.mxu0 0.0
    %1796 = vmatpush1.xpose.msra.mxu0 0.0
    %1797 = vmatprep.subr.mxu0 0.0
    %1798 = vmatpush1.xpose.msra.mxu0 0.0
    %1799 = vmatprep.subr.mxu0 0.0
    %1800 = vmatpush1.xpose.msra.mxu0 0.0
    %1801 = vmatprep.subr.mxu0 0.0
    %1802 = vmatpush1.xpose.msra.mxu0 0.0
    %1803 = vmatprep.subr.mxu0 0.0
    %1804 = vmatpush1.xpose.msra.mxu0 0.0
    %1805 = vmatprep.subr.mxu0 0.0
    %1806 = vmatpush1.xpose.msra.mxu0 0.0
    %1807 = vmatprep.subr.mxu0 0.0
    %1808 = vmatpush1.xpose.msra.mxu0 0.0
    %1809 = vmatprep.subr.mxu0 0.0
    %1810 = vmatpush1.xpose.msra.mxu0 0.0
    %1811 = vmatprep.subr.mxu0 0.0
    %1812 = vmatpush1.xpose.msra.mxu0 0.0
    %1813 = vmatprep.subr.mxu0 0.0
    %1814 = vmatpush1.xpose.msra.mxu0 0.0
    %1815 = vmatprep.subr.mxu0 0.0
    %1816 = vmatpush1.xpose.msra.mxu0 0.0
    %1817 = vmatprep.subr.mxu0 0.0
    %1818 = vmatpush1.xpose.msra.mxu0 0.0
    %1819 = vmatprep.subr.mxu0 0.0
    %1820 = vmatpush1.xpose.msra.mxu0 0.0
    %1821 = vmatprep.subr.mxu0 0.0
    %1822 = vmatpush1.xpose.msra.mxu0 0.0
    %1823 = vmatprep.subr.mxu0 0.0
    %1824 = vmatpush1.xpose.msra.mxu0 0.0
    %1825 = vmatprep.subr.mxu0 0.0
    %1826 = vmatpush1.xpose.msra.mxu0 0.0
    %1827 = vmatprep.subr.mxu0 0.0
    %1828 = vmatpush1.xpose.msra.mxu0 0.0
    %1829 = vmatprep.subr.mxu0 0.0
    %1830 = vmatpush1.xpose.msra.mxu0 0.0
    %1831 = vmatprep.subr.mxu0 0.0
    %1832 = vmatpush1.xpose.msra.mxu0 0.0
    %1833 = vmatprep.subr.mxu0 0.0
    %1834 = vmatpush1.xpose.msra.mxu0 0.0
    %1835 = vmatprep.subr.mxu0 0.0
    %1836 = vmatpush1.xpose.msra.mxu0 0.0
    %1837 = vmatprep.subr.mxu0 0.0
    %1838 = vmatpush1.xpose.msra.mxu0 0.0
    %1839 = vmatprep.subr.mxu0 0.0
    %1840 = vmatpush1.xpose.msra.mxu0 0.0
    %1841 = vmatprep.mubr.f32.mxu0 0.0
    %1842 = vmatmul.mubr.f32.gmra.mrb[0].mxu0 %v1769
    %v1843 = vpop.f32.mrb[0].mxu0
    %v1844 = vadd.f32 0.0, %v1843
    %v1845 = vpop.f32.mrb[0].mxu0
    %1846 = vmatprep.mubr.f32.mxu0 0.0
    %1847 = vmatmul.mubr.f32.gmra.mrb[0].mxu0 %v1771
    %v1848 = vpop.f32.mrb[0].mxu0
    %v1849 = vadd.f32 0.0, %v1848
    %v1850 = vpop.f32.mrb[0].mxu0
    %1851 = vdwg.mxu0
    %1852 = vrot.lane.b32.xlu0 %v244, 104
    %v1853 = vpop.permute.xlu0 %1852
    %1854 = vrot.lane.b32.xlu0 %v249, 104
    %v1855 = vpop.permute.xlu0 %1854
    %1856 = vrot.lane.b32.xlu0 %v244, 72
    %v1857 = vpop.permute.xlu0 %1856
    %1858 = vrot.lane.b32.xlu0 %v249, 72
    %v1859 = vpop.permute.xlu0 %1858
    %v1860 = vsel %vm262, %v1853, 0
    %v1862 = vsel %vm262, %v1855, 0
    %v1864 = vsel %vm262, %v1857, 0
    %v1866 = vsel %vm262, %v1859, 0
    %1868 = vmatprep.subr.mxu0 0.0
    %1869 = vmatpush1.xpose.msra.mxu0 %v1864
    %1870 = vmatprep.subr.mxu0 0.0
    %1871 = vmatpush1.xpose.msra.mxu0 %v1866
    %1872 = vmatprep.subr.mxu0 0.0
    %1873 = vmatpush1.xpose.msra.mxu0 0.0
    %1874 = vmatprep.subr.mxu0 0.0
    %1875 = vmatpush1.xpose.msra.mxu0 0.0
    %1876 = vmatprep.subr.mxu0 0.0
    %1877 = vmatpush1.xpose.msra.mxu0 0.0
    %1878 = vmatprep.subr.mxu0 0.0
    %1879 = vmatpush1.xpose.msra.mxu0 0.0
    %1880 = vmatprep.subr.mxu0 0.0
    %1881 = vmatpush1.xpose.msra.mxu0 0.0
    %1882 = vmatprep.subr.mxu0 0.0
    %1883 = vmatpush1.xpose.msra.mxu0 0.0
    %1884 = vmatprep.subr.mxu0 0.0
    %1885 = vmatpush1.xpose.msra.mxu0 0.0
    %1886 = vmatprep.subr.mxu0 0.0
    %1887 = vmatpush1.xpose.msra.mxu0 0.0
    %1888 = vmatprep.subr.mxu0 0.0
    %1889 = vmatpush1.xpose.msra.mxu0 0.0
    %1890 = vmatprep.subr.mxu0 0.0
    %1891 = vmatpush1.xpose.msra.mxu0 0.0
    %1892 = vmatprep.subr.mxu0 0.0
    %1893 = vmatpush1.xpose.msra.mxu0 0.0
    %1894 = vmatprep.subr.mxu0 0.0
    %1895 = vmatpush1.xpose.msra.mxu0 0.0
    %1896 = vmatprep.subr.mxu0 0.0
    %1897 = vmatpush1.xpose.msra.mxu0 0.0
    %1898 = vmatprep.subr.mxu0 0.0
    %1899 = vmatpush1.xpose.msra.mxu0 0.0
    %1900 = vmatprep.subr.mxu0 0.0
    %1901 = vmatpush1.xpose.msra.mxu0 0.0
    %1902 = vmatprep.subr.mxu0 0.0
    %1903 = vmatpush1.xpose.msra.mxu0 0.0
    %1904 = vmatprep.subr.mxu0 0.0
    %1905 = vmatpush1.xpose.msra.mxu0 0.0
    %1906 = vmatprep.subr.mxu0 0.0
    %1907 = vmatpush1.xpose.msra.mxu0 0.0
    %1908 = vmatprep.subr.mxu0 0.0
    %1909 = vmatpush1.xpose.msra.mxu0 0.0
    %1910 = vmatprep.subr.mxu0 0.0
    %1911 = vmatpush1.xpose.msra.mxu0 0.0
    %1912 = vmatprep.subr.mxu0 0.0
    %1913 = vmatpush1.xpose.msra.mxu0 0.0
    %1914 = vmatprep.subr.mxu0 0.0
    %1915 = vmatpush1.xpose.msra.mxu0 0.0
    %1916 = vmatprep.subr.mxu0 0.0
    %1917 = vmatpush1.xpose.msra.mxu0 0.0
    %1918 = vmatprep.subr.mxu0 0.0
    %1919 = vmatpush1.xpose.msra.mxu0 0.0
    %1920 = vmatprep.subr.mxu0 0.0
    %1921 = vmatpush1.xpose.msra.mxu0 0.0
    %1922 = vmatprep.subr.mxu0 0.0
    %1923 = vmatpush1.xpose.msra.mxu0 0.0
    %1924 = vmatprep.subr.mxu0 0.0
    %1925 = vmatpush1.xpose.msra.mxu0 0.0
    %1926 = vmatprep.subr.mxu0 0.0
    %1927 = vmatpush1.xpose.msra.mxu0 0.0
    %1928 = vmatprep.subr.mxu0 0.0
    %1929 = vmatpush1.xpose.msra.mxu0 0.0
    %1930 = vmatprep.subr.mxu0 0.0
    %1931 = vmatpush1.xpose.msra.mxu0 0.0
    %1932 = vmatprep.mubr.f32.mxu0 0.0
    %1933 = vmatmul.mubr.f32.gmra.mrb[0].mxu0 %v1860
    %v1934 = vpop.f32.mrb[0].mxu0
    %v1935 = vadd.f32 0.0, %v1934
    %v1936 = vpop.f32.mrb[0].mxu0
    %1937 = vmatprep.mubr.f32.mxu0 0.0
    %1938 = vmatmul.mubr.f32.gmra.mrb[0].mxu0 %v1862
    %v1939 = vpop.f32.mrb[0].mxu0
    %v1940 = vadd.f32 0.0, %v1939
    %v1941 = vpop.f32.mrb[0].mxu0
    %1942 = vdwg.mxu0
    %v1943 = vmul.f32 %v1844, 0.35355338
    %v1944 = vmul.f32 %v1849, 0.35355338
    %v1945 = vmul.f32 %v1935, 0.35355338
    %v1946 = vmul.f32 %v1940, 0.35355338
    %v1947 = vsel %vm439, %v1943, -inf
    %1948 = vmax.xlane.f32.xlu0 %v1947
    %v1949 = vpop.xlane.xlu0 %1948
    %v1950 = vsel %vm439, %v1944, -inf
    %1951 = vmax.xlane.f32.xlu0 %v1950
    %v1952 = vpop.xlane.xlu0 %1951
    %v1953 = vsel %vm439, %v1945, -inf
    %1954 = vmax.xlane.f32.xlu0 %v1953
    %v1955 = vpop.xlane.xlu0 %1954
    %v1956 = vsel %vm439, %v1946, -inf
    %1957 = vmax.xlane.f32.xlu0 %v1956
    %v1958 = vpop.xlane.xlu0 %1957
    %v1959 = vsub.f32 %v1943, %v1949
    %v1960 = vsub.f32 %v1944, %v1952
    %v1961 = vsub.f32 %v1945, %v1955
    %v1962 = vsub.f32 %v1946, %v1958
    %v1963 = vmul.f32 %v1959, 1.442695
    %v1964 = vpow.pop %v1963
    %v1965 = vmul.f32 %v1960, 1.442695
    %v1966 = vpow.pop %v1965
    %v1967 = vmul.f32 %v1961, 1.442695
    %v1968 = vpow.pop %v1967
    %v1969 = vmul.f32 %v1962, 1.442695
    %v1970 = vpow.pop %v1969
    %v1971 = vsel %vm439, %v1964, 0.0
    %1972 = vadd.xlane.f32.xlu0 %v1971
    %v1973 = vpop.xlane.xlu0 %1972
    %v1974 = vsel %vm439, %v1966, 0.0
    %1975 = vadd.xlane.f32.xlu0 %v1974
    %v1976 = vpop.xlane.xlu0 %1975
    %v1977 = vsel %vm439, %v1968, 0.0
    %1978 = vadd.xlane.f32.xlu0 %v1977
    %v1979 = vpop.xlane.xlu0 %1978
    %v1980 = vsel %vm439, %v1970, 0.0
    %1981 = vadd.xlane.f32.xlu0 %v1980
    %v1982 = vpop.xlane.xlu0 %1981
    %v1983 = vrcp.pop %v1973
    %v1984 = vrcp.pop %v1976
    %v1985 = vrcp.pop %v1979
    %v1986 = vrcp.pop %v1982
    %v1987 = vmul.f32 %v1964, %v1983
    %v1988 = vmul.f32 %v1966, %v1984
    %v1989 = vmul.f32 %v1968, %v1985
    %v1990 = vmul.f32 %v1970, %v1986
    %1991 = vrot.lane.b32.xlu0 %v234, 40
    %v1992 = vpop.permute.xlu0 %1991
    %1993 = vrot.lane.b32.xlu0 %v239, 40
    %v1994 = vpop.permute.xlu0 %1993
    %v1998 = vsel %vm439, %v1987, 0
    %v2001 = vsel %vm439, %v1988, 0
    %2003 = vmatprep.subr.mxu0 0.0
    %2004 = vmatpush1.msra.mxu0 %v1992
    %2005 = vmatprep.subr.mxu0 0.0
    %2006 = vmatpush1.msra.mxu0 %v1994
    %2007 = vmatprep.subr.mxu0 0.0
    %2008 = vmatpush1.msra.mxu0 0.0
    %2009 = vmatprep.subr.mxu0 0.0
    %2010 = vmatpush1.msra.mxu0 0.0
    %2011 = vmatprep.subr.mxu0 0.0
    %2012 = vmatpush1.msra.mxu0 0.0
    %2013 = vmatprep.subr.mxu0 0.0
    %2014 = vmatpush1.msra.mxu0 0.0
    %2015 = vmatprep.subr.mxu0 0.0
    %2016 = vmatpush1.msra.mxu0 0.0
    %2017 = vmatprep.subr.mxu0 0.0
    %2018 = vmatpush1.msra.mxu0 0.0
    %2019 = vmatprep.subr.mxu0 0.0
    %2020 = vmatpush1.msra.mxu0 0.0
    %2021 = vmatprep.subr.mxu0 0.0
    %2022 = vmatpush1.msra.mxu0 0.0
    %2023 = vmatprep.subr.mxu0 0.0
    %2024 = vmatpush1.msra.mxu0 0.0
    %2025 = vmatprep.subr.mxu0 0.0
    %2026 = vmatpush1.msra.mxu0 0.0
    %2027 = vmatprep.subr.mxu0 0.0
    %2028 = vmatpush1.msra.mxu0 0.0
    %2029 = vmatprep.subr.mxu0 0.0
    %2030 = vmatpush1.msra.mxu0 0.0
    %2031 = vmatprep.subr.mxu0 0.0
    %2032 = vmatpush1.msra.mxu0 0.0
    %2033 = vmatprep.subr.mxu0 0.0
    %2034 = vmatpush1.msra.mxu0 0.0
    %2035 = vmatprep.subr.mxu0 0.0
    %2036 = vmatpush1.msra.mxu0 0.0
    %2037 = vmatprep.subr.mxu0 0.0
    %2038 = vmatpush1.msra.mxu0 0.0
    %2039 = vmatprep.subr.mxu0 0.0
    %2040 = vmatpush1.msra.mxu0 0.0
    %2041 = vmatprep.subr.mxu0 0.0
    %2042 = vmatpush1.msra.mxu0 0.0
    %2043 = vmatprep.subr.mxu0 0.0
    %2044 = vmatpush1.msra.mxu0 0.0
    %2045 = vmatprep.subr.mxu0 0.0
    %2046 = vmatpush1.msra.mxu0 0.0
    %2047 = vmatprep.subr.mxu0 0.0
    %2048 = vmatpush1.msra.mxu0 0.0
    %2049 = vmatprep.subr.mxu0 0.0
    %2050 = vmatpush1.msra.mxu0 0.0
    %2051 = vmatprep.subr.mxu0 0.0
    %2052 = vmatpush1.msra.mxu0 0.0
    %2053 = vmatprep.subr.mxu0 0.0
    %2054 = vmatpush1.msra.mxu0 0.0
    %2055 = vmatprep.subr.mxu0 0.0
    %2056 = vmatpush1.msra.mxu0 0.0
    %2057 = vmatprep.subr.mxu0 0.0
    %2058 = vmatpush1.msra.mxu0 0.0
    %2059 = vmatprep.subr.mxu0 0.0
    %2060 = vmatpush1.msra.mxu0 0.0
    %2061 = vmatprep.subr.mxu0 0.0
    %2062 = vmatpush1.msra.mxu0 0.0
    %2063 = vmatprep.subr.mxu0 0.0
    %2064 = vmatpush1.msra.mxu0 0.0
    %2065 = vmatprep.subr.mxu0 0.0
    %2066 = vmatpush1.msra.mxu0 0.0
    %2067 = vmatprep.mubr.f32.mxu0 0.0
    %2068 = vmatmul.mubr.f32.gmra.mrb[0].mxu0 %v1998
    %v2069 = vpop.f32.mrb[0].mxu0
    %v2070 = vadd.f32 0.0, %v2069
    %v2071 = vpop.f32.mrb[0].mxu0
    %2072 = vmatprep.mubr.f32.mxu0 0.0
    %2073 = vmatmul.mubr.f32.gmra.mrb[0].mxu0 %v2001
    %v2074 = vpop.f32.mrb[0].mxu0
    %v2075 = vadd.f32 0.0, %v2074
    %v2076 = vpop.f32.mrb[0].mxu0
    %2077 = vdwg.mxu0
    %2078 = vrot.lane.b32.xlu0 %v244, 40
    %v2079 = vpop.permute.xlu0 %2078
    %2080 = vrot.lane.b32.xlu0 %v249, 40
    %v2081 = vpop.permute.xlu0 %2080
    %v2085 = vsel %vm439, %v1989, 0
    %v2088 = vsel %vm439, %v1990, 0
    %2090 = vmatprep.subr.mxu0 0.0
    %2091 = vmatpush1.msra.mxu0 %v2079
    %2092 = vmatprep.subr.mxu0 0.0
    %2093 = vmatpush1.msra.mxu0 %v2081
    %2094 = vmatprep.subr.mxu0 0.0
    %2095 = vmatpush1.msra.mxu0 0.0
    %2096 = vmatprep.subr.mxu0 0.0
    %2097 = vmatpush1.msra.mxu0 0.0
    %2098 = vmatprep.subr.mxu0 0.0
    %2099 = vmatpush1.msra.mxu0 0.0
    %2100 = vmatprep.subr.mxu0 0.0
    %2101 = vmatpush1.msra.mxu0 0.0
    %2102 = vmatprep.subr.mxu0 0.0
    %2103 = vmatpush1.msra.mxu0 0.0
    %2104 = vmatprep.subr.mxu0 0.0
    %2105 = vmatpush1.msra.mxu0 0.0
    %2106 = vmatprep.subr.mxu0 0.0
    %2107 = vmatpush1.msra.mxu0 0.0
    %2108 = vmatprep.subr.mxu0 0.0
    %2109 = vmatpush1.msra.mxu0 0.0
    %2110 = vmatprep.subr.mxu0 0.0
    %2111 = vmatpush1.msra.mxu0 0.0
    %2112 = vmatprep.subr.mxu0 0.0
    %2113 = vmatpush1.msra.mxu0 0.0
    %2114 = vmatprep.subr.mxu0 0.0
    %2115 = vmatpush1.msra.mxu0 0.0
    %2116 = vmatprep.subr.mxu0 0.0
    %2117 = vmatpush1.msra.mxu0 0.0
    %2118 = vmatprep.subr.mxu0 0.0
    %2119 = vmatpush1.msra.mxu0 0.0
    %2120 = vmatprep.subr.mxu0 0.0
    %2121 = vmatpush1.msra.mxu0 0.0
    %2122 = vmatprep.subr.mxu0 0.0
    %2123 = vmatpush1.msra.mxu0 0.0
    %2124 = vmatprep.subr.mxu0 0.0
    %2125 = vmatpush1.msra.mxu0 0.0
    %2126 = vmatprep.subr.mxu0 0.0
    %2127 = vmatpush1.msra.mxu0 0.0
    %2128 = vmatprep.subr.mxu0 0.0
    %2129 = vmatpush1.msra.mxu0 0.0
    %2130 = vmatprep.subr.mxu0 0.0
    %2131 = vmatpush1.msra.mxu0 0.0
    %2132 = vmatprep.subr.mxu0 0.0
    %2133 = vmatpush1.msra.mxu0 0.0
    %2134 = vmatprep.subr.mxu0 0.0
    %2135 = vmatpush1.msra.mxu0 0.0
    %2136 = vmatprep.subr.mxu0 0.0
    %2137 = vmatpush1.msra.mxu0 0.0
    %2138 = vmatprep.subr.mxu0 0.0
    %2139 = vmatpush1.msra.mxu0 0.0
    %2140 = vmatprep.subr.mxu0 0.0
    %2141 = vmatpush1.msra.mxu0 0.0
    %2142 = vmatprep.subr.mxu0 0.0
    %2143 = vmatpush1.msra.mxu0 0.0
    %2144 = vmatprep.subr.mxu0 0.0
    %2145 = vmatpush1.msra.mxu0 0.0
    %2146 = vmatprep.subr.mxu0 0.0
    %2147 = vmatpush1.msra.mxu0 0.0
    %2148 = vmatprep.subr.mxu0 0.0
    %2149 = vmatpush1.msra.mxu0 0.0
    %2150 = vmatprep.subr.mxu0 0.0
    %2151 = vmatpush1.msra.mxu0 0.0
    %2152 = vmatprep.subr.mxu0 0.0
    %2153 = vmatpush1.msra.mxu0 0.0
    %2154 = vmatprep.mubr.f32.mxu0 0.0
    %2155 = vmatmul.mubr.f32.gmra.mrb[0].mxu0 %v2085
    %v2156 = vpop.f32.mrb[0].mxu0
    %v2157 = vadd.f32 0.0, %v2156
    %v2158 = vpop.f32.mrb[0].mxu0
    %2159 = vmatprep.mubr.f32.mxu0 0.0
    %2160 = vmatmul.mubr.f32.gmra.mrb[0].mxu0 %v2088
    %v2161 = vpop.f32.mrb[0].mxu0
    %v2162 = vadd.f32 0.0, %v2161
    %v2163 = vpop.f32.mrb[0].mxu0
    %2164 = vdwg.mxu0
    %v2166 = vsel %vm262, %v2070, 0
    %v2169 = vsel %vm262, %v2075, 0
    %v2172 = vsel %vm262, %v2157, 0
    %v2175 = vsel %vm262, %v2162, 0
    %2177 = vmatprep.subr.mxu0 0.0
    %2178 = vmatpush1.msra.mxu0 %v255
    %2179 = vmatprep.subr.mxu0 0.0
    %2180 = vmatpush1.msra.mxu0 0.0
    %2181 = vmatprep.subr.mxu0 0.0
    %2182 = vmatpush1.msra.mxu0 0.0
    %2183 = vmatprep.subr.mxu0 0.0
    %2184 = vmatpush1.msra.mxu0 0.0
    %2185 = vmatprep.subr.mxu0 0.0
    %2186 = vmatpush1.msra.mxu0 0.0
    %2187 = vmatprep.subr.mxu0 0.0
    %2188 = vmatpush1.msra.mxu0 0.0
    %2189 = vmatprep.subr.mxu0 0.0
    %2190 = vmatpush1.msra.mxu0 0.0
    %2191 = vmatprep.subr.mxu0 0.0
    %2192 = vmatpush1.msra.mxu0 0.0
    %2193 = vmatprep.subr.mxu0 0.0
    %2194 = vmatpush1.msra.mxu0 0.0
    %2195 = vmatprep.subr.mxu0 0.0
    %2196 = vmatpush1.msra.mxu0 0.0
    %2197 = vmatprep.subr.mxu0 0.0
    %2198 = vmatpush1.msra.mxu0 0.0
    %2199 = vmatprep.subr.mxu0 0.0
    %2200 = vmatpush1.msra.mxu0 0.0
    %2201 = vmatprep.subr.mxu0 0.0
    %2202 = vmatpush1.msra.mxu0 0.0
    %2203 = vmatprep.subr.mxu0 0.0
    %2204 = vmatpush1.msra.mxu0 0.0
    %2205 = vmatprep.subr.mxu0 0.0
    %2206 = vmatpush1.msra.mxu0 0.0
    %2207 = vmatprep.subr.mxu0 0.0
    %2208 = vmatpush1.msra.mxu0 0.0
    %2209 = vmatprep.subr.mxu0 0.0
    %2210 = vmatpush1.msra.mxu0 0.0
    %2211 = vmatprep.subr.mxu0 0.0
    %2212 = vmatpush1.msra.mxu0 0.0
    %2213 = vmatprep.subr.mxu0 0.0
    %2214 = vmatpush1.msra.mxu0 0.0
    %2215 = vmatprep.subr.mxu0 0.0
    %2216 = vmatpush1.msra.mxu0 0.0
    %2217 = vmatprep.subr.mxu0 0.0
    %2218 = vmatpush1.msra.mxu0 0.0
    %2219 = vmatprep.subr.mxu0 0.0
    %2220 = vmatpush1.msra.mxu0 0.0
    %2221 = vmatprep.subr.mxu0 0.0
    %2222 = vmatpush1.msra.mxu0 0.0
    %2223 = vmatprep.subr.mxu0 0.0
    %2224 = vmatpush1.msra.mxu0 0.0
    %2225 = vmatprep.subr.mxu0 0.0
    %2226 = vmatpush1.msra.mxu0 0.0
    %2227 = vmatprep.subr.mxu0 0.0
    %2228 = vmatpush1.msra.mxu0 0.0
    %2229 = vmatprep.subr.mxu0 0.0
    %2230 = vmatpush1.msra.mxu0 0.0
    %2231 = vmatprep.subr.mxu0 0.0
    %2232 = vmatpush1.msra.mxu0 0.0
    %2233 = vmatprep.subr.mxu0 0.0
    %2234 = vmatpush1.msra.mxu0 0.0
    %2235 = vmatprep.subr.mxu0 0.0
    %2236 = vmatpush1.msra.mxu0 0.0
    %2237 = vmatprep.subr.mxu0 0.0
    %2238 = vmatpush1.msra.mxu0 0.0
    %2239 = vmatprep.subr.mxu0 0.0
    %2240 = vmatpush1.msra.mxu0 0.0
    %2241 = vmatprep.mubr.f32.mxu0 0.0
    %2242 = vmatmul.mubr.f32.gmra.mrb[0].mxu0 %v2166
    %v2243 = vpop.f32.mrb[0].mxu0
    %v2244 = vadd.f32 0.0, %v2243
    %v2245 = vpop.f32.mrb[0].mxu0
    %2246 = vmatprep.mubr.f32.mxu0 0.0
    %2247 = vmatmul.mubr.f32.gmra.mrb[0].mxu0 %v2169
    %v2248 = vpop.f32.mrb[0].mxu0
    %v2249 = vadd.f32 0.0, %v2248
    %v2250 = vpop.f32.mrb[0].mxu0
    %2251 = vmatprep.mubr.f32.mxu0 0.0
    %2252 = vmatmul.mubr.f32.gmra.mrb[0].mxu0 %v2172
    %v2253 = vpop.f32.mrb[0].mxu0
    %v2254 = vadd.f32 0.0, %v2253
    %v2255 = vpop.f32.mrb[0].mxu0
    %2256 = vmatprep.mubr.f32.mxu0 0.0
    %2257 = vmatmul.mubr.f32.gmra.mrb[0].mxu0 %v2175
    %v2258 = vpop.f32.mrb[0].mxu0
    %v2259 = vadd.f32 0.0, %v2258
    %v2260 = vpop.f32.mrb[0].mxu0
    %2261 = vdwg.mxu0
    %v2262 = vadd.f32 %v1757, %v2244
    %v2263 = vadd.f32 %v1758, %v2249
    %v2264 = vadd.f32 %v1759, %v2254
    %v2265 = vadd.f32 %v1760, %v2259
    %v2266 = vld [vmem:[#allocation5] sm:$0x1]
    %v2268 = vlaneseq
    %v2269 = vshrl.u32 %v2268, 7
    %v2270 = vsub.s32 0, %v2269
    %v2271 = vrot.slane %v2266, %v2270
    %v2273 = vadd.f32 %v2262, %v2271
    %v2274 = vadd.f32 %v2263, %v2271
    %v2275 = vadd.f32 %v2264, %v2271
    %v2276 = vadd.f32 %v2265, %v2271
    %v2277 = vadd.f32 %v145, %v2273
    %v2278 = vadd.f32 %v143, %v2274
    %v2279 = vadd.f32 %v145, %v2275
    %v2280 = vadd.f32 %v144, %v2276
    %v2281 = vld [vmem:[#allocation7] sm:$0x1]
    %v2282 = vld [vmem:[#allocation8] sm:$0x1]
    %v2283 = vsel %vm157, %v2277, 0.0
    %2284 = vadd.xlane.f32.xlu0 %v2283
    %v2285 = vpop.xlane.xlu0 %2284
    %v2286 = vsel %vm157, %v2278, 0.0
    %2287 = vadd.xlane.f32.xlu0 %v2286
    %v2288 = vpop.xlane.xlu0 %2287
    %v2289 = vsel %vm157, %v2279, 0.0
    %2290 = vadd.xlane.f32.xlu0 %v2289
    %v2291 = vpop.xlane.xlu0 %2290
    %v2292 = vsel %vm157, %v2280, 0.0
    %2293 = vadd.xlane.f32.xlu0 %v2292
    %v2294 = vpop.xlane.xlu0 %2293
    %v2295 = vrcp.pop 32.0
    %v2296 = vmul.f32 %v2285, %v2295
    %v2297 = vmul.f32 %v2288, %v2295
    %v2298 = vmul.f32 %v2291, %v2295
    %v2299 = vmul.f32 %v2294, %v2295
    %v2300 = vsub.f32 %v2277, %v2296
    %v2301 = vsub.f32 %v2278, %v2297
    %v2302 = vsub.f32 %v2279, %v2298
    %v2303 = vsub.f32 %v2280, %v2299
    %v2304 = vmul.f32 %v2300, %v2300
    %v2305 = vmul.f32 %v2301, %v2301
    %v2306 = vmul.f32 %v2302, %v2302
    %v2307 = vmul.f32 %v2303, %v2303
    %v2308 = vsel %vm157, %v2304, 0.0
    %2309 = vadd.xlane.f32.xlu0 %v2308
    %v2310 = vpop.xlane.xlu0 %2309
    %v2311 = vsel %vm157, %v2305, 0.0
    %2312 = vadd.xlane.f32.xlu0 %v2311
    %v2313 = vpop.xlane.xlu0 %2312
    %v2314 = vsel %vm157, %v2306, 0.0
    %2315 = vadd.xlane.f32.xlu0 %v2314
    %v2316 = vpop.xlane.xlu0 %2315
    %v2317 = vsel %vm157, %v2307, 0.0
    %2318 = vadd.xlane.f32.xlu0 %v2317
    %v2319 = vpop.xlane.xlu0 %2318
    %v2320 = vmul.f32 %v2310, %v2295
    %v2321 = vmul.f32 %v2313, %v2295
    %v2322 = vmul.f32 %v2316, %v2295
    %v2323 = vmul.f32 %v2319, %v2295
    %v2324 = vadd.f32 %v2320, 1e-12
    %v2325 = vadd.f32 %v2321, 1e-12
    %v2326 = vadd.f32 %v2322, 1e-12
    %v2327 = vadd.f32 %v2323, 1e-12
    %v2328 = vrsqrt.pop %v2324
    %v2329 = vrsqrt.pop %v2325
    %v2330 = vrsqrt.pop %v2326
    %v2331 = vrsqrt.pop %v2327
    %v2332 = vmul.f32 %v2300, %v2328
    %v2333 = vmul.f32 %v2301, %v2329
    %v2334 = vmul.f32 %v2302, %v2330
    %v2335 = vmul.f32 %v2303, %v2331
    %v2337 = vlaneseq
    %v2338 = vshrl.u32 %v2337, 7
    %v2339 = vsub.s32 0, %v2338
    %v2340 = vrot.slane %v2281, %v2339
    %v2342 = vmul.f32 %v2332, %v2340
    %v2343 = vmul.f32 %v2333, %v2340
    %v2344 = vmul.f32 %v2334, %v2340
    %v2345 = vmul.f32 %v2335, %v2340
    %v2347 = vlaneseq
    %v2348 = vshrl.u32 %v2347, 7
    %v2349 = vsub.s32 0, %v2348
    %v2350 = vrot.slane %v2282, %v2349
    %v2352 = vadd.f32 %v2342, %v2350
    %v2353 = vadd.f32 %v2343, %v2350
    %v2354 = vadd.f32 %v2344, %v2350
    %v2355 = vadd.f32 %v2345, %v2350
    %v2356 = vld [vmem:[%s8] sm:$0xff]
    %v2357 = vld [vmem:[%s8 + $0x8] sm:$0xff]
    %v2358 = vld [vmem:[%s8 + $0x10] sm:$0xff]
    %v2359 = vld [vmem:[%s8 + $0x18] sm:$0xff]
    %v2360 = vld [vmem:[#allocation10] sm:$0x1]
    %v2362 = vlaneseq
    %v2363 = vshrl.u32 %v2362, 7
    %v2364 = vsub.s32 0, %v2363
    %v2365 = vrot.slane %v2360, %v2364
    %v2368 = vsel %vm157, %v2352, 0
    %v2371 = vsel %vm157, %v2353, 0
    %v2374 = vsel %vm157, %v2354, 0
    %v2377 = vsel %vm157, %v2355, 0
    %2379 = vmatprep.subr.mxu0 0.0
    %2380 = vmatpush1.msra.mxu0 %v2356
    %2381 = vmatprep.subr.mxu0 0.0
    %2382 = vmatpush1.msra.mxu0 %v2357
    %2383 = vmatprep.subr.mxu0 0.0
    %2384 = vmatpush1.msra.mxu0 %v2358
    %2385 = vmatprep.subr.mxu0 0.0
    %2386 = vmatpush1.msra.mxu0 %v2359
    %2387 = vmatprep.subr.mxu0 0.0
    %2388 = vmatpush1.msra.mxu0 0.0
    %2389 = vmatprep.subr.mxu0 0.0
    %2390 = vmatpush1.msra.mxu0 0.0
    %2391 = vmatprep.subr.mxu0 0.0
    %2392 = vmatpush1.msra.mxu0 0.0
    %2393 = vmatprep.subr.mxu0 0.0
    %2394 = vmatpush1.msra.mxu0 0.0
    %2395 = vmatprep.subr.mxu0 0.0
    %2396 = vmatpush1.msra.mxu0 0.0
    %2397 = vmatprep.subr.mxu0 0.0
    %2398 = vmatpush1.msra.mxu0 0.0
    %2399 = vmatprep.subr.mxu0 0.0
    %2400 = vmatpush1.msra.mxu0 0.0
    %2401 = vmatprep.subr.mxu0 0.0
    %2402 = vmatpush1.msra.mxu0 0.0
    %2403 = vmatprep.subr.mxu0 0.0
    %2404 = vmatpush1.msra.mxu0 0.0
    %2405 = vmatprep.subr.mxu0 0.0
    %2406 = vmatpush1.msra.mxu0 0.0
    %2407 = vmatprep.subr.mxu0 0.0
    %2408 = vmatpush1.msra.mxu0 0.0
    %2409 = vmatprep.subr.mxu0 0.0
    %2410 = vmatpush1.msra.mxu0 0.0
    %2411 = vmatprep.subr.mxu0 0.0
    %2412 = vmatpush1.msra.mxu0 0.0
    %2413 = vmatprep.subr.mxu0 0.0
    %2414 = vmatpush1.msra.mxu0 0.0
    %2415 = vmatprep.subr.mxu0 0.0
    %2416 = vmatpush1.msra.mxu0 0.0
    %2417 = vmatprep.subr.mxu0 0.0
    %2418 = vmatpush1.msra.mxu0 0.0
    %2419 = vmatprep.subr.mxu0 0.0
    %2420 = vmatpush1.msra.mxu0 0.0
    %2421 = vmatprep.subr.mxu0 0.0
    %2422 = vmatpush1.msra.mxu0 0.0
    %2423 = vmatprep.subr.mxu0 0.0
    %2424 = vmatpush1.msra.mxu0 0.0
    %2425 = vmatprep.subr.mxu0 0.0
    %2426 = vmatpush1.msra.mxu0 0.0
    %2427 = vmatprep.subr.mxu0 0.0
    %2428 = vmatpush1.msra.mxu0 0.0
    %2429 = vmatprep.subr.mxu0 0.0
    %2430 = vmatpush1.msra.mxu0 0.0
    %2431 = vmatprep.subr.mxu0 0.0
    %2432 = vmatpush1.msra.mxu0 0.0
    %2433 = vmatprep.subr.mxu0 0.0
    %2434 = vmatpush1.msra.mxu0 0.0
    %2435 = vmatprep.subr.mxu0 0.0
    %2436 = vmatpush1.msra.mxu0 0.0
    %2437 = vmatprep.subr.mxu0 0.0
    %2438 = vmatpush1.msra.mxu0 0.0
    %2439 = vmatprep.subr.mxu0 0.0
    %2440 = vmatpush1.msra.mxu0 0.0
    %2441 = vmatprep.subr.mxu0 0.0
    %2442 = vmatpush1.msra.mxu0 0.0
    %2443 = vmatprep.mubr.f32.mxu0 0.0
    %2444 = vmatmul.mubr.f32.gmra.mrb[0].mxu0 %v2368
    %v2445 = vpop.f32.mrb[0].mxu0
    %v2446 = vadd.f32 %v2365, %v2445
    %v2447 = vpop.f32.mrb[0].mxu0
    %2448 = vmatprep.mubr.f32.mxu0 0.0
    %2449 = vmatmul.mubr.f32.gmra.mrb[0].mxu0 %v2371
    %v2450 = vpop.f32.mrb[0].mxu0
    %v2451 = vadd.f32 %v2365, %v2450
    %v2452 = vpop.f32.mrb[0].mxu0
    %2453 = vmatprep.mubr.f32.mxu0 0.0
    %2454 = vmatmul.mubr.f32.gmra.mrb[0].mxu0 %v2374
    %v2455 = vpop.f32.mrb[0].mxu0
    %v2456 = vadd.f32 %v2365, %v2455
    %v2457 = vpop.f32.mrb[0].mxu0
    %2458 = vmatprep.mubr.f32.mxu0 0.0
    %2459 = vmatmul.mubr.f32.gmra.mrb[0].mxu0 %v2377
    %v2460 = vpop.f32.mrb[0].mxu0
    %v2461 = vadd.f32 %v2365, %v2460
    %v2462 = vpop.f32.mrb[0].mxu0
    %2463 = vdwg.mxu0
    %v2464 = vmul.f32 %v2446, %v2446
    %v2465 = vmul.f32 %v2451, %v2451
    %v2466 = vmul.f32 %v2456, %v2456
    %v2467 = vmul.f32 %v2461, %v2461
    %v2468 = vmul.f32 %v2446, %v2464
    %v2469 = vmul.f32 %v2451, %v2465
    %v2470 = vmul.f32 %v2456, %v2466
    %v2471 = vmul.f32 %v2461, %v2467
    %v2472 = vmul.f32 %v2468, 0.044715
    %v2473 = vmul.f32 %v2469, 0.044715
    %v2474 = vmul.f32 %v2470, 0.044715
    %v2475 = vmul.f32 %v2471, 0.044715
    %v2476 = vadd.f32 %v2446, %v2472
    %v2477 = vadd.f32 %v2451, %v2473
    %v2478 = vadd.f32 %v2456, %v2474
    %v2479 = vadd.f32 %v2461, %v2475
    %v2480 = vmul.f32 %v2476, 0.7978846
    %v2481 = vmul.f32 %v2477, 0.7978846
    %v2482 = vmul.f32 %v2478, 0.7978846
    %v2483 = vmul.f32 %v2479, 0.7978846
    %v2484 = vtanh.pop %v2480
    %v2485 = vtanh.pop %v2481
    %v2486 = vtanh.pop %v2482
    %v2487 = vtanh.pop %v2483
    %v2488 = vadd.f32 %v2484, 1.0
    %v2489 = vadd.f32 %v2485, 1.0
    %v2490 = vadd.f32 %v2486, 1.0
    %v2491 = vadd.f32 %v2487, 1.0
    %v2492 = vmul.f32 %v2488, 0.5
    %v2493 = vmul.f32 %v2489, 0.5
    %v2494 = vmul.f32 %v2490, 0.5
    %v2495 = vmul.f32 %v2491, 0.5
    %v2496 = vmul.f32 %v2446, %v2492
    %v2497 = vmul.f32 %v2451, %v2493
    %v2498 = vmul.f32 %v2456, %v2494
    %v2499 = vmul.f32 %v2461, %v2495
    %v2500 = vld [vmem:[%s10] sm:$0xff]
    %v2501 = vld [vmem:[%s10 + $0x8] sm:$0xff]
    %v2502 = vld [vmem:[%s10 + $0x10] sm:$0xff]
    %v2503 = vld [vmem:[%s10 + $0x18] sm:$0xff]
    %v2504 = vld [vmem:[%s10 + $0x20] sm:$0xff]
    %v2505 = vld [vmem:[%s10 + $0x28] sm:$0xff]
    %v2506 = vld [vmem:[%s10 + $0x30] sm:$0xff]
    %v2507 = vld [vmem:[%s10 + $0x38] sm:$0xff]
    %v2508 = vld [vmem:[%s11] sm:$0x1]
    %v2510 = vlaneseq
    %v2511 = vshrl.u32 %v2510, 7
    %v2512 = vsub.s32 0, %v2511
    %v2513 = vrot.slane %v2508, %v2512
    %vm2515 = vcmask 523264
    %v2517 = vsel %vm2515, %v2496, 0
    %v2520 = vsel %vm2515, %v2497, 0
    %v2523 = vsel %vm2515, %v2498, 0
    %v2526 = vsel %vm2515, %v2499, 0
    %2528 = vmatprep.subr.mxu0 0.0
    %2529 = vmatpush1.msra.mxu0 %v2500
    %2530 = vmatprep.subr.mxu0 0.0
    %2531 = vmatpush1.msra.mxu0 %v2501
    %2532 = vmatprep.subr.mxu0 0.0
    %2533 = vmatpush1.msra.mxu0 %v2502
    %2534 = vmatprep.subr.mxu0 0.0
    %2535 = vmatpush1.msra.mxu0 %v2503
    %2536 = vmatprep.subr.mxu0 0.0
    %2537 = vmatpush1.msra.mxu0 %v2504
    %2538 = vmatprep.subr.mxu0 0.0
    %2539 = vmatpush1.msra.mxu0 %v2505
    %2540 = vmatprep.subr.mxu0 0.0
    %2541 = vmatpush1.msra.mxu0 %v2506
    %2542 = vmatprep.subr.mxu0 0.0
    %2543 = vmatpush1.msra.mxu0 %v2507
    %2544 = vmatprep.subr.mxu0 0.0
    %2545 = vmatpush1.msra.mxu0 0.0
    %2546 = vmatprep.subr.mxu0 0.0
    %2547 = vmatpush1.msra.mxu0 0.0
    %2548 = vmatprep.subr.mxu0 0.0
    %2549 = vmatpush1.msra.mxu0 0.0
    %2550 = vmatprep.subr.mxu0 0.0
    %2551 = vmatpush1.msra.mxu0 0.0
    %2552 = vmatprep.subr.mxu0 0.0
    %2553 = vmatpush1.msra.mxu0 0.0
    %2554 = vmatprep.subr.mxu0 0.0
    %2555 = vmatpush1.msra.mxu0 0.0
    %2556 = vmatprep.subr.mxu0 0.0
    %2557 = vmatpush1.msra.mxu0 0.0
    %2558 = vmatprep.subr.mxu0 0.0
    %2559 = vmatpush1.msra.mxu0 0.0
    %2560 = vmatprep.subr.mxu0 0.0
    %2561 = vmatpush1.msra.mxu0 0.0
    %2562 = vmatprep.subr.mxu0 0.0
    %2563 = vmatpush1.msra.mxu0 0.0
    %2564 = vmatprep.subr.mxu0 0.0
    %2565 = vmatpush1.msra.mxu0 0.0
    %2566 = vmatprep.subr.mxu0 0.0
    %2567 = vmatpush1.msra.mxu0 0.0
    %2568 = vmatprep.subr.mxu0 0.0
    %2569 = vmatpush1.msra.mxu0 0.0
    %2570 = vmatprep.subr.mxu0 0.0
    %2571 = vmatpush1.msra.mxu0 0.0
    %2572 = vmatprep.subr.mxu0 0.0
    %2573 = vmatpush1.msra.mxu0 0.0
    %2574 = vmatprep.subr.mxu0 0.0
    %2575 = vmatpush1.msra.mxu0 0.0
    %2576 = vmatprep.subr.mxu0 0.0
    %2577 = vmatpush1.msra.mxu0 0.0
    %2578 = vmatprep.subr.mxu0 0.0
    %2579 = vmatpush1.msra.mxu0 0.0
    %2580 = vmatprep.subr.mxu0 0.0
    %2581 = vmatpush1.msra.mxu0 0.0
    %2582 = vmatprep.subr.mxu0 0.0
    %2583 = vmatpush1.msra.mxu0 0.0
    %2584 = vmatprep.subr.mxu0 0.0
    %2585 = vmatpush1.msra.mxu0 0.0
    %2586 = vmatprep.subr.mxu0 0.0
    %2587 = vmatpush1.msra.mxu0 0.0
    %2588 = vmatprep.subr.mxu0 0.0
    %2589 = vmatpush1.msra.mxu0 0.0
    %2590 = vmatprep.subr.mxu0 0.0
    %2591 = vmatpush1.msra.mxu0 0.0
    %2592 = vmatprep.mubr.f32.mxu0 0.0
    %2593 = vmatmul.mubr.f32.gmra.mrb[0].mxu0 %v2517
    %v2594 = vpop.f32.mrb[0].mxu0
    %v2595 = vadd.f32 %v2513, %v2594
    %v2596 = vpop.f32.mrb[0].mxu0
    %2597 = vmatprep.mubr.f32.mxu0 0.0
    %2598 = vmatmul.mubr.f32.gmra.mrb[0].mxu0 %v2520
    %v2599 = vpop.f32.mrb[0].mxu0
    %v2600 = vadd.f32 %v2513, %v2599
    %v2601 = vpop.f32.mrb[0].mxu0
    %2602 = vmatprep.mubr.f32.mxu0 0.0
    %2603 = vmatmul.mubr.f32.gmra.mrb[0].mxu0 %v2523
    %v2604 = vpop.f32.mrb[0].mxu0
    %v2605 = vadd.f32 %v2513, %v2604
    %v2606 = vpop.f32.mrb[0].mxu0
    %2607 = vmatprep.mubr.f32.mxu0 0.0
    %2608 = vmatmul.mubr.f32.gmra.mrb[0].mxu0 %v2526
    %v2609 = vpop.f32.mrb[0].mxu0
    %v2610 = vadd.f32 %v2513, %v2609
    %v2611 = vpop.f32.mrb[0].mxu0
    %2612 = vdwg.mxu0
    %v2613 = vadd.f32 %v2352, %v2595
    %v2614 = vadd.f32 %v2353, %v2600
    %v2615 = vadd.f32 %v2354, %v2605
    %v2616 = vadd.f32 %v2355, %v2610
    %v2617 = vld [vmem:[%s12] sm:$0x1]
    %v2618 = vld [vmem:[%s13] sm:$0x1]
    %v2619 = vsel %vm157, %v2613, 0.0
    %2620 = vadd.xlane.f32.xlu0 %v2619
    %v2621 = vpop.xlane.xlu0 %2620
    %v2622 = vsel %vm157, %v2614, 0.0
    %2623 = vadd.xlane.f32.xlu0 %v2622
    %v2624 = vpop.xlane.xlu0 %2623
    %v2625 = vsel %vm157, %v2615, 0.0
    %2626 = vadd.xlane.f32.xlu0 %v2625
    %v2627 = vpop.xlane.xlu0 %2626
    %v2628 = vsel %vm157, %v2616, 0.0
    %2629 = vadd.xlane.f32.xlu0 %v2628
    %v2630 = vpop.xlane.xlu0 %2629
    %v2631 = vmul.f32 %v2621, %v2295
    %v2632 = vmul.f32 %v2624, %v2295
    %v2633 = vmul.f32 %v2627, %v2295
    %v2634 = vmul.f32 %v2630, %v2295
    %v2635 = vsub.f32 %v2613, %v2631
    %v2636 = vsub.f32 %v2614, %v2632
    %v2637 = vsub.f32 %v2615, %v2633
    %v2638 = vsub.f32 %v2616, %v2634
    %v2639 = vmul.f32 %v2635, %v2635
    %v2640 = vmul.f32 %v2636, %v2636
    %v2641 = vmul.f32 %v2637, %v2637
    %v2642 = vmul.f32 %v2638, %v2638
    %v2643 = vsel %vm157, %v2639, 0.0
    %2644 = vadd.xlane.f32.xlu0 %v2643
    %v2645 = vpop.xlane.xlu0 %2644
    %v2646 = vsel %vm157, %v2640, 0.0
    %2647 = vadd.xlane.f32.xlu0 %v2646
    %v2648 = vpop.xlane.xlu0 %2647
    %v2649 = vsel %vm157, %v2641, 0.0
    %2650 = vadd.xlane.f32.xlu0 %v2649
    %v2651 = vpop.xlane.xlu0 %2650
    %v2652 = vsel %vm157, %v2642, 0.0
    %2653 = vadd.xlane.f32.xlu0 %v2652
    %v2654 = vpop.xlane.xlu0 %2653
    %v2655 = vmul.f32 %v2645, %v2295
    %v2656 = vmul.f32 %v2648, %v2295
    %v2657 = vmul.f32 %v2651, %v2295
    %v2658 = vmul.f32 %v2654, %v2295
    %v2659 = vadd.f32 %v2655, 1e-12
    %v2660 = vadd.f32 %v2656, 1e-12
    %v2661 = vadd.f32 %v2657, 1e-12
    %v2662 = vadd.f32 %v2658, 1e-12
    %v2663 = vrsqrt.pop %v2659
    %v2664 = vrsqrt.pop %v2660
    %v2665 = vrsqrt.pop %v2661
    %v2666 = vrsqrt.pop %v2662
    %v2667 = vmul.f32 %v2635, %v2663
    %v2668 = vmul.f32 %v2636, %v2664
    %v2669 = vmul.f32 %v2637, %v2665
    %v2670 = vmul.f32 %v2638, %v2666
    %v2672 = vlaneseq
    %v2673 = vshrl.u32 %v2672, 7
    %v2674 = vsub.s32 0, %v2673
    %v2675 = vrot.slane %v2617, %v2674
    %v2677 = vmul.f32 %v2667, %v2675
    %v2678 = vmul.f32 %v2668, %v2675
    %v2679 = vmul.f32 %v2669, %v2675
    %v2680 = vmul.f32 %v2670, %v2675
    %v2682 = vlaneseq
    %v2683 = vshrl.u32 %v2682, 7
    %v2684 = vsub.s32 0, %v2683
    %v2685 = vrot.slane %v2618, %v2684
    %v2687 = vadd.f32 %v2677, %v2685
    %v2688 = vadd.f32 %v2678, %v2685
    %v2689 = vadd.f32 %v2679, %v2685
    %v2690 = vadd.f32 %v2680, %v2685
    %s2691 = scalar_lea.vmem %s2, 32
    %v2692 = vld [vmem:[%s2691] sm:$0xff]
    %v2693 = vld [vmem:[%s2691 + $0x8] sm:$0xff]
    %v2694 = vld [vmem:[%s2691 + $0x10] sm:$0xff]
    %v2695 = vld [vmem:[%s2691 + $0x18] sm:$0xff]
    %s2696 = scalar_lea.vmem %s3, 1
    %v2697 = vld [vmem:[%s2696] sm:$0x1]
    %v2699 = vlaneseq
    %v2700 = vshrl.u32 %v2699, 7
    %v2701 = vsub.s32 0, %v2700
    %v2702 = vrot.slane %v2697, %v2701
    %v2705 = vsel %vm157, %v2687, 0
    %v2708 = vsel %vm157, %v2688, 0
    %v2711 = vsel %vm157, %v2689, 0
    %v2714 = vsel %vm157, %v2690, 0
    %2716 = vmatprep.subr.mxu0 0.0
    %2717 = vmatpush1.msra.mxu0 %v2692
    %2718 = vmatprep.subr.mxu0 0.0
    %2719 = vmatpush1.msra.mxu0 %v2693
    %2720 = vmatprep.subr.mxu0 0.0
    %2721 = vmatpush1.msra.mxu0 %v2694
    %2722 = vmatprep.subr.mxu0 0.0
    %2723 = vmatpush1.msra.mxu0 %v2695
    %2724 = vmatprep.subr.mxu0 0.0
    %2725 = vmatpush1.msra.mxu0 0.0
    %2726 = vmatprep.subr.mxu0 0.0
    %2727 = vmatpush1.msra.mxu0 0.0
    %2728 = vmatprep.subr.mxu0 0.0
    %2729 = vmatpush1.msra.mxu0 0.0
    %2730 = vmatprep.subr.mxu0 0.0
    %2731 = vmatpush1.msra.mxu0 0.0
    %2732 = vmatprep.subr.mxu0 0.0
    %2733 = vmatpush1.msra.mxu0 0.0
    %2734 = vmatprep.subr.mxu0 0.0
    %2735 = vmatpush1.msra.mxu0 0.0
    %2736 = vmatprep.subr.mxu0 0.0
    %2737 = vmatpush1.msra.mxu0 0.0
    %2738 = vmatprep.subr.mxu0 0.0
    %2739 = vmatpush1.msra.mxu0 0.0
    %2740 = vmatprep.subr.mxu0 0.0
    %2741 = vmatpush1.msra.mxu0 0.0
    %2742 = vmatprep.subr.mxu0 0.0
    %2743 = vmatpush1.msra.mxu0 0.0
    %2744 = vmatprep.subr.mxu0 0.0
    %2745 = vmatpush1.msra.mxu0 0.0
    %2746 = vmatprep.subr.mxu0 0.0
    %2747 = vmatpush1.msra.mxu0 0.0
    %2748 = vmatprep.subr.mxu0 0.0
    %2749 = vmatpush1.msra.mxu0 0.0
    %2750 = vmatprep.subr.mxu0 0.0
    %2751 = vmatpush1.msra.mxu0 0.0
    %2752 = vmatprep.subr.mxu0 0.0
    %2753 = vmatpush1.msra.mxu0 0.0
    %2754 = vmatprep.subr.mxu0 0.0
    %2755 = vmatpush1.msra.mxu0 0.0
    %2756 = vmatprep.subr.mxu0 0.0
    %2757 = vmatpush1.msra.mxu0 0.0
    %2758 = vmatprep.subr.mxu0 0.0
    %2759 = vmatpush1.msra.mxu0 0.0
    %2760 = vmatprep.subr.mxu0 0.0
    %2761 = vmatpush1.msra.mxu0 0.0
    %2762 = vmatprep.subr.mxu0 0.0
    %2763 = vmatpush1.msra.mxu0 0.0
    %2764 = vmatprep.subr.mxu0 0.0
    %2765 = vmatpush1.msra.mxu0 0.0
    %2766 = vmatprep.subr.mxu0 0.0
    %2767 = vmatpush1.msra.mxu0 0.0
    %2768 = vmatprep.subr.mxu0 0.0
    %2769 = vmatpush1.msra.mxu0 0.0
    %2770 = vmatprep.subr.mxu0 0.0
    %2771 = vmatpush1.msra.mxu0 0.0
    %2772 = vmatprep.subr.mxu0 0.0
    %2773 = vmatpush1.msra.mxu0 0.0
    %2774 = vmatprep.subr.mxu0 0.0
    %2775 = vmatpush1.msra.mxu0 0.0
    %2776 = vmatprep.subr.mxu0 0.0
    %2777 = vmatpush1.msra.mxu0 0.0
    %2778 = vmatprep.subr.mxu0 0.0
    %2779 = vmatpush1.msra.mxu0 0.0
    %2780 = vmatprep.mubr.f32.mxu0 0.0
    %2781 = vmatmul.mubr.f32.gmra.mrb[0].mxu0 %v2705
    %v2782 = vpop.f32.mrb[0].mxu0
    %v2783 = vadd.f32 %v2702, %v2782
    %v2784 = vpop.f32.mrb[0].mxu0
    %2785 = vmatprep.mubr.f32.mxu0 0.0
    %2786 = vmatmul.mubr.f32.gmra.mrb[0].mxu0 %v2708
    %v2787 = vpop.f32.mrb[0].mxu0
    %v2788 = vadd.f32 %v2702, %v2787
    %v2789 = vpop.f32.mrb[0].mxu0
    %2790 = vmatprep.mubr.f32.mxu0 0.0
    %2791 = vmatmul.mubr.f32.gmra.mrb[0].mxu0 %v2711
    %v2792 = vpop.f32.mrb[0].mxu0
    %v2793 = vadd.f32 %v2702, %v2792
    %v2794 = vpop.f32.mrb[0].mxu0
    %2795 = vmatprep.mubr.f32.mxu0 0.0
    %2796 = vmatmul.mubr.f32.gmra.mrb[0].mxu0 %v2714
    %v2797 = vpop.f32.mrb[0].mxu0
    %v2798 = vadd.f32 %v2702, %v2797
    %v2799 = vpop.f32.mrb[0].mxu0
    %2800 = vdwg.mxu0
    %s2801 = scalar_lea.vmem %s4, 32
    %v2802 = vld [vmem:[%s2801] sm:$0xff]
    %v2803 = vld [vmem:[%s2801 + $0x8] sm:$0xff]
    %v2804 = vld [vmem:[%s2801 + $0x10] sm:$0xff]
    %v2805 = vld [vmem:[%s2801 + $0x18] sm:$0xff]
    %2808 = vrot.lane.b32.xlu0 %v2783, 96
    %v2809 = vpop.permute.xlu0 %2808
    %2810 = vrot.lane.b32.xlu0 %v2788, 96
    %v2811 = vpop.permute.xlu0 %2810
    %v2812 = vsel %vm262, %v2783, 0
    %v2814 = vsel %vm262, %v2788, 0
    %v2816 = vsel %vm262, %v2809, 0
    %v2818 = vsel %vm262, %v2811, 0
    %2820 = vmatprep.subr.mxu0 0.0
    %2821 = vmatpush1.xpose.msra.mxu0 %v2816
    %2822 = vmatprep.subr.mxu0 0.0
    %2823 = vmatpush1.xpose.msra.mxu0 %v2818
    %2824 = vmatprep.subr.mxu0 0.0
    %2825 = vmatpush1.xpose.msra.mxu0 0.0
    %2826 = vmatprep.subr.mxu0 0.0
    %2827 = vmatpush1.xpose.msra.mxu0 0.0
    %2828 = vmatprep.subr.mxu0 0.0
    %2829 = vmatpush1.xpose.msra.mxu0 0.0
    %2830 = vmatprep.subr.mxu0 0.0
    %2831 = vmatpush1.xpose.msra.mxu0 0.0
    %2832 = vmatprep.subr.mxu0 0.0
    %2833 = vmatpush1.xpose.msra.mxu0 0.0
    %2834 = vmatprep.subr.mxu0 0.0
    %2835 = vmatpush1.xpose.msra.mxu0 0.0
    %2836 = vmatprep.subr.mxu0 0.0
    %2837 = vmatpush1.xpose.msra.mxu0 0.0
    %2838 = vmatprep.subr.mxu0 0.0
    %2839 = vmatpush1.xpose.msra.mxu0 0.0
    %2840 = vmatprep.subr.mxu0 0.0
    %2841 = vmatpush1.xpose.msra.mxu0 0.0
    %2842 = vmatprep.subr.mxu0 0.0
    %2843 = vmatpush1.xpose.msra.mxu0 0.0
    %2844 = vmatprep.subr.mxu0 0.0
    %2845 = vmatpush1.xpose.msra.mxu0 0.0
    %2846 = vmatprep.subr.mxu0 0.0
    %2847 = vmatpush1.xpose.msra.mxu0 0.0
    %2848 = vmatprep.subr.mxu0 0.0
    %2849 = vmatpush1.xpose.msra.mxu0 0.0
    %2850 = vmatprep.subr.mxu0 0.0
    %2851 = vmatpush1.xpose.msra.mxu0 0.0
    %2852 = vmatprep.subr.mxu0 0.0
    %2853 = vmatpush1.xpose.msra.mxu0 0.0
    %2854 = vmatprep.subr.mxu0 0.0
    %2855 = vmatpush1.xpose.msra.mxu0 0.0
    %2856 = vmatprep.subr.mxu0 0.0
    %2857 = vmatpush1.xpose.msra.mxu0 0.0
    %2858 = vmatprep.subr.mxu0 0.0
    %2859 = vmatpush1.xpose.msra.mxu0 0.0
    %2860 = vmatprep.subr.mxu0 0.0
    %2861 = vmatpush1.xpose.msra.mxu0 0.0
    %2862 = vmatprep.subr.mxu0 0.0
    %2863 = vmatpush1.xpose.msra.mxu0 0.0
    %2864 = vmatprep.subr.mxu0 0.0
    %2865 = vmatpush1.xpose.msra.mxu0 0.0
    %2866 = vmatprep.subr.mxu0 0.0
    %2867 = vmatpush1.xpose.msra.mxu0 0.0
    %2868 = vmatprep.subr.mxu0 0.0
    %2869 = vmatpush1.xpose.msra.mxu0 0.0
    %2870 = vmatprep.subr.mxu0 0.0
    %2871 = vmatpush1.xpose.msra.mxu0 0.0
    %2872 = vmatprep.subr.mxu0 0.0
    %2873 = vmatpush1.xpose.msra.mxu0 0.0
    %2874 = vmatprep.subr.mxu0 0.0
    %2875 = vmatpush1.xpose.msra.mxu0 0.0
    %2876 = vmatprep.subr.mxu0 0.0
    %2877 = vmatpush1.xpose.msra.mxu0 0.0
    %2878 = vmatprep.subr.mxu0 0.0
    %2879 = vmatpush1.xpose.msra.mxu0 0.0
    %2880 = vmatprep.subr.mxu0 0.0
    %2881 = vmatpush1.xpose.msra.mxu0 0.0
    %2882 = vmatprep.subr.mxu0 0.0
    %2883 = vmatpush1.xpose.msra.mxu0 0.0
    %2884 = vmatprep.mubr.f32.mxu0 0.0
    %2885 = vmatmul.mubr.f32.gmra.mrb[0].mxu0 %v2812
    %v2886 = vpop.f32.mrb[0].mxu0
    %v2887 = vadd.f32 0.0, %v2886
    %v2888 = vpop.f32.mrb[0].mxu0
    %2889 = vmatprep.mubr.f32.mxu0 0.0
    %2890 = vmatmul.mubr.f32.gmra.mrb[0].mxu0 %v2814
    %v2891 = vpop.f32.mrb[0].mxu0
    %v2892 = vadd.f32 0.0, %v2891
    %v2893 = vpop.f32.mrb[0].mxu0
    %2894 = vdwg.mxu0
    %2897 = vrot.lane.b32.xlu0 %v2793, 96
    %v2898 = vpop.permute.xlu0 %2897
    %2899 = vrot.lane.b32.xlu0 %v2798, 96
    %v2900 = vpop.permute.xlu0 %2899
    %v2901 = vsel %vm262, %v2793, 0
    %v2903 = vsel %vm262, %v2798, 0
    %v2905 = vsel %vm262, %v2898, 0
    %v2907 = vsel %vm262, %v2900, 0
    %2909 = vmatprep.subr.mxu0 0.0
    %2910 = vmatpush1.xpose.msra.mxu0 %v2905
    %2911 = vmatprep.subr.mxu0 0.0
    %2912 = vmatpush1.xpose.msra.mxu0 %v2907
    %2913 = vmatprep.subr.mxu0 0.0
    %2914 = vmatpush1.xpose.msra.mxu0 0.0
    %2915 = vmatprep.subr.mxu0 0.0
    %2916 = vmatpush1.xpose.msra.mxu0 0.0
    %2917 = vmatprep.subr.mxu0 0.0
    %2918 = vmatpush1.xpose.msra.mxu0 0.0
    %2919 = vmatprep.subr.mxu0 0.0
    %2920 = vmatpush1.xpose.msra.mxu0 0.0
    %2921 = vmatprep.subr.mxu0 0.0
    %2922 = vmatpush1.xpose.msra.mxu0 0.0
    %2923 = vmatprep.subr.mxu0 0.0
    %2924 = vmatpush1.xpose.msra.mxu0 0.0
    %2925 = vmatprep.subr.mxu0 0.0
    %2926 = vmatpush1.xpose.msra.mxu0 0.0
    %2927 = vmatprep.subr.mxu0 0.0
    %2928 = vmatpush1.xpose.msra.mxu0 0.0
    %2929 = vmatprep.subr.mxu0 0.0
    %2930 = vmatpush1.xpose.msra.mxu0 0.0
    %2931 = vmatprep.subr.mxu0 0.0
    %2932 = vmatpush1.xpose.msra.mxu0 0.0
    %2933 = vmatprep.subr.mxu0 0.0
    %2934 = vmatpush1.xpose.msra.mxu0 0.0
    %2935 = vmatprep.subr.mxu0 0.0
    %2936 = vmatpush1.xpose.msra.mxu0 0.0
    %2937 = vmatprep.subr.mxu0 0.0
    %2938 = vmatpush1.xpose.msra.mxu0 0.0
    %2939 = vmatprep.subr.mxu0 0.0
    %2940 = vmatpush1.xpose.msra.mxu0 0.0
    %2941 = vmatprep.subr.mxu0 0.0
    %2942 = vmatpush1.xpose.msra.mxu0 0.0
    %2943 = vmatprep.subr.mxu0 0.0
    %2944 = vmatpush1.xpose.msra.mxu0 0.0
    %2945 = vmatprep.subr.mxu0 0.0
    %2946 = vmatpush1.xpose.msra.mxu0 0.0
    %2947 = vmatprep.subr.mxu0 0.0
    %2948 = vmatpush1.xpose.msra.mxu0 0.0
    %2949 = vmatprep.subr.mxu0 0.0
    %2950 = vmatpush1.xpose.msra.mxu0 0.0
    %2951 = vmatprep.subr.mxu0 0.0
    %2952 = vmatpush1.xpose.msra.mxu0 0.0
    %2953 = vmatprep.subr.mxu0 0.0
    %2954 = vmatpush1.xpose.msra.mxu0 0.0
    %2955 = vmatprep.subr.mxu0 0.0
    %2956 = vmatpush1.xpose.msra.mxu0 0.0
    %2957 = vmatprep.subr.mxu0 0.0
    %2958 = vmatpush1.xpose.msra.mxu0 0.0
    %2959 = vmatprep.subr.mxu0 0.0
    %2960 = vmatpush1.xpose.msra.mxu0 0.0
    %2961 = vmatprep.subr.mxu0 0.0
    %2962 = vmatpush1.xpose.msra.mxu0 0.0
    %2963 = vmatprep.subr.mxu0 0.0
    %2964 = vmatpush1.xpose.msra.mxu0 0.0
    %2965 = vmatprep.subr.mxu0 0.0
    %2966 = vmatpush1.xpose.msra.mxu0 0.0
    %2967 = vmatprep.subr.mxu0 0.0
    %2968 = vmatpush1.xpose.msra.mxu0 0.0
    %2969 = vmatprep.subr.mxu0 0.0
    %2970 = vmatpush1.xpose.msra.mxu0 0.0
    %2971 = vmatprep.subr.mxu0 0.0
    %2972 = vmatpush1.xpose.msra.mxu0 0.0
    %2973 = vmatprep.mubr.f32.mxu0 0.0
    %2974 = vmatmul.mubr.f32.gmra.mrb[0].mxu0 %v2901
    %v2975 = vpop.f32.mrb[0].mxu0
    %v2976 = vadd.f32 0.0, %v2975
    %v2977 = vpop.f32.mrb[0].mxu0
    %2978 = vmatprep.mubr.f32.mxu0 0.0
    %2979 = vmatmul.mubr.f32.gmra.mrb[0].mxu0 %v2903
    %v2980 = vpop.f32.mrb[0].mxu0
    %v2981 = vadd.f32 0.0, %v2980
    %v2982 = vpop.f32.mrb[0].mxu0
    %2983 = vdwg.mxu0
    %v2984 = vmul.f32 %v2887, 0.35355338
    %v2985 = vmul.f32 %v2892, 0.35355338
    %v2986 = vmul.f32 %v2976, 0.35355338
    %v2987 = vmul.f32 %v2981, 0.35355338
    %v2988 = vsel %vm439, %v2984, -inf
    %2989 = vmax.xlane.f32.xlu0 %v2988
    %v2990 = vpop.xlane.xlu0 %2989
    %v2991 = vsel %vm439, %v2985, -inf
    %2992 = vmax.xlane.f32.xlu0 %v2991
    %v2993 = vpop.xlane.xlu0 %2992
    %v2994 = vsel %vm439, %v2986, -inf
    %2995 = vmax.xlane.f32.xlu0 %v2994
    %v2996 = vpop.xlane.xlu0 %2995
    %v2997 = vsel %vm439, %v2987, -inf
    %2998 = vmax.xlane.f32.xlu0 %v2997
    %v2999 = vpop.xlane.xlu0 %2998
    %v3000 = vsub.f32 %v2984, %v2990
    %v3001 = vsub.f32 %v2985, %v2993
    %v3002 = vsub.f32 %v2986, %v2996
    %v3003 = vsub.f32 %v2987, %v2999
    %v3004 = vmul.f32 %v3000, 1.442695
    %v3005 = vpow.pop %v3004
    %v3006 = vmul.f32 %v3001, 1.442695
    %v3007 = vpow.pop %v3006
    %v3008 = vmul.f32 %v3002, 1.442695
    %v3009 = vpow.pop %v3008
    %v3010 = vmul.f32 %v3003, 1.442695
    %v3011 = vpow.pop %v3010
    %v3012 = vsel %vm439, %v3005, 0.0
    %3013 = vadd.xlane.f32.xlu0 %v3012
    %v3014 = vpop.xlane.xlu0 %3013
    %v3015 = vsel %vm439, %v3007, 0.0
    %3016 = vadd.xlane.f32.xlu0 %v3015
    %v3017 = vpop.xlane.xlu0 %3016
    %v3018 = vsel %vm439, %v3009, 0.0
    %3019 = vadd.xlane.f32.xlu0 %v3018
    %v3020 = vpop.xlane.xlu0 %3019
    %v3021 = vsel %vm439, %v3011, 0.0
    %3022 = vadd.xlane.f32.xlu0 %v3021
    %v3023 = vpop.xlane.xlu0 %3022
    %v3024 = vrcp.pop %v3014
    %v3025 = vrcp.pop %v3017
    %v3026 = vrcp.pop %v3020
    %v3027 = vrcp.pop %v3023
    %v3028 = vmul.f32 %v3005, %v3024
    %v3029 = vmul.f32 %v3007, %v3025
    %v3030 = vmul.f32 %v3009, %v3026
    %v3031 = vmul.f32 %v3011, %v3027
    %3032 = vrot.lane.b32.xlu0 %v2783, 64
    %v3033 = vpop.permute.xlu0 %3032
    %3034 = vrot.lane.b32.xlu0 %v2788, 64
    %v3035 = vpop.permute.xlu0 %3034
    %v3039 = vsel %vm439, %v3028, 0
    %v3042 = vsel %vm439, %v3029, 0
    %3044 = vmatprep.subr.mxu0 0.0
    %3045 = vmatpush1.msra.mxu0 %v3033
    %3046 = vmatprep.subr.mxu0 0.0
    %3047 = vmatpush1.msra.mxu0 %v3035
    %3048 = vmatprep.subr.mxu0 0.0
    %3049 = vmatpush1.msra.mxu0 0.0
    %3050 = vmatprep.subr.mxu0 0.0
    %3051 = vmatpush1.msra.mxu0 0.0
    %3052 = vmatprep.subr.mxu0 0.0
    %3053 = vmatpush1.msra.mxu0 0.0
    %3054 = vmatprep.subr.mxu0 0.0
    %3055 = vmatpush1.msra.mxu0 0.0
    %3056 = vmatprep.subr.mxu0 0.0
    %3057 = vmatpush1.msra.mxu0 0.0
    %3058 = vmatprep.subr.mxu0 0.0
    %3059 = vmatpush1.msra.mxu0 0.0
    %3060 = vmatprep.subr.mxu0 0.0
    %3061 = vmatpush1.msra.mxu0 0.0
    %3062 = vmatprep.subr.mxu0 0.0
    %3063 = vmatpush1.msra.mxu0 0.0
    %3064 = vmatprep.subr.mxu0 0.0
    %3065 = vmatpush1.msra.mxu0 0.0
    %3066 = vmatprep.subr.mxu0 0.0
    %3067 = vmatpush1.msra.mxu0 0.0
    %3068 = vmatprep.subr.mxu0 0.0
    %3069 = vmatpush1.msra.mxu0 0.0
    %3070 = vmatprep.subr.mxu0 0.0
    %3071 = vmatpush1.msra.mxu0 0.0
    %3072 = vmatprep.subr.mxu0 0.0
    %3073 = vmatpush1.msra.mxu0 0.0
    %3074 = vmatprep.subr.mxu0 0.0
    %3075 = vmatpush1.msra.mxu0 0.0
    %3076 = vmatprep.subr.mxu0 0.0
    %3077 = vmatpush1.msra.mxu0 0.0
    %3078 = vmatprep.subr.mxu0 0.0
    %3079 = vmatpush1.msra.mxu0 0.0
    %3080 = vmatprep.subr.mxu0 0.0
    %3081 = vmatpush1.msra.mxu0 0.0
    %3082 = vmatprep.subr.mxu0 0.0
    %3083 = vmatpush1.msra.mxu0 0.0
    %3084 = vmatprep.subr.mxu0 0.0
    %3085 = vmatpush1.msra.mxu0 0.0
    %3086 = vmatprep.subr.mxu0 0.0
    %3087 = vmatpush1.msra.mxu0 0.0
    %3088 = vmatprep.subr.mxu0 0.0
    %3089 = vmatpush1.msra.mxu0 0.0
    %3090 = vmatprep.subr.mxu0 0.0
    %3091 = vmatpush1.msra.mxu0 0.0
    %3092 = vmatprep.subr.mxu0 0.0
    %3093 = vmatpush1.msra.mxu0 0.0
    %3094 = vmatprep.subr.mxu0 0.0
    %3095 = vmatpush1.msra.mxu0 0.0
    %3096 = vmatprep.subr.mxu0 0.0
    %3097 = vmatpush1.msra.mxu0 0.0
    %3098 = vmatprep.subr.mxu0 0.0
    %3099 = vmatpush1.msra.mxu0 0.0
    %3100 = vmatprep.subr.mxu0 0.0
    %3101 = vmatpush1.msra.mxu0 0.0
    %3102 = vmatprep.subr.mxu0 0.0
    %3103 = vmatpush1.msra.mxu0 0.0
    %3104 = vmatprep.subr.mxu0 0.0
    %3105 = vmatpush1.msra.mxu0 0.0
    %3106 = vmatprep.subr.mxu0 0.0
    %3107 = vmatpush1.msra.mxu0 0.0
    %3108 = vmatprep.mubr.f32.mxu0 0.0
    %3109 = vmatmul.mubr.f32.gmra.mrb[0].mxu0 %v3039
    %v3110 = vpop.f32.mrb[0].mxu0
    %v3111 = vadd.f32 0.0, %v3110
    %v3112 = vpop.f32.mrb[0].mxu0
    %3113 = vmatprep.mubr.f32.mxu0 0.0
    %3114 = vmatmul.mubr.f32.gmra.mrb[0].mxu0 %v3042
    %v3115 = vpop.f32.mrb[0].mxu0
    %v3116 = vadd.f32 0.0, %v3115
    %v3117 = vpop.f32.mrb[0].mxu0
    %3118 = vdwg.mxu0
    %3119 = vrot.lane.b32.xlu0 %v2793, 64
    %v3120 = vpop.permute.xlu0 %3119
    %3121 = vrot.lane.b32.xlu0 %v2798, 64
    %v3122 = vpop.permute.xlu0 %3121
    %v3126 = vsel %vm439, %v3030, 0
    %v3129 = vsel %vm439, %v3031, 0
    %3131 = vmatprep.subr.mxu0 0.0
    %3132 = vmatpush1.msra.mxu0 %v3120
    %3133 = vmatprep.subr.mxu0 0.0
    %3134 = vmatpush1.msra.mxu0 %v3122
    %3135 = vmatprep.subr.mxu0 0.0
    %3136 = vmatpush1.msra.mxu0 0.0
    %3137 = vmatprep.subr.mxu0 0.0
    %3138 = vmatpush1.msra.mxu0 0.0
    %3139 = vmatprep.subr.mxu0 0.0
    %3140 = vmatpush1.msra.mxu0 0.0
    %3141 = vmatprep.subr.mxu0 0.0
    %3142 = vmatpush1.msra.mxu0 0.0
    %3143 = vmatprep.subr.mxu0 0.0
    %3144 = vmatpush1.msra.mxu0 0.0
    %3145 = vmatprep.subr.mxu0 0.0
    %3146 = vmatpush1.msra.mxu0 0.0
    %3147 = vmatprep.subr.mxu0 0.0
    %3148 = vmatpush1.msra.mxu0 0.0
    %3149 = vmatprep.subr.mxu0 0.0
    %3150 = vmatpush1.msra.mxu0 0.0
    %3151 = vmatprep.subr.mxu0 0.0
    %3152 = vmatpush1.msra.mxu0 0.0
    %3153 = vmatprep.subr.mxu0 0.0
    %3154 = vmatpush1.msra.mxu0 0.0
    %3155 = vmatprep.subr.mxu0 0.0
    %3156 = vmatpush1.msra.mxu0 0.0
    %3157 = vmatprep.subr.mxu0 0.0
    %3158 = vmatpush1.msra.mxu0 0.0
    %3159 = vmatprep.subr.mxu0 0.0
    %3160 = vmatpush1.msra.mxu0 0.0
    %3161 = vmatprep.subr.mxu0 0.0
    %3162 = vmatpush1.msra.mxu0 0.0
    %3163 = vmatprep.subr.mxu0 0.0
    %3164 = vmatpush1.msra.mxu0 0.0
    %3165 = vmatprep.subr.mxu0 0.0
    %3166 = vmatpush1.msra.mxu0 0.0
    %3167 = vmatprep.subr.mxu0 0.0
    %3168 = vmatpush1.msra.mxu0 0.0
    %3169 = vmatprep.subr.mxu0 0.0
    %3170 = vmatpush1.msra.mxu0 0.0
    %3171 = vmatprep.subr.mxu0 0.0
    %3172 = vmatpush1.msra.mxu0 0.0
    %3173 = vmatprep.subr.mxu0 0.0
    %3174 = vmatpush1.msra.mxu0 0.0
    %3175 = vmatprep.subr.mxu0 0.0
    %3176 = vmatpush1.msra.mxu0 0.0
    %3177 = vmatprep.subr.mxu0 0.0
    %3178 = vmatpush1.msra.mxu0 0.0
    %3179 = vmatprep.subr.mxu0 0.0
    %3180 = vmatpush1.msra.mxu0 0.0
    %3181 = vmatprep.subr.mxu0 0.0
    %3182 = vmatpush1.msra.mxu0 0.0
    %3183 = vmatprep.subr.mxu0 0.0
    %3184 = vmatpush1.msra.mxu0 0.0
    %3185 = vmatprep.subr.mxu0 0.0
    %3186 = vmatpush1.msra.mxu0 0.0
    %3187 = vmatprep.subr.mxu0 0.0
    %3188 = vmatpush1.msra.mxu0 0.0
    %3189 = vmatprep.subr.mxu0 0.0
    %3190 = vmatpush1.msra.mxu0 0.0
    %3191 = vmatprep.subr.mxu0 0.0
    %3192 = vmatpush1.msra.mxu0 0.0
    %3193 = vmatprep.subr.mxu0 0.0
    %3194 = vmatpush1.msra.mxu0 0.0
    %3195 = vmatprep.mubr.f32.mxu0 0.0
    %3196 = vmatmul.mubr.f32.gmra.mrb[0].mxu0 %v3126
    %v3197 = vpop.f32.mrb[0].mxu0
    %v3198 = vadd.f32 0.0, %v3197
    %v3199 = vpop.f32.mrb[0].mxu0
    %3200 = vmatprep.mubr.f32.mxu0 0.0
    %3201 = vmatmul.mubr.f32.gmra.mrb[0].mxu0 %v3129
    %v3202 = vpop.f32.mrb[0].mxu0
    %v3203 = vadd.f32 0.0, %v3202
    %v3204 = vpop.f32.mrb[0].mxu0
    %3205 = vdwg.mxu0
    %3206 = vrot.lane.b32.xlu0 %v2783, 120
    %v3207 = vpop.permute.xlu0 %3206
    %3208 = vrot.lane.b32.xlu0 %v2788, 120
    %v3209 = vpop.permute.xlu0 %3208
    %3210 = vrot.lane.b32.xlu0 %v2783, 88
    %v3211 = vpop.permute.xlu0 %3210
    %3212 = vrot.lane.b32.xlu0 %v2788, 88
    %v3213 = vpop.permute.xlu0 %3212
    %v3214 = vsel %vm262, %v3207, 0
    %v3216 = vsel %vm262, %v3209, 0
    %v3218 = vsel %vm262, %v3211, 0
    %v3220 = vsel %vm262, %v3213, 0
    %3222 = vmatprep.subr.mxu0 0.0
    %3223 = vmatpush1.xpose.msra.mxu0 %v3218
    %3224 = vmatprep.subr.mxu0 0.0
    %3225 = vmatpush1.xpose.msra.mxu0 %v3220
    %3226 = vmatprep.subr.mxu0 0.0
    %3227 = vmatpush1.xpose.msra.mxu0 0.0
    %3228 = vmatprep.subr.mxu0 0.0
    %3229 = vmatpush1.xpose.msra.mxu0 0.0
    %3230 = vmatprep.subr.mxu0 0.0
    %3231 = vmatpush1.xpose.msra.mxu0 0.0
    %3232 = vmatprep.subr.mxu0 0.0
    %3233 = vmatpush1.xpose.msra.mxu0 0.0
    %3234 = vmatprep.subr.mxu0 0.0
    %3235 = vmatpush1.xpose.msra.mxu0 0.0
    %3236 = vmatprep.subr.mxu0 0.0
    %3237 = vmatpush1.xpose.msra.mxu0 0.0
    %3238 = vmatprep.subr.mxu0 0.0
    %3239 = vmatpush1.xpose.msra.mxu0 0.0
    %3240 = vmatprep.subr.mxu0 0.0
    %3241 = vmatpush1.xpose.msra.mxu0 0.0
    %3242 = vmatprep.subr.mxu0 0.0
    %3243 = vmatpush1.xpose.msra.mxu0 0.0
    %3244 = vmatprep.subr.mxu0 0.0
    %3245 = vmatpush1.xpose.msra.mxu0 0.0
    %3246 = vmatprep.subr.mxu0 0.0
    %3247 = vmatpush1.xpose.msra.mxu0 0.0
    %3248 = vmatprep.subr.mxu0 0.0
    %3249 = vmatpush1.xpose.msra.mxu0 0.0
    %3250 = vmatprep.subr.mxu0 0.0
    %3251 = vmatpush1.xpose.msra.mxu0 0.0
    %3252 = vmatprep.subr.mxu0 0.0
    %3253 = vmatpush1.xpose.msra.mxu0 0.0
    %3254 = vmatprep.subr.mxu0 0.0
    %3255 = vmatpush1.xpose.msra.mxu0 0.0
    %3256 = vmatprep.subr.mxu0 0.0
    %3257 = vmatpush1.xpose.msra.mxu0 0.0
    %3258 = vmatprep.subr.mxu0 0.0
    %3259 = vmatpush1.xpose.msra.mxu0 0.0
    %3260 = vmatprep.subr.mxu0 0.0
    %3261 = vmatpush1.xpose.msra.mxu0 0.0
    %3262 = vmatprep.subr.mxu0 0.0
    %3263 = vmatpush1.xpose.msra.mxu0 0.0
    %3264 = vmatprep.subr.mxu0 0.0
    %3265 = vmatpush1.xpose.msra.mxu0 0.0
    %3266 = vmatprep.subr.mxu0 0.0
    %3267 = vmatpush1.xpose.msra.mxu0 0.0
    %3268 = vmatprep.subr.mxu0 0.0
    %3269 = vmatpush1.xpose.msra.mxu0 0.0
    %3270 = vmatprep.subr.mxu0 0.0
    %3271 = vmatpush1.xpose.msra.mxu0 0.0
    %3272 = vmatprep.subr.mxu0 0.0
    %3273 = vmatpush1.xpose.msra.mxu0 0.0
    %3274 = vmatprep.subr.mxu0 0.0
    %3275 = vmatpush1.xpose.msra.mxu0 0.0
    %3276 = vmatprep.subr.mxu0 0.0
    %3277 = vmatpush1.xpose.msra.mxu0 0.0
    %3278 = vmatprep.subr.mxu0 0.0
    %3279 = vmatpush1.xpose.msra.mxu0 0.0
    %3280 = vmatprep.subr.mxu0 0.0
    %3281 = vmatpush1.xpose.msra.mxu0 0.0
    %3282 = vmatprep.subr.mxu0 0.0
    %3283 = vmatpush1.xpose.msra.mxu0 0.0
    %3284 = vmatprep.subr.mxu0 0.0
    %3285 = vmatpush1.xpose.msra.mxu0 0.0
    %3286 = vmatprep.mubr.f32.mxu0 0.0
    %3287 = vmatmul.mubr.f32.gmra.mrb[0].mxu0 %v3214
    %v3288 = vpop.f32.mrb[0].mxu0
    %v3289 = vadd.f32 0.0, %v3288
    %v3290 = vpop.f32.mrb[0].mxu0
    %3291 = vmatprep.mubr.f32.mxu0 0.0
    %3292 = vmatmul.mubr.f32.gmra.mrb[0].mxu0 %v3216
    %v3293 = vpop.f32.mrb[0].mxu0
    %v3294 = vadd.f32 0.0, %v3293
    %v3295 = vpop.f32.mrb[0].mxu0
    %3296 = vdwg.mxu0
    %3297 = vrot.lane.b32.xlu0 %v2793, 120
    %v3298 = vpop.permute.xlu0 %3297
    %3299 = vrot.lane.b32.xlu0 %v2798, 120
    %v3300 = vpop.permute.xlu0 %3299
    %3301 = vrot.lane.b32.xlu0 %v2793, 88
    %v3302 = vpop.permute.xlu0 %3301
    %3303 = vrot.lane.b32.xlu0 %v2798, 88
    %v3304 = vpop.permute.xlu0 %3303
    %v3305 = vsel %vm262, %v3298, 0
    %v3307 = vsel %vm262, %v3300, 0
    %v3309 = vsel %vm262, %v3302, 0
    %v3311 = vsel %vm262, %v3304, 0
    %3313 = vmatprep.subr.mxu0 0.0
    %3314 = vmatpush1.xpose.msra.mxu0 %v3309
    %3315 = vmatprep.subr.mxu0 0.0
    %3316 = vmatpush1.xpose.msra.mxu0 %v3311
    %3317 = vmatprep.subr.mxu0 0.0
    %3318 = vmatpush1.xpose.msra.mxu0 0.0
    %3319 = vmatprep.subr.mxu0 0.0
    %3320 = vmatpush1.xpose.msra.mxu0 0.0
    %3321 = vmatprep.subr.mxu0 0.0
    %3322 = vmatpush1.xpose.msra.mxu0 0.0
    %3323 = vmatprep.subr.mxu0 0.0
    %3324 = vmatpush1.xpose.msra.mxu0 0.0
    %3325 = vmatprep.subr.mxu0 0.0
    %3326 = vmatpush1.xpose.msra.mxu0 0.0
    %3327 = vmatprep.subr.mxu0 0.0
    %3328 = vmatpush1.xpose.msra.mxu0 0.0
    %3329 = vmatprep.subr.mxu0 0.0
    %3330 = vmatpush1.xpose.msra.mxu0 0.0
    %3331 = vmatprep.subr.mxu0 0.0
    %3332 = vmatpush1.xpose.msra.mxu0 0.0
    %3333 = vmatprep.subr.mxu0 0.0
    %3334 = vmatpush1.xpose.msra.mxu0 0.0
    %3335 = vmatprep.subr.mxu0 0.0
    %3336 = vmatpush1.xpose.msra.mxu0 0.0
    %3337 = vmatprep.subr.mxu0 0.0
    %3338 = vmatpush1.xpose.msra.mxu0 0.0
    %3339 = vmatprep.subr.mxu0 0.0
    %3340 = vmatpush1.xpose.msra.mxu0 0.0
    %3341 = vmatprep.subr.mxu0 0.0
    %3342 = vmatpush1.xpose.msra.mxu0 0.0
    %3343 = vmatprep.subr.mxu0 0.0
    %3344 = vmatpush1.xpose.msra.mxu0 0.0
    %3345 = vmatprep.subr.mxu0 0.0
    %3346 = vmatpush1.xpose.msra.mxu0 0.0
    %3347 = vmatprep.subr.mxu0 0.0
    %3348 = vmatpush1.xpose.msra.mxu0 0.0
    %3349 = vmatprep.subr.mxu0 0.0
    %3350 = vmatpush1.xpose.msra.mxu0 0.0
    %3351 = vmatprep.subr.mxu0 0.0
    %3352 = vmatpush1.xpose.msra.mxu0 0.0
    %3353 = vmatprep.subr.mxu0 0.0
    %3354 = vmatpush1.xpose.msra.mxu0 0.0
    %3355 = vmatprep.subr.mxu0 0.0
    %3356 = vmatpush1.xpose.msra.mxu0 0.0
    %3357 = vmatprep.subr.mxu0 0.0
    %3358 = vmatpush1.xpose.msra.mxu0 0.0
    %3359 = vmatprep.subr.mxu0 0.0
    %3360 = vmatpush1.xpose.msra.mxu0 0.0
    %3361 = vmatprep.subr.mxu0 0.0
    %3362 = vmatpush1.xpose.msra.mxu0 0.0
    %3363 = vmatprep.subr.mxu0 0.0
    %3364 = vmatpush1.xpose.msra.mxu0 0.0
    %3365 = vmatprep.subr.mxu0 0.0
    %3366 = vmatpush1.xpose.msra.mxu0 0.0
    %3367 = vmatprep.subr.mxu0 0.0
    %3368 = vmatpush1.xpose.msra.mxu0 0.0
    %3369 = vmatprep.subr.mxu0 0.0
    %3370 = vmatpush1.xpose.msra.mxu0 0.0
    %3371 = vmatprep.subr.mxu0 0.0
    %3372 = vmatpush1.xpose.msra.mxu0 0.0
    %3373 = vmatprep.subr.mxu0 0.0
    %3374 = vmatpush1.xpose.msra.mxu0 0.0
    %3375 = vmatprep.subr.mxu0 0.0
    %3376 = vmatpush1.xpose.msra.mxu0 0.0
    %3377 = vmatprep.mubr.f32.mxu0 0.0
    %3378 = vmatmul.mubr.f32.gmra.mrb[0].mxu0 %v3305
    %v3379 = vpop.f32.mrb[0].mxu0
    %v3380 = vadd.f32 0.0, %v3379
    %v3381 = vpop.f32.mrb[0].mxu0
    %3382 = vmatprep.mubr.f32.mxu0 0.0
    %3383 = vmatmul.mubr.f32.gmra.mrb[0].mxu0 %v3307
    %v3384 = vpop.f32.mrb[0].mxu0
    %v3385 = vadd.f32 0.0, %v3384
    %v3386 = vpop.f32.mrb[0].mxu0
    %3387 = vdwg.mxu0
    %v3388 = vmul.f32 %v3289, 0.35355338
    %v3389 = vmul.f32 %v3294, 0.35355338
    %v3390 = vmul.f32 %v3380, 0.35355338
    %v3391 = vmul.f32 %v3385, 0.35355338
    %v3392 = vsel %vm439, %v3388, -inf
    %3393 = vmax.xlane.f32.xlu0 %v3392
    %v3394 = vpop.xlane.xlu0 %3393
    %v3395 = vsel %vm439, %v3389, -inf
    %3396 = vmax.xlane.f32.xlu0 %v3395
    %v3397 = vpop.xlane.xlu0 %3396
    %v3398 = vsel %vm439, %v3390, -inf
    %3399 = vmax.xlane.f32.xlu0 %v3398
    %v3400 = vpop.xlane.xlu0 %3399
    %v3401 = vsel %vm439, %v3391, -inf
    %3402 = vmax.xlane.f32.xlu0 %v3401
    %v3403 = vpop.xlane.xlu0 %3402
    %v3404 = vsub.f32 %v3388, %v3394
    %v3405 = vsub.f32 %v3389, %v3397
    %v3406 = vsub.f32 %v3390, %v3400
    %v3407 = vsub.f32 %v3391, %v3403
    %v3408 = vmul.f32 %v3404, 1.442695
    %v3409 = vpow.pop %v3408
    %v3410 = vmul.f32 %v3405, 1.442695
    %v3411 = vpow.pop %v3410
    %v3412 = vmul.f32 %v3406, 1.442695
    %v3413 = vpow.pop %v3412
    %v3414 = vmul.f32 %v3407, 1.442695
    %v3415 = vpow.pop %v3414
    %v3416 = vsel %vm439, %v3409, 0.0
    %3417 = vadd.xlane.f32.xlu0 %v3416
    %v3418 = vpop.xlane.xlu0 %3417
    %v3419 = vsel %vm439, %v3411, 0.0
    %3420 = vadd.xlane.f32.xlu0 %v3419
    %v3421 = vpop.xlane.xlu0 %3420
    %v3422 = vsel %vm439, %v3413, 0.0
    %3423 = vadd.xlane.f32.xlu0 %v3422
    %v3424 = vpop.xlane.xlu0 %3423
    %v3425 = vsel %vm439, %v3415, 0.0
    %3426 = vadd.xlane.f32.xlu0 %v3425
    %v3427 = vpop.xlane.xlu0 %3426
    %v3428 = vrcp.pop %v3418
    %v3429 = vrcp.pop %v3421
    %v3430 = vrcp.pop %v3424
    %v3431 = vrcp.pop %v3427
    %v3432 = vmul.f32 %v3409, %v3428
    %v3433 = vmul.f32 %v3411, %v3429
    %v3434 = vmul.f32 %v3413, %v3430
    %v3435 = vmul.f32 %v3415, %v3431
    %3436 = vrot.lane.b32.xlu0 %v2783, 56
    %v3437 = vpop.permute.xlu0 %3436
    %3438 = vrot.lane.b32.xlu0 %v2788, 56
    %v3439 = vpop.permute.xlu0 %3438
    %v3443 = vsel %vm439, %v3432, 0
    %v3446 = vsel %vm439, %v3433, 0
    %3448 = vmatprep.subr.mxu0 0.0
    %3449 = vmatpush1.msra.mxu0 %v3437
    %3450 = vmatprep.subr.mxu0 0.0
    %3451 = vmatpush1.msra.mxu0 %v3439
    %3452 = vmatprep.subr.mxu0 0.0
    %3453 = vmatpush1.msra.mxu0 0.0
    %3454 = vmatprep.subr.mxu0 0.0
    %3455 = vmatpush1.msra.mxu0 0.0
    %3456 = vmatprep.subr.mxu0 0.0
    %3457 = vmatpush1.msra.mxu0 0.0
    %3458 = vmatprep.subr.mxu0 0.0
    %3459 = vmatpush1.msra.mxu0 0.0
    %3460 = vmatprep.subr.mxu0 0.0
    %3461 = vmatpush1.msra.mxu0 0.0
    %3462 = vmatprep.subr.mxu0 0.0
    %3463 = vmatpush1.msra.mxu0 0.0
    %3464 = vmatprep.subr.mxu0 0.0
    %3465 = vmatpush1.msra.mxu0 0.0
    %3466 = vmatprep.subr.mxu0 0.0
    %3467 = vmatpush1.msra.mxu0 0.0
    %3468 = vmatprep.subr.mxu0 0.0
    %3469 = vmatpush1.msra.mxu0 0.0
    %3470 = vmatprep.subr.mxu0 0.0
    %3471 = vmatpush1.msra.mxu0 0.0
    %3472 = vmatprep.subr.mxu0 0.0
    %3473 = vmatpush1.msra.mxu0 0.0
    %3474 = vmatprep.subr.mxu0 0.0
    %3475 = vmatpush1.msra.mxu0 0.0
    %3476 = vmatprep.subr.mxu0 0.0
    %3477 = vmatpush1.msra.mxu0 0.0
    %3478 = vmatprep.subr.mxu0 0.0
    %3479 = vmatpush1.msra.mxu0 0.0
    %3480 = vmatprep.subr.mxu0 0.0
    %3481 = vmatpush1.msra.mxu0 0.0
    %3482 = vmatprep.subr.mxu0 0.0
    %3483 = vmatpush1.msra.mxu0 0.0
    %3484 = vmatprep.subr.mxu0 0.0
    %3485 = vmatpush1.msra.mxu0 0.0
    %3486 = vmatprep.subr.mxu0 0.0
    %3487 = vmatpush1.msra.mxu0 0.0
    %3488 = vmatprep.subr.mxu0 0.0
    %3489 = vmatpush1.msra.mxu0 0.0
    %3490 = vmatprep.subr.mxu0 0.0
    %3491 = vmatpush1.msra.mxu0 0.0
    %3492 = vmatprep.subr.mxu0 0.0
    %3493 = vmatpush1.msra.mxu0 0.0
    %3494 = vmatprep.subr.mxu0 0.0
    %3495 = vmatpush1.msra.mxu0 0.0
    %3496 = vmatprep.subr.mxu0 0.0
    %3497 = vmatpush1.msra.mxu0 0.0
    %3498 = vmatprep.subr.mxu0 0.0
    %3499 = vmatpush1.msra.mxu0 0.0
    %3500 = vmatprep.subr.mxu0 0.0
    %3501 = vmatpush1.msra.mxu0 0.0
    %3502 = vmatprep.subr.mxu0 0.0
    %3503 = vmatpush1.msra.mxu0 0.0
    %3504 = vmatprep.subr.mxu0 0.0
    %3505 = vmatpush1.msra.mxu0 0.0
    %3506 = vmatprep.subr.mxu0 0.0
    %3507 = vmatpush1.msra.mxu0 0.0
    %3508 = vmatprep.subr.mxu0 0.0
    %3509 = vmatpush1.msra.mxu0 0.0
    %3510 = vmatprep.subr.mxu0 0.0
    %3511 = vmatpush1.msra.mxu0 0.0
    %3512 = vmatprep.mubr.f32.mxu0 0.0
    %3513 = vmatmul.mubr.f32.gmra.mrb[0].mxu0 %v3443
    %v3514 = vpop.f32.mrb[0].mxu0
    %v3515 = vadd.f32 0.0, %v3514
    %v3516 = vpop.f32.mrb[0].mxu0
    %3517 = vmatprep.mubr.f32.mxu0 0.0
    %3518 = vmatmul.mubr.f32.gmra.mrb[0].mxu0 %v3446
    %v3519 = vpop.f32.mrb[0].mxu0
    %v3520 = vadd.f32 0.0, %v3519
    %v3521 = vpop.f32.mrb[0].mxu0
    %3522 = vdwg.mxu0
    %3523 = vrot.lane.b32.xlu0 %v2793, 56
    %v3524 = vpop.permute.xlu0 %3523
    %3525 = vrot.lane.b32.xlu0 %v2798, 56
    %v3526 = vpop.permute.xlu0 %3525
    %v3530 = vsel %vm439, %v3434, 0
    %v3533 = vsel %vm439, %v3435, 0
    %3535 = vmatprep.subr.mxu0 0.0
    %3536 = vmatpush1.msra.mxu0 %v3524
    %3537 = vmatprep.subr.mxu0 0.0
    %3538 = vmatpush1.msra.mxu0 %v3526
    %3539 = vmatprep.subr.mxu0 0.0
    %3540 = vmatpush1.msra.mxu0 0.0
    %3541 = vmatprep.subr.mxu0 0.0
    %3542 = vmatpush1.msra.mxu0 0.0
    %3543 = vmatprep.subr.mxu0 0.0
    %3544 = vmatpush1.msra.mxu0 0.0
    %3545 = vmatprep.subr.mxu0 0.0
    %3546 = vmatpush1.msra.mxu0 0.0
    %3547 = vmatprep.subr.mxu0 0.0
    %3548 = vmatpush1.msra.mxu0 0.0
    %3549 = vmatprep.subr.mxu0 0.0
    %3550 = vmatpush1.msra.mxu0 0.0
    %3551 = vmatprep.subr.mxu0 0.0
    %3552 = vmatpush1.msra.mxu0 0.0
    %3553 = vmatprep.subr.mxu0 0.0
    %3554 = vmatpush1.msra.mxu0 0.0
    %3555 = vmatprep.subr.mxu0 0.0
    %3556 = vmatpush1.msra.mxu0 0.0
    %3557 = vmatprep.subr.mxu0 0.0
    %3558 = vmatpush1.msra.mxu0 0.0
    %3559 = vmatprep.subr.mxu0 0.0
    %3560 = vmatpush1.msra.mxu0 0.0
    %3561 = vmatprep.subr.mxu0 0.0
    %3562 = vmatpush1.msra.mxu0 0.0
    %3563 = vmatprep.subr.mxu0 0.0
    %3564 = vmatpush1.msra.mxu0 0.0
    %3565 = vmatprep.subr.mxu0 0.0
    %3566 = vmatpush1.msra.mxu0 0.0
    %3567 = vmatprep.subr.mxu0 0.0
    %3568 = vmatpush1.msra.mxu0 0.0
    %3569 = vmatprep.subr.mxu0 0.0
    %3570 = vmatpush1.msra.mxu0 0.0
    %3571 = vmatprep.subr.mxu0 0.0
    %3572 = vmatpush1.msra.mxu0 0.0
    %3573 = vmatprep.subr.mxu0 0.0
    %3574 = vmatpush1.msra.mxu0 0.0
    %3575 = vmatprep.subr.mxu0 0.0
    %3576 = vmatpush1.msra.mxu0 0.0
    %3577 = vmatprep.subr.mxu0 0.0
    %3578 = vmatpush1.msra.mxu0 0.0
    %3579 = vmatprep.subr.mxu0 0.0
    %3580 = vmatpush1.msra.mxu0 0.0
    %3581 = vmatprep.subr.mxu0 0.0
    %3582 = vmatpush1.msra.mxu0 0.0
    %3583 = vmatprep.subr.mxu0 0.0
    %3584 = vmatpush1.msra.mxu0 0.0
    %3585 = vmatprep.subr.mxu0 0.0
    %3586 = vmatpush1.msra.mxu0 0.0
    %3587 = vmatprep.subr.mxu0 0.0
    %3588 = vmatpush1.msra.mxu0 0.0
    %3589 = vmatprep.subr.mxu0 0.0
    %3590 = vmatpush1.msra.mxu0 0.0
    %3591 = vmatprep.subr.mxu0 0.0
    %3592 = vmatpush1.msra.mxu0 0.0
    %3593 = vmatprep.subr.mxu0 0.0
    %3594 = vmatpush1.msra.mxu0 0.0
    %3595 = vmatprep.subr.mxu0 0.0
    %3596 = vmatpush1.msra.mxu0 0.0
    %3597 = vmatprep.subr.mxu0 0.0
    %3598 = vmatpush1.msra.mxu0 0.0
    %3599 = vmatprep.mubr.f32.mxu0 0.0
    %3600 = vmatmul.mubr.f32.gmra.mrb[0].mxu0 %v3530
    %v3601 = vpop.f32.mrb[0].mxu0
    %v3602 = vadd.f32 0.0, %v3601
    %v3603 = vpop.f32.mrb[0].mxu0
    %3604 = vmatprep.mubr.f32.mxu0 0.0
    %3605 = vmatmul.mubr.f32.gmra.mrb[0].mxu0 %v3533
    %v3606 = vpop.f32.mrb[0].mxu0
    %v3607 = vadd.f32 0.0, %v3606
    %v3608 = vpop.f32.mrb[0].mxu0
    %3609 = vdwg.mxu0
    %v3611 = vsel %vm262, %v3515, 0
    %v3614 = vsel %vm262, %v3520, 0
    %v3617 = vsel %vm262, %v3602, 0
    %v3620 = vsel %vm262, %v3607, 0
    %3622 = vmatprep.subr.mxu0 0.0
    %3623 = vmatpush1.msra.mxu0 %v2803
    %3624 = vmatprep.subr.mxu0 0.0
    %3625 = vmatpush1.msra.mxu0 0.0
    %3626 = vmatprep.subr.mxu0 0.0
    %3627 = vmatpush1.msra.mxu0 0.0
    %3628 = vmatprep.subr.mxu0 0.0
    %3629 = vmatpush1.msra.mxu0 0.0
    %3630 = vmatprep.subr.mxu0 0.0
    %3631 = vmatpush1.msra.mxu0 0.0
    %3632 = vmatprep.subr.mxu0 0.0
    %3633 = vmatpush1.msra.mxu0 0.0
    %3634 = vmatprep.subr.mxu0 0.0
    %3635 = vmatpush1.msra.mxu0 0.0
    %3636 = vmatprep.subr.mxu0 0.0
    %3637 = vmatpush1.msra.mxu0 0.0
    %3638 = vmatprep.subr.mxu0 0.0
    %3639 = vmatpush1.msra.mxu0 0.0
    %3640 = vmatprep.subr.mxu0 0.0
    %3641 = vmatpush1.msra.mxu0 0.0
    %3642 = vmatprep.subr.mxu0 0.0
    %3643 = vmatpush1.msra.mxu0 0.0
    %3644 = vmatprep.subr.mxu0 0.0
    %3645 = vmatpush1.msra.mxu0 0.0
    %3646 = vmatprep.subr.mxu0 0.0
    %3647 = vmatpush1.msra.mxu0 0.0
    %3648 = vmatprep.subr.mxu0 0.0
    %3649 = vmatpush1.msra.mxu0 0.0
    %3650 = vmatprep.subr.mxu0 0.0
    %3651 = vmatpush1.msra.mxu0 0.0
    %3652 = vmatprep.subr.mxu0 0.0
    %3653 = vmatpush1.msra.mxu0 0.0
    %3654 = vmatprep.subr.mxu0 0.0
    %3655 = vmatpush1.msra.mxu0 0.0
    %3656 = vmatprep.subr.mxu0 0.0
    %3657 = vmatpush1.msra.mxu0 0.0
    %3658 = vmatprep.subr.mxu0 0.0
    %3659 = vmatpush1.msra.mxu0 0.0
    %3660 = vmatprep.subr.mxu0 0.0
    %3661 = vmatpush1.msra.mxu0 0.0
    %3662 = vmatprep.subr.mxu0 0.0
    %3663 = vmatpush1.msra.mxu0 0.0
    %3664 = vmatprep.subr.mxu0 0.0
    %3665 = vmatpush1.msra.mxu0 0.0
    %3666 = vmatprep.subr.mxu0 0.0
    %3667 = vmatpush1.msra.mxu0 0.0
    %3668 = vmatprep.subr.mxu0 0.0
    %3669 = vmatpush1.msra.mxu0 0.0
    %3670 = vmatprep.subr.mxu0 0.0
    %3671 = vmatpush1.msra.mxu0 0.0
    %3672 = vmatprep.subr.mxu0 0.0
    %3673 = vmatpush1.msra.mxu0 0.0
    %3674 = vmatprep.subr.mxu0 0.0
    %3675 = vmatpush1.msra.mxu0 0.0
    %3676 = vmatprep.subr.mxu0 0.0
    %3677 = vmatpush1.msra.mxu0 0.0
    %3678 = vmatprep.subr.mxu0 0.0
    %3679 = vmatpush1.msra.mxu0 0.0
    %3680 = vmatprep.subr.mxu0 0.0
    %3681 = vmatpush1.msra.mxu0 0.0
    %3682 = vmatprep.subr.mxu0 0.0
    %3683 = vmatpush1.msra.mxu0 0.0
    %3684 = vmatprep.subr.mxu0 0.0
    %3685 = vmatpush1.msra.mxu0 0.0
    %3686 = vmatprep.mubr.f32.mxu0 0.0
    %3687 = vmatmul.mubr.f32.gmra.mrb[0].mxu0 %v3611
    %v3688 = vpop.f32.mrb[0].mxu0
    %v3689 = vadd.f32 0.0, %v3688
    %v3690 = vpop.f32.mrb[0].mxu0
    %3691 = vmatprep.mubr.f32.mxu0 0.0
    %3692 = vmatmul.mubr.f32.gmra.mrb[0].mxu0 %v3614
    %v3693 = vpop.f32.mrb[0].mxu0
    %v3694 = vadd.f32 0.0, %v3693
    %v3695 = vpop.f32.mrb[0].mxu0
    %3696 = vmatprep.mubr.f32.mxu0 0.0
    %3697 = vmatmul.mubr.f32.gmra.mrb[0].mxu0 %v3617
    %v3698 = vpop.f32.mrb[0].mxu0
    %v3699 = vadd.f32 0.0, %v3698
    %v3700 = vpop.f32.mrb[0].mxu0
    %3701 = vmatprep.mubr.f32.mxu0 0.0
    %3702 = vmatmul.mubr.f32.gmra.mrb[0].mxu0 %v3620
    %v3703 = vpop.f32.mrb[0].mxu0
    %v3704 = vadd.f32 0.0, %v3703
    %v3705 = vpop.f32.mrb[0].mxu0
    %3706 = vdwg.mxu0
    %v3708 = vsel %vm262, %v3111, 0
    %v3711 = vsel %vm262, %v3116, 0
    %v3714 = vsel %vm262, %v3198, 0
    %v3717 = vsel %vm262, %v3203, 0
    %3719 = vmatprep.subr.mxu0 0.0
    %3720 = vmatpush1.msra.mxu0 %v2802
    %3721 = vmatprep.subr.mxu0 0.0
    %3722 = vmatpush1.msra.mxu0 0.0
    %3723 = vmatprep.subr.mxu0 0.0
    %3724 = vmatpush1.msra.mxu0 0.0
    %3725 = vmatprep.subr.mxu0 0.0
    %3726 = vmatpush1.msra.mxu0 0.0
    %3727 = vmatprep.subr.mxu0 0.0
    %3728 = vmatpush1.msra.mxu0 0.0
    %3729 = vmatprep.subr.mxu0 0.0
    %3730 = vmatpush1.msra.mxu0 0.0
    %3731 = vmatprep.subr.mxu0 0.0
    %3732 = vmatpush1.msra.mxu0 0.0
    %3733 = vmatprep.subr.mxu0 0.0
    %3734 = vmatpush1.msra.mxu0 0.0
    %3735 = vmatprep.subr.mxu0 0.0
    %3736 = vmatpush1.msra.mxu0 0.0
    %3737 = vmatprep.subr.mxu0 0.0
    %3738 = vmatpush1.msra.mxu0 0.0
    %3739 = vmatprep.subr.mxu0 0.0
    %3740 = vmatpush1.msra.mxu0 0.0
    %3741 = vmatprep.subr.mxu0 0.0
    %3742 = vmatpush1.msra.mxu0 0.0
    %3743 = vmatprep.subr.mxu0 0.0
    %3744 = vmatpush1.msra.mxu0 0.0
    %3745 = vmatprep.subr.mxu0 0.0
    %3746 = vmatpush1.msra.mxu0 0.0
    %3747 = vmatprep.subr.mxu0 0.0
    %3748 = vmatpush1.msra.mxu0 0.0
    %3749 = vmatprep.subr.mxu0 0.0
    %3750 = vmatpush1.msra.mxu0 0.0
    %3751 = vmatprep.subr.mxu0 0.0
    %3752 = vmatpush1.msra.mxu0 0.0
    %3753 = vmatprep.subr.mxu0 0.0
    %3754 = vmatpush1.msra.mxu0 0.0
    %3755 = vmatprep.subr.mxu0 0.0
    %3756 = vmatpush1.msra.mxu0 0.0
    %3757 = vmatprep.subr.mxu0 0.0
    %3758 = vmatpush1.msra.mxu0 0.0
    %3759 = vmatprep.subr.mxu0 0.0
    %3760 = vmatpush1.msra.mxu0 0.0
    %3761 = vmatprep.subr.mxu0 0.0
    %3762 = vmatpush1.msra.mxu0 0.0
    %3763 = vmatprep.subr.mxu0 0.0
    %3764 = vmatpush1.msra.mxu0 0.0
    %3765 = vmatprep.subr.mxu0 0.0
    %3766 = vmatpush1.msra.mxu0 0.0
    %3767 = vmatprep.subr.mxu0 0.0
    %3768 = vmatpush1.msra.mxu0 0.0
    %3769 = vmatprep.subr.mxu0 0.0
    %3770 = vmatpush1.msra.mxu0 0.0
    %3771 = vmatprep.subr.mxu0 0.0
    %3772 = vmatpush1.msra.mxu0 0.0
    %3773 = vmatprep.subr.mxu0 0.0
    %3774 = vmatpush1.msra.mxu0 0.0
    %3775 = vmatprep.subr.mxu0 0.0
    %3776 = vmatpush1.msra.mxu0 0.0
    %3777 = vmatprep.subr.mxu0 0.0
    %3778 = vmatpush1.msra.mxu0 0.0
    %3779 = vmatprep.subr.mxu0 0.0
    %3780 = vmatpush1.msra.mxu0 0.0
    %3781 = vmatprep.subr.mxu0 0.0
    %3782 = vmatpush1.msra.mxu0 0.0
    %3783 = vmatprep.mubr.f32.mxu0 0.0
    %3784 = vmatmul.mubr.f32.gmra.mrb[0].mxu0 %v3708
    %v3785 = vpop.f32.mrb[0].mxu0
    %v3786 = vadd.f32 %v3689, %v3785
    %v3787 = vpop.f32.mrb[0].mxu0
    %3788 = vmatprep.mubr.f32.mxu0 0.0
    %3789 = vmatmul.mubr.f32.gmra.mrb[0].mxu0 %v3711
    %v3790 = vpop.f32.mrb[0].mxu0
    %v3791 = vadd.f32 %v3694, %v3790
    %v3792 = vpop.f32.mrb[0].mxu0
    %3793 = vmatprep.mubr.f32.mxu0 0.0
    %3794 = vmatmul.mubr.f32.gmra.mrb[0].mxu0 %v3714
    %v3795 = vpop.f32.mrb[0].mxu0
    %v3796 = vadd.f32 %v3699, %v3795
    %v3797 = vpop.f32.mrb[0].mxu0
    %3798 = vmatprep.mubr.f32.mxu0 0.0
    %3799 = vmatmul.mubr.f32.gmra.mrb[0].mxu0 %v3717
    %v3800 = vpop.f32.mrb[0].mxu0
    %v3801 = vadd.f32 %v3704, %v3800
    %v3802 = vpop.f32.mrb[0].mxu0
    %3803 = vdwg.mxu0
    %3804 = vrot.lane.b32.xlu0 %v2783, 112
    %v3805 = vpop.permute.xlu0 %3804
    %3806 = vrot.lane.b32.xlu0 %v2788, 112
    %v3807 = vpop.permute.xlu0 %3806
    %3808 = vrot.lane.b32.xlu0 %v2783, 80
    %v3809 = vpop.permute.xlu0 %3808
    %3810 = vrot.lane.b32.xlu0 %v2788, 80
    %v3811 = vpop.permute.xlu0 %3810
    %v3812 = vsel %vm262, %v3805, 0
    %v3814 = vsel %vm262, %v3807, 0
    %v3816 = vsel %vm262, %v3809, 0
    %v3818 = vsel %vm262, %v3811, 0
    %3820 = vmatprep.subr.mxu0 0.0
    %3821 = vmatpush1.xpose.msra.mxu0 %v3816
    %3822 = vmatprep.subr.mxu0 0.0
    %3823 = vmatpush1.xpose.msra.mxu0 %v3818
    %3824 = vmatprep.subr.mxu0 0.0
    %3825 = vmatpush1.xpose.msra.mxu0 0.0
    %3826 = vmatprep.subr.mxu0 0.0
    %3827 = vmatpush1.xpose.msra.mxu0 0.0
    %3828 = vmatprep.subr.mxu0 0.0
    %3829 = vmatpush1.xpose.msra.mxu0 0.0
    %3830 = vmatprep.subr.mxu0 0.0
    %3831 = vmatpush1.xpose.msra.mxu0 0.0
    %3832 = vmatprep.subr.mxu0 0.0
    %3833 = vmatpush1.xpose.msra.mxu0 0.0
    %3834 = vmatprep.subr.mxu0 0.0
    %3835 = vmatpush1.xpose.msra.mxu0 0.0
    %3836 = vmatprep.subr.mxu0 0.0
    %3837 = vmatpush1.xpose.msra.mxu0 0.0
    %3838 = vmatprep.subr.mxu0 0.0
    %3839 = vmatpush1.xpose.msra.mxu0 0.0
    %3840 = vmatprep.subr.mxu0 0.0
    %3841 = vmatpush1.xpose.msra.mxu0 0.0
    %3842 = vmatprep.subr.mxu0 0.0
    %3843 = vmatpush1.xpose.msra.mxu0 0.0
    %3844 = vmatprep.subr.mxu0 0.0
    %3845 = vmatpush1.xpose.msra.mxu0 0.0
    %3846 = vmatprep.subr.mxu0 0.0
    %3847 = vmatpush1.xpose.msra.mxu0 0.0
    %3848 = vmatprep.subr.mxu0 0.0
    %3849 = vmatpush1.xpose.msra.mxu0 0.0
    %3850 = vmatprep.subr.mxu0 0.0
    %3851 = vmatpush1.xpose.msra.mxu0 0.0
    %3852 = vmatprep.subr.mxu0 0.0
    %3853 = vmatpush1.xpose.msra.mxu0 0.0
    %3854 = vmatprep.subr.mxu0 0.0
    %3855 = vmatpush1.xpose.msra.mxu0 0.0
    %3856 = vmatprep.subr.mxu0 0.0
    %3857 = vmatpush1.xpose.msra.mxu0 0.0
    %3858 = vmatprep.subr.mxu0 0.0
    %3859 = vmatpush1.xpose.msra.mxu0 0.0
    %3860 = vmatprep.subr.mxu0 0.0
    %3861 = vmatpush1.xpose.msra.mxu0 0.0
    %3862 = vmatprep.subr.mxu0 0.0
    %3863 = vmatpush1.xpose.msra.mxu0 0.0
    %3864 = vmatprep.subr.mxu0 0.0
    %3865 = vmatpush1.xpose.msra.mxu0 0.0
    %3866 = vmatprep.subr.mxu0 0.0
    %3867 = vmatpush1.xpose.msra.mxu0 0.0
    %3868 = vmatprep.subr.mxu0 0.0
    %3869 = vmatpush1.xpose.msra.mxu0 0.0
    %3870 = vmatprep.subr.mxu0 0.0
    %3871 = vmatpush1.xpose.msra.mxu0 0.0
    %3872 = vmatprep.subr.mxu0 0.0
    %3873 = vmatpush1.xpose.msra.mxu0 0.0
    %3874 = vmatprep.subr.mxu0 0.0
    %3875 = vmatpush1.xpose.msra.mxu0 0.0
    %3876 = vmatprep.subr.mxu0 0.0
    %3877 = vmatpush1.xpose.msra.mxu0 0.0
    %3878 = vmatprep.subr.mxu0 0.0
    %3879 = vmatpush1.xpose.msra.mxu0 0.0
    %3880 = vmatprep.subr.mxu0 0.0
    %3881 = vmatpush1.xpose.msra.mxu0 0.0
    %3882 = vmatprep.subr.mxu0 0.0
    %3883 = vmatpush1.xpose.msra.mxu0 0.0
    %3884 = vmatprep.mubr.f32.mxu0 0.0
    %3885 = vmatmul.mubr.f32.gmra.mrb[0].mxu0 %v3812
    %v3886 = vpop.f32.mrb[0].mxu0
    %v3887 = vadd.f32 0.0, %v3886
    %v3888 = vpop.f32.mrb[0].mxu0
    %3889 = vmatprep.mubr.f32.mxu0 0.0
    %3890 = vmatmul.mubr.f32.gmra.mrb[0].mxu0 %v3814
    %v3891 = vpop.f32.mrb[0].mxu0
    %v3892 = vadd.f32 0.0, %v3891
    %v3893 = vpop.f32.mrb[0].mxu0
    %3894 = vdwg.mxu0
    %3895 = vrot.lane.b32.xlu0 %v2793, 112
    %v3896 = vpop.permute.xlu0 %3895
    %3897 = vrot.lane.b32.xlu0 %v2798, 112
    %v3898 = vpop.permute.xlu0 %3897
    %3899 = vrot.lane.b32.xlu0 %v2793, 80
    %v3900 = vpop.permute.xlu0 %3899
    %3901 = vrot.lane.b32.xlu0 %v2798, 80
    %v3902 = vpop.permute.xlu0 %3901
    %v3903 = vsel %vm262, %v3896, 0
    %v3905 = vsel %vm262, %v3898, 0
    %v3907 = vsel %vm262, %v3900, 0
    %v3909 = vsel %vm262, %v3902, 0
    %3911 = vmatprep.subr.mxu0 0.0
    %3912 = vmatpush1.xpose.msra.mxu0 %v3907
    %3913 = vmatprep.subr.mxu0 0.0
    %3914 = vmatpush1.xpose.msra.mxu0 %v3909
    %3915 = vmatprep.subr.mxu0 0.0
    %3916 = vmatpush1.xpose.msra.mxu0 0.0
    %3917 = vmatprep.subr.mxu0 0.0
    %3918 = vmatpush1.xpose.msra.mxu0 0.0
    %3919 = vmatprep.subr.mxu0 0.0
    %3920 = vmatpush1.xpose.msra.mxu0 0.0
    %3921 = vmatprep.subr.mxu0 0.0
    %3922 = vmatpush1.xpose.msra.mxu0 0.0
    %3923 = vmatprep.subr.mxu0 0.0
    %3924 = vmatpush1.xpose.msra.mxu0 0.0
    %3925 = vmatprep.subr.mxu0 0.0
    %3926 = vmatpush1.xpose.msra.mxu0 0.0
    %3927 = vmatprep.subr.mxu0 0.0
    %3928 = vmatpush1.xpose.msra.mxu0 0.0
    %3929 = vmatprep.subr.mxu0 0.0
    %3930 = vmatpush1.xpose.msra.mxu0 0.0
    %3931 = vmatprep.subr.mxu0 0.0
    %3932 = vmatpush1.xpose.msra.mxu0 0.0
    %3933 = vmatprep.subr.mxu0 0.0
    %3934 = vmatpush1.xpose.msra.mxu0 0.0
    %3935 = vmatprep.subr.mxu0 0.0
    %3936 = vmatpush1.xpose.msra.mxu0 0.0
    %3937 = vmatprep.subr.mxu0 0.0
    %3938 = vmatpush1.xpose.msra.mxu0 0.0
    %3939 = vmatprep.subr.mxu0 0.0
    %3940 = vmatpush1.xpose.msra.mxu0 0.0
    %3941 = vmatprep.subr.mxu0 0.0
    %3942 = vmatpush1.xpose.msra.mxu0 0.0
    %3943 = vmatprep.subr.mxu0 0.0
    %3944 = vmatpush1.xpose.msra.mxu0 0.0
    %3945 = vmatprep.subr.mxu0 0.0
    %3946 = vmatpush1.xpose.msra.mxu0 0.0
    %3947 = vmatprep.subr.mxu0 0.0
    %3948 = vmatpush1.xpose.msra.mxu0 0.0
    %3949 = vmatprep.subr.mxu0 0.0
    %3950 = vmatpush1.xpose.msra.mxu0 0.0
    %3951 = vmatprep.subr.mxu0 0.0
    %3952 = vmatpush1.xpose.msra.mxu0 0.0
    %3953 = vmatprep.subr.mxu0 0.0
    %3954 = vmatpush1.xpose.msra.mxu0 0.0
    %3955 = vmatprep.subr.mxu0 0.0
    %3956 = vmatpush1.xpose.msra.mxu0 0.0
    %3957 = vmatprep.subr.mxu0 0.0
    %3958 = vmatpush1.xpose.msra.mxu0 0.0
    %3959 = vmatprep.subr.mxu0 0.0
    %3960 = vmatpush1.xpose.msra.mxu0 0.0
    %3961 = vmatprep.subr.mxu0 0.0
    %3962 = vmatpush1.xpose.msra.mxu0 0.0
    %3963 = vmatprep.subr.mxu0 0.0
    %3964 = vmatpush1.xpose.msra.mxu0 0.0
    %3965 = vmatprep.subr.mxu0 0.0
    %3966 = vmatpush1.xpose.msra.mxu0 0.0
    %3967 = vmatprep.subr.mxu0 0.0
    %3968 = vmatpush1.xpose.msra.mxu0 0.0
    %3969 = vmatprep.subr.mxu0 0.0
    %3970 = vmatpush1.xpose.msra.mxu0 0.0
    %3971 = vmatprep.subr.mxu0 0.0
    %3972 = vmatpush1.xpose.msra.mxu0 0.0
    %3973 = vmatprep.subr.mxu0 0.0
    %3974 = vmatpush1.xpose.msra.mxu0 0.0
    %3975 = vmatprep.mubr.f32.mxu0 0.0
    %3976 = vmatmul.mubr.f32.gmra.mrb[0].mxu0 %v3903
    %v3977 = vpop.f32.mrb[0].mxu0
    %v3978 = vadd.f32 0.0, %v3977
    %v3979 = vpop.f32.mrb[0].mxu0
    %3980 = vmatprep.mubr.f32.mxu0 0.0
    %3981 = vmatmul.mubr.f32.gmra.mrb[0].mxu0 %v3905
    %v3982 = vpop.f32.mrb[0].mxu0
    %v3983 = vadd.f32 0.0, %v3982
    %v3984 = vpop.f32.mrb[0].mxu0
    %3985 = vdwg.mxu0
    %v3986 = vmul.f32 %v3887, 0.35355338
    %v3987 = vmul.f32 %v3892, 0.35355338
    %v3988 = vmul.f32 %v3978, 0.35355338
    %v3989 = vmul.f32 %v3983, 0.35355338
    %v3990 = vsel %vm439, %v3986, -inf
    %3991 = vmax.xlane.f32.xlu0 %v3990
    %v3992 = vpop.xlane.xlu0 %3991
    %v3993 = vsel %vm439, %v3987, -inf
    %3994 = vmax.xlane.f32.xlu0 %v3993
    %v3995 = vpop.xlane.xlu0 %3994
    %v3996 = vsel %vm439, %v3988, -inf
    %3997 = vmax.xlane.f32.xlu0 %v3996
    %v3998 = vpop.xlane.xlu0 %3997
    %v3999 = vsel %vm439, %v3989, -inf
    %4000 = vmax.xlane.f32.xlu0 %v3999
    %v4001 = vpop.xlane.xlu0 %4000
    %v4002 = vsub.f32 %v3986, %v3992
    %v4003 = vsub.f32 %v3987, %v3995
    %v4004 = vsub.f32 %v3988, %v3998
    %v4005 = vsub.f32 %v3989, %v4001
    %v4006 = vmul.f32 %v4002, 1.442695
    %v4007 = vpow.pop %v4006
    %v4008 = vmul.f32 %v4003, 1.442695
    %v4009 = vpow.pop %v4008
    %v4010 = vmul.f32 %v4004, 1.442695
    %v4011 = vpow.pop %v4010
    %v4012 = vmul.f32 %v4005, 1.442695
    %v4013 = vpow.pop %v4012
    %v4014 = vsel %vm439, %v4007, 0.0
    %4015 = vadd.xlane.f32.xlu0 %v4014
    %v4016 = vpop.xlane.xlu0 %4015
    %v4017 = vsel %vm439, %v4009, 0.0
    %4018 = vadd.xlane.f32.xlu0 %v4017
    %v4019 = vpop.xlane.xlu0 %4018
    %v4020 = vsel %vm439, %v4011, 0.0
    %4021 = vadd.xlane.f32.xlu0 %v4020
    %v4022 = vpop.xlane.xlu0 %4021
    %v4023 = vsel %vm439, %v4013, 0.0
    %4024 = vadd.xlane.f32.xlu0 %v4023
    %v4025 = vpop.xlane.xlu0 %4024
    %v4026 = vrcp.pop %v4016
    %v4027 = vrcp.pop %v4019
    %v4028 = vrcp.pop %v4022
    %v4029 = vrcp.pop %v4025
    %v4030 = vmul.f32 %v4007, %v4026
    %v4031 = vmul.f32 %v4009, %v4027
    %v4032 = vmul.f32 %v4011, %v4028
    %v4033 = vmul.f32 %v4013, %v4029
    %4034 = vrot.lane.b32.xlu0 %v2783, 48
    %v4035 = vpop.permute.xlu0 %4034
    %4036 = vrot.lane.b32.xlu0 %v2788, 48
    %v4037 = vpop.permute.xlu0 %4036
    %v4041 = vsel %vm439, %v4030, 0
    %v4044 = vsel %vm439, %v4031, 0
    %4046 = vmatprep.subr.mxu0 0.0
    %4047 = vmatpush1.msra.mxu0 %v4035
    %4048 = vmatprep.subr.mxu0 0.0
    %4049 = vmatpush1.msra.mxu0 %v4037
    %4050 = vmatprep.subr.mxu0 0.0
    %4051 = vmatpush1.msra.mxu0 0.0
    %4052 = vmatprep.subr.mxu0 0.0
    %4053 = vmatpush1.msra.mxu0 0.0
    %4054 = vmatprep.subr.mxu0 0.0
    %4055 = vmatpush1.msra.mxu0 0.0
    %4056 = vmatprep.subr.mxu0 0.0
    %4057 = vmatpush1.msra.mxu0 0.0
    %4058 = vmatprep.subr.mxu0 0.0
    %4059 = vmatpush1.msra.mxu0 0.0
    %4060 = vmatprep.subr.mxu0 0.0
    %4061 = vmatpush1.msra.mxu0 0.0
    %4062 = vmatprep.subr.mxu0 0.0
    %4063 = vmatpush1.msra.mxu0 0.0
    %4064 = vmatprep.subr.mxu0 0.0
    %4065 = vmatpush1.msra.mxu0 0.0
    %4066 = vmatprep.subr.mxu0 0.0
    %4067 = vmatpush1.msra.mxu0 0.0
    %4068 = vmatprep.subr.mxu0 0.0
    %4069 = vmatpush1.msra.mxu0 0.0
    %4070 = vmatprep.subr.mxu0 0.0
    %4071 = vmatpush1.msra.mxu0 0.0
    %4072 = vmatprep.subr.mxu0 0.0
    %4073 = vmatpush1.msra.mxu0 0.0
    %4074 = vmatprep.subr.mxu0 0.0
    %4075 = vmatpush1.msra.mxu0 0.0
    %4076 = vmatprep.subr.mxu0 0.0
    %4077 = vmatpush1.msra.mxu0 0.0
    %4078 = vmatprep.subr.mxu0 0.0
    %4079 = vmatpush1.msra.mxu0 0.0
    %4080 = vmatprep.subr.mxu0 0.0
    %4081 = vmatpush1.msra.mxu0 0.0
    %4082 = vmatprep.subr.mxu0 0.0
    %4083 = vmatpush1.msra.mxu0 0.0
    %4084 = vmatprep.subr.mxu0 0.0
    %4085 = vmatpush1.msra.mxu0 0.0
    %4086 = vmatprep.subr.mxu0 0.0
    %4087 = vmatpush1.msra.mxu0 0.0
    %4088 = vmatprep.subr.mxu0 0.0
    %4089 = vmatpush1.msra.mxu0 0.0
    %4090 = vmatprep.subr.mxu0 0.0
    %4091 = vmatpush1.msra.mxu0 0.0
    %4092 = vmatprep.subr.mxu0 0.0
    %4093 = vmatpush1.msra.mxu0 0.0
    %4094 = vmatprep.subr.mxu0 0.0
    %4095 = vmatpush1.msra.mxu0 0.0
    %4096 = vmatprep.subr.mxu0 0.0
    %4097 = vmatpush1.msra.mxu0 0.0
    %4098 = vmatprep.subr.mxu0 0.0
    %4099 = vmatpush1.msra.mxu0 0.0
    %4100 = vmatprep.subr.mxu0 0.0
    %4101 = vmatpush1.msra.mxu0 0.0
    %4102 = vmatprep.subr.mxu0 0.0
    %4103 = vmatpush1.msra.mxu0 0.0
    %4104 = vmatprep.subr.mxu0 0.0
    %4105 = vmatpush1.msra.mxu0 0.0
    %4106 = vmatprep.subr.mxu0 0.0
    %4107 = vmatpush1.msra.mxu0 0.0
    %4108 = vmatprep.subr.mxu0 0.0
    %4109 = vmatpush1.msra.mxu0 0.0
    %4110 = vmatprep.mubr.f32.mxu0 0.0
    %4111 = vmatmul.mubr.f32.gmra.mrb[0].mxu0 %v4041
    %v4112 = vpop.f32.mrb[0].mxu0
    %v4113 = vadd.f32 0.0, %v4112
    %v4114 = vpop.f32.mrb[0].mxu0
    %4115 = vmatprep.mubr.f32.mxu0 0.0
    %4116 = vmatmul.mubr.f32.gmra.mrb[0].mxu0 %v4044
    %v4117 = vpop.f32.mrb[0].mxu0
    %v4118 = vadd.f32 0.0, %v4117
    %v4119 = vpop.f32.mrb[0].mxu0
    %4120 = vdwg.mxu0
    %4121 = vrot.lane.b32.xlu0 %v2793, 48
    %v4122 = vpop.permute.xlu0 %4121
    %4123 = vrot.lane.b32.xlu0 %v2798, 48
    %v4124 = vpop.permute.xlu0 %4123
    %v4128 = vsel %vm439, %v4032, 0
    %v4131 = vsel %vm439, %v4033, 0
    %4133 = vmatprep.subr.mxu0 0.0
    %4134 = vmatpush1.msra.mxu0 %v4122
    %4135 = vmatprep.subr.mxu0 0.0
    %4136 = vmatpush1.msra.mxu0 %v4124
    %4137 = vmatprep.subr.mxu0 0.0
    %4138 = vmatpush1.msra.mxu0 0.0
    %4139 = vmatprep.subr.mxu0 0.0
    %4140 = vmatpush1.msra.mxu0 0.0
    %4141 = vmatprep.subr.mxu0 0.0
    %4142 = vmatpush1.msra.mxu0 0.0
    %4143 = vmatprep.subr.mxu0 0.0
    %4144 = vmatpush1.msra.mxu0 0.0
    %4145 = vmatprep.subr.mxu0 0.0
    %4146 = vmatpush1.msra.mxu0 0.0
    %4147 = vmatprep.subr.mxu0 0.0
    %4148 = vmatpush1.msra.mxu0 0.0
    %4149 = vmatprep.subr.mxu0 0.0
    %4150 = vmatpush1.msra.mxu0 0.0
    %4151 = vmatprep.subr.mxu0 0.0
    %4152 = vmatpush1.msra.mxu0 0.0
    %4153 = vmatprep.subr.mxu0 0.0
    %4154 = vmatpush1.msra.mxu0 0.0
    %4155 = vmatprep.subr.mxu0 0.0
    %4156 = vmatpush1.msra.mxu0 0.0
    %4157 = vmatprep.subr.mxu0 0.0
    %4158 = vmatpush1.msra.mxu0 0.0
    %4159 = vmatprep.subr.mxu0 0.0
    %4160 = vmatpush1.msra.mxu0 0.0
    %4161 = vmatprep.subr.mxu0 0.0
    %4162 = vmatpush1.msra.mxu0 0.0
    %4163 = vmatprep.subr.mxu0 0.0
    %4164 = vmatpush1.msra.mxu0 0.0
    %4165 = vmatprep.subr.mxu0 0.0
    %4166 = vmatpush1.msra.mxu0 0.0
    %4167 = vmatprep.subr.mxu0 0.0
    %4168 = vmatpush1.msra.mxu0 0.0
    %4169 = vmatprep.subr.mxu0 0.0
    %4170 = vmatpush1.msra.mxu0 0.0
    %4171 = vmatprep.subr.mxu0 0.0
    %4172 = vmatpush1.msra.mxu0 0.0
    %4173 = vmatprep.subr.mxu0 0.0
    %4174 = vmatpush1.msra.mxu0 0.0
    %4175 = vmatprep.subr.mxu0 0.0
    %4176 = vmatpush1.msra.mxu0 0.0
    %4177 = vmatprep.subr.mxu0 0.0
    %4178 = vmatpush1.msra.mxu0 0.0
    %4179 = vmatprep.subr.mxu0 0.0
    %4180 = vmatpush1.msra.mxu0 0.0
    %4181 = vmatprep.subr.mxu0 0.0
    %4182 = vmatpush1.msra.mxu0 0.0
    %4183 = vmatprep.subr.mxu0 0.0
    %4184 = vmatpush1.msra.mxu0 0.0
    %4185 = vmatprep.subr.mxu0 0.0
    %4186 = vmatpush1.msra.mxu0 0.0
    %4187 = vmatprep.subr.mxu0 0.0
    %4188 = vmatpush1.msra.mxu0 0.0
    %4189 = vmatprep.subr.mxu0 0.0
    %4190 = vmatpush1.msra.mxu0 0.0
    %4191 = vmatprep.subr.mxu0 0.0
    %4192 = vmatpush1.msra.mxu0 0.0
    %4193 = vmatprep.subr.mxu0 0.0
    %4194 = vmatpush1.msra.mxu0 0.0
    %4195 = vmatprep.subr.mxu0 0.0
    %4196 = vmatpush1.msra.mxu0 0.0
    %4197 = vmatprep.mubr.f32.mxu0 0.0
    %4198 = vmatmul.mubr.f32.gmra.mrb[0].mxu0 %v4128
    %v4199 = vpop.f32.mrb[0].mxu0
    %v4200 = vadd.f32 0.0, %v4199
    %v4201 = vpop.f32.mrb[0].mxu0
    %4202 = vmatprep.mubr.f32.mxu0 0.0
    %4203 = vmatmul.mubr.f32.gmra.mrb[0].mxu0 %v4131
    %v4204 = vpop.f32.mrb[0].mxu0
    %v4205 = vadd.f32 0.0, %v4204
    %v4206 = vpop.f32.mrb[0].mxu0
    %4207 = vdwg.mxu0
    %v4209 = vsel %vm262, %v4113, 0
    %v4212 = vsel %vm262, %v4118, 0
    %v4215 = vsel %vm262, %v4200, 0
    %v4218 = vsel %vm262, %v4205, 0
    %4220 = vmatprep.subr.mxu0 0.0
    %4221 = vmatpush1.msra.mxu0 %v2804
    %4222 = vmatprep.subr.mxu0 0.0
    %4223 = vmatpush1.msra.mxu0 0.0
    %4224 = vmatprep.subr.mxu0 0.0
    %4225 = vmatpush1.msra.mxu0 0.0
    %4226 = vmatprep.subr.mxu0 0.0
    %4227 = vmatpush1.msra.mxu0 0.0
    %4228 = vmatprep.subr.mxu0 0.0
    %4229 = vmatpush1.msra.mxu0 0.0
    %4230 = vmatprep.subr.mxu0 0.0
    %4231 = vmatpush1.msra.mxu0 0.0
    %4232 = vmatprep.subr.mxu0 0.0
    %4233 = vmatpush1.msra.mxu0 0.0
    %4234 = vmatprep.subr.mxu0 0.0
    %4235 = vmatpush1.msra.mxu0 0.0
    %4236 = vmatprep.subr.mxu0 0.0
    %4237 = vmatpush1.msra.mxu0 0.0
    %4238 = vmatprep.subr.mxu0 0.0
    %4239 = vmatpush1.msra.mxu0 0.0
    %4240 = vmatprep.subr.mxu0 0.0
    %4241 = vmatpush1.msra.mxu0 0.0
    %4242 = vmatprep.subr.mxu0 0.0
    %4243 = vmatpush1.msra.mxu0 0.0
    %4244 = vmatprep.subr.mxu0 0.0
    %4245 = vmatpush1.msra.mxu0 0.0
    %4246 = vmatprep.subr.mxu0 0.0
    %4247 = vmatpush1.msra.mxu0 0.0
    %4248 = vmatprep.subr.mxu0 0.0
    %4249 = vmatpush1.msra.mxu0 0.0
    %4250 = vmatprep.subr.mxu0 0.0
    %4251 = vmatpush1.msra.mxu0 0.0
    %4252 = vmatprep.subr.mxu0 0.0
    %4253 = vmatpush1.msra.mxu0 0.0
    %4254 = vmatprep.subr.mxu0 0.0
    %4255 = vmatpush1.msra.mxu0 0.0
    %4256 = vmatprep.subr.mxu0 0.0
    %4257 = vmatpush1.msra.mxu0 0.0
    %4258 = vmatprep.subr.mxu0 0.0
    %4259 = vmatpush1.msra.mxu0 0.0
    %4260 = vmatprep.subr.mxu0 0.0
    %4261 = vmatpush1.msra.mxu0 0.0
    %4262 = vmatprep.subr.mxu0 0.0
    %4263 = vmatpush1.msra.mxu0 0.0
    %4264 = vmatprep.subr.mxu0 0.0
    %4265 = vmatpush1.msra.mxu0 0.0
    %4266 = vmatprep.subr.mxu0 0.0
    %4267 = vmatpush1.msra.mxu0 0.0
    %4268 = vmatprep.subr.mxu0 0.0
    %4269 = vmatpush1.msra.mxu0 0.0
    %4270 = vmatprep.subr.mxu0 0.0
    %4271 = vmatpush1.msra.mxu0 0.0
    %4272 = vmatprep.subr.mxu0 0.0
    %4273 = vmatpush1.msra.mxu0 0.0
    %4274 = vmatprep.subr.mxu0 0.0
    %4275 = vmatpush1.msra.mxu0 0.0
    %4276 = vmatprep.subr.mxu0 0.0
    %4277 = vmatpush1.msra.mxu0 0.0
    %4278 = vmatprep.subr.mxu0 0.0
    %4279 = vmatpush1.msra.mxu0 0.0
    %4280 = vmatprep.subr.mxu0 0.0
    %4281 = vmatpush1.msra.mxu0 0.0
    %4282 = vmatprep.subr.mxu0 0.0
    %4283 = vmatpush1.msra.mxu0 0.0
    %4284 = vmatprep.mubr.f32.mxu0 0.0
    %4285 = vmatmul.mubr.f32.gmra.mrb[0].mxu0 %v4209
    %v4286 = vpop.f32.mrb[0].mxu0
    %v4287 = vadd.f32 0.0, %v4286
    %v4288 = vpop.f32.mrb[0].mxu0
    %4289 = vmatprep.mubr.f32.mxu0 0.0
    %4290 = vmatmul.mubr.f32.gmra.mrb[0].mxu0 %v4212
    %v4291 = vpop.f32.mrb[0].mxu0
    %v4292 = vadd.f32 0.0, %v4291
    %v4293 = vpop.f32.mrb[0].mxu0
    %4294 = vmatprep.mubr.f32.mxu0 0.0
    %4295 = vmatmul.mubr.f32.gmra.mrb[0].mxu0 %v4215
    %v4296 = vpop.f32.mrb[0].mxu0
    %v4297 = vadd.f32 0.0, %v4296
    %v4298 = vpop.f32.mrb[0].mxu0
    %4299 = vmatprep.mubr.f32.mxu0 0.0
    %4300 = vmatmul.mubr.f32.gmra.mrb[0].mxu0 %v4218
    %v4301 = vpop.f32.mrb[0].mxu0
    %v4302 = vadd.f32 0.0, %v4301
    %v4303 = vpop.f32.mrb[0].mxu0
    %4304 = vdwg.mxu0
    %v4305 = vadd.f32 %v3786, %v4287
    %v4306 = vadd.f32 %v3791, %v4292
    %v4307 = vadd.f32 %v3796, %v4297
    %v4308 = vadd.f32 %v3801, %v4302
    %4309 = vrot.lane.b32.xlu0 %v2783, 104
    %v4310 = vpop.permute.xlu0 %4309
    %4311 = vrot.lane.b32.xlu0 %v2788, 104
    %v4312 = vpop.permute.xlu0 %4311
    %4313 = vrot.lane.b32.xlu0 %v2783, 72
    %v4314 = vpop.permute.xlu0 %4313
    %4315 = vrot.lane.b32.xlu0 %v2788, 72
    %v4316 = vpop.permute.xlu0 %4315
    %v4317 = vsel %vm262, %v4310, 0
    %v4319 = vsel %vm262, %v4312, 0
    %v4321 = vsel %vm262, %v4314, 0
    %v4323 = vsel %vm262, %v4316, 0
    %4325 = vmatprep.subr.mxu0 0.0
    %4326 = vmatpush1.xpose.msra.mxu0 %v4321
    %4327 = vmatprep.subr.mxu0 0.0
    %4328 = vmatpush1.xpose.msra.mxu0 %v4323
    %4329 = vmatprep.subr.mxu0 0.0
    %4330 = vmatpush1.xpose.msra.mxu0 0.0
    %4331 = vmatprep.subr.mxu0 0.0
    %4332 = vmatpush1.xpose.msra.mxu0 0.0
    %4333 = vmatprep.subr.mxu0 0.0
    %4334 = vmatpush1.xpose.msra.mxu0 0.0
    %4335 = vmatprep.subr.mxu0 0.0
    %4336 = vmatpush1.xpose.msra.mxu0 0.0
    %4337 = vmatprep.subr.mxu0 0.0
    %4338 = vmatpush1.xpose.msra.mxu0 0.0
    %4339 = vmatprep.subr.mxu0 0.0
    %4340 = vmatpush1.xpose.msra.mxu0 0.0
    %4341 = vmatprep.subr.mxu0 0.0
    %4342 = vmatpush1.xpose.msra.mxu0 0.0
    %4343 = vmatprep.subr.mxu0 0.0
    %4344 = vmatpush1.xpose.msra.mxu0 0.0
    %4345 = vmatprep.subr.mxu0 0.0
    %4346 = vmatpush1.xpose.msra.mxu0 0.0
    %4347 = vmatprep.subr.mxu0 0.0
    %4348 = vmatpush1.xpose.msra.mxu0 0.0
    %4349 = vmatprep.subr.mxu0 0.0
    %4350 = vmatpush1.xpose.msra.mxu0 0.0
    %4351 = vmatprep.subr.mxu0 0.0
    %4352 = vmatpush1.xpose.msra.mxu0 0.0
    %4353 = vmatprep.subr.mxu0 0.0
    %4354 = vmatpush1.xpose.msra.mxu0 0.0
    %4355 = vmatprep.subr.mxu0 0.0
    %4356 = vmatpush1.xpose.msra.mxu0 0.0
    %4357 = vmatprep.subr.mxu0 0.0
    %4358 = vmatpush1.xpose.msra.mxu0 0.0
    %4359 = vmatprep.subr.mxu0 0.0
    %4360 = vmatpush1.xpose.msra.mxu0 0.0
    %4361 = vmatprep.subr.mxu0 0.0
    %4362 = vmatpush1.xpose.msra.mxu0 0.0
    %4363 = vmatprep.subr.mxu0 0.0
    %4364 = vmatpush1.xpose.msra.mxu0 0.0
    %4365 = vmatprep.subr.mxu0 0.0
    %4366 = vmatpush1.xpose.msra.mxu0 0.0
    %4367 = vmatprep.subr.mxu0 0.0
    %4368 = vmatpush1.xpose.msra.mxu0 0.0
    %4369 = vmatprep.subr.mxu0 0.0
    %4370 = vmatpush1.xpose.msra.mxu0 0.0
    %4371 = vmatprep.subr.mxu0 0.0
    %4372 = vmatpush1.xpose.msra.mxu0 0.0
    %4373 = vmatprep.subr.mxu0 0.0
    %4374 = vmatpush1.xpose.msra.mxu0 0.0
    %4375 = vmatprep.subr.mxu0 0.0
    %4376 = vmatpush1.xpose.msra.mxu0 0.0
    %4377 = vmatprep.subr.mxu0 0.0
    %4378 = vmatpush1.xpose.msra.mxu0 0.0
    %4379 = vmatprep.subr.mxu0 0.0
    %4380 = vmatpush1.xpose.msra.mxu0 0.0
    %4381 = vmatprep.subr.mxu0 0.0
    %4382 = vmatpush1.xpose.msra.mxu0 0.0
    %4383 = vmatprep.subr.mxu0 0.0
    %4384 = vmatpush1.xpose.msra.mxu0 0.0
    %4385 = vmatprep.subr.mxu0 0.0
    %4386 = vmatpush1.xpose.msra.mxu0 0.0
    %4387 = vmatprep.subr.mxu0 0.0
    %4388 = vmatpush1.xpose.msra.mxu0 0.0
    %4389 = vmatprep.mubr.f32.mxu0 0.0
    %4390 = vmatmul.mubr.f32.gmra.mrb[0].mxu0 %v4317
    %v4391 = vpop.f32.mrb[0].mxu0
    %v4392 = vadd.f32 0.0, %v4391
    %v4393 = vpop.f32.mrb[0].mxu0
    %4394 = vmatprep.mubr.f32.mxu0 0.0
    %4395 = vmatmul.mubr.f32.gmra.mrb[0].mxu0 %v4319
    %v4396 = vpop.f32.mrb[0].mxu0
    %v4397 = vadd.f32 0.0, %v4396
    %v4398 = vpop.f32.mrb[0].mxu0
    %4399 = vdwg.mxu0
    %4400 = vrot.lane.b32.xlu0 %v2793, 104
    %v4401 = vpop.permute.xlu0 %4400
    %4402 = vrot.lane.b32.xlu0 %v2798, 104
    %v4403 = vpop.permute.xlu0 %4402
    %4404 = vrot.lane.b32.xlu0 %v2793, 72
    %v4405 = vpop.permute.xlu0 %4404
    %4406 = vrot.lane.b32.xlu0 %v2798, 72
    %v4407 = vpop.permute.xlu0 %4406
    %v4408 = vsel %vm262, %v4401, 0
    %v4410 = vsel %vm262, %v4403, 0
    %v4412 = vsel %vm262, %v4405, 0
    %v4414 = vsel %vm262, %v4407, 0
    %4416 = vmatprep.subr.mxu0 0.0
    %4417 = vmatpush1.xpose.msra.mxu0 %v4412
    %4418 = vmatprep.subr.mxu0 0.0
    %4419 = vmatpush1.xpose.msra.mxu0 %v4414
    %4420 = vmatprep.subr.mxu0 0.0
    %4421 = vmatpush1.xpose.msra.mxu0 0.0
    %4422 = vmatprep.subr.mxu0 0.0
    %4423 = vmatpush1.xpose.msra.mxu0 0.0
    %4424 = vmatprep.subr.mxu0 0.0
    %4425 = vmatpush1.xpose.msra.mxu0 0.0
    %4426 = vmatprep.subr.mxu0 0.0
    %4427 = vmatpush1.xpose.msra.mxu0 0.0
    %4428 = vmatprep.subr.mxu0 0.0
    %4429 = vmatpush1.xpose.msra.mxu0 0.0
    %4430 = vmatprep.subr.mxu0 0.0
    %4431 = vmatpush1.xpose.msra.mxu0 0.0
    %4432 = vmatprep.subr.mxu0 0.0
    %4433 = vmatpush1.xpose.msra.mxu0 0.0
    %4434 = vmatprep.subr.mxu0 0.0
    %4435 = vmatpush1.xpose.msra.mxu0 0.0
    %4436 = vmatprep.subr.mxu0 0.0
    %4437 = vmatpush1.xpose.msra.mxu0 0.0
    %4438 = vmatprep.subr.mxu0 0.0
    %4439 = vmatpush1.xpose.msra.mxu0 0.0
    %4440 = vmatprep.subr.mxu0 0.0
    %4441 = vmatpush1.xpose.msra.mxu0 0.0
    %4442 = vmatprep.subr.mxu0 0.0
    %4443 = vmatpush1.xpose.msra.mxu0 0.0
    %4444 = vmatprep.subr.mxu0 0.0
    %4445 = vmatpush1.xpose.msra.mxu0 0.0
    %4446 = vmatprep.subr.mxu0 0.0
    %4447 = vmatpush1.xpose.msra.mxu0 0.0
    %4448 = vmatprep.subr.mxu0 0.0
    %4449 = vmatpush1.xpose.msra.mxu0 0.0
    %4450 = vmatprep.subr.mxu0 0.0
    %4451 = vmatpush1.xpose.msra.mxu0 0.0
    %4452 = vmatprep.subr.mxu0 0.0
    %4453 = vmatpush1.xpose.msra.mxu0 0.0
    %4454 = vmatprep.subr.mxu0 0.0
    %4455 = vmatpush1.xpose.msra.mxu0 0.0
    %4456 = vmatprep.subr.mxu0 0.0
    %4457 = vmatpush1.xpose.msra.mxu0 0.0
    %4458 = vmatprep.subr.mxu0 0.0
    %4459 = vmatpush1.xpose.msra.mxu0 0.0
    %4460 = vmatprep.subr.mxu0 0.0
    %4461 = vmatpush1.xpose.msra.mxu0 0.0
    %4462 = vmatprep.subr.mxu0 0.0
    %4463 = vmatpush1.xpose.msra.mxu0 0.0
    %4464 = vmatprep.subr.mxu0 0.0
    %4465 = vmatpush1.xpose.msra.mxu0 0.0
    %4466 = vmatprep.subr.mxu0 0.0
    %4467 = vmatpush1.xpose.msra.mxu0 0.0
    %4468 = vmatprep.subr.mxu0 0.0
    %4469 = vmatpush1.xpose.msra.mxu0 0.0
    %4470 = vmatprep.subr.mxu0 0.0
    %4471 = vmatpush1.xpose.msra.mxu0 0.0
    %4472 = vmatprep.subr.mxu0 0.0
    %4473 = vmatpush1.xpose.msra.mxu0 0.0
    %4474 = vmatprep.subr.mxu0 0.0
    %4475 = vmatpush1.xpose.msra.mxu0 0.0
    %4476 = vmatprep.subr.mxu0 0.0
    %4477 = vmatpush1.xpose.msra.mxu0 0.0
    %4478 = vmatprep.subr.mxu0 0.0
    %4479 = vmatpush1.xpose.msra.mxu0 0.0
    %4480 = vmatprep.mubr.f32.mxu0 0.0
    %4481 = vmatmul.mubr.f32.gmra.mrb[0].mxu0 %v4408
    %v4482 = vpop.f32.mrb[0].mxu0
    %v4483 = vadd.f32 0.0, %v4482
    %v4484 = vpop.f32.mrb[0].mxu0
    %4485 = vmatprep.mubr.f32.mxu0 0.0
    %4486 = vmatmul.mubr.f32.gmra.mrb[0].mxu0 %v4410
    %v4487 = vpop.f32.mrb[0].mxu0
    %v4488 = vadd.f32 0.0, %v4487
    %v4489 = vpop.f32.mrb[0].mxu0
    %4490 = vdwg.mxu0
    %v4491 = vmul.f32 %v4392, 0.35355338
    %v4492 = vmul.f32 %v4397, 0.35355338
    %v4493 = vmul.f32 %v4483, 0.35355338
    %v4494 = vmul.f32 %v4488, 0.35355338
    %v4495 = vsel %vm439, %v4491, -inf
    %4496 = vmax.xlane.f32.xlu0 %v4495
    %v4497 = vpop.xlane.xlu0 %4496
    %v4498 = vsel %vm439, %v4492, -inf
    %4499 = vmax.xlane.f32.xlu0 %v4498
    %v4500 = vpop.xlane.xlu0 %4499
    %v4501 = vsel %vm439, %v4493, -inf
    %4502 = vmax.xlane.f32.xlu0 %v4501
    %v4503 = vpop.xlane.xlu0 %4502
    %v4504 = vsel %vm439, %v4494, -inf
    %4505 = vmax.xlane.f32.xlu0 %v4504
    %v4506 = vpop.xlane.xlu0 %4505
    %v4507 = vsub.f32 %v4491, %v4497
    %v4508 = vsub.f32 %v4492, %v4500
    %v4509 = vsub.f32 %v4493, %v4503
    %v4510 = vsub.f32 %v4494, %v4506
    %v4511 = vmul.f32 %v4507, 1.442695
    %v4512 = vpow.pop %v4511
    %v4513 = vmul.f32 %v4508, 1.442695
    %v4514 = vpow.pop %v4513
    %v4515 = vmul.f32 %v4509, 1.442695
    %v4516 = vpow.pop %v4515
    %v4517 = vmul.f32 %v4510, 1.442695
    %v4518 = vpow.pop %v4517
    %v4519 = vsel %vm439, %v4512, 0.0
    %4520 = vadd.xlane.f32.xlu0 %v4519
    %v4521 = vpop.xlane.xlu0 %4520
    %v4522 = vsel %vm439, %v4514, 0.0
    %4523 = vadd.xlane.f32.xlu0 %v4522
    %v4524 = vpop.xlane.xlu0 %4523
    %v4525 = vsel %vm439, %v4516, 0.0
    %4526 = vadd.xlane.f32.xlu0 %v4525
    %v4527 = vpop.xlane.xlu0 %4526
    %v4528 = vsel %vm439, %v4518, 0.0
    %4529 = vadd.xlane.f32.xlu0 %v4528
    %v4530 = vpop.xlane.xlu0 %4529
    %v4531 = vrcp.pop %v4521
    %v4532 = vrcp.pop %v4524
    %v4533 = vrcp.pop %v4527
    %v4534 = vrcp.pop %v4530
    %v4535 = vmul.f32 %v4512, %v4531
    %v4536 = vmul.f32 %v4514, %v4532
    %v4537 = vmul.f32 %v4516, %v4533
    %v4538 = vmul.f32 %v4518, %v4534
    %4539 = vrot.lane.b32.xlu0 %v2783, 40
    %v4540 = vpop.permute.xlu0 %4539
    %4541 = vrot.lane.b32.xlu0 %v2788, 40
    %v4542 = vpop.permute.xlu0 %4541
    %v4546 = vsel %vm439, %v4535, 0
    %v4549 = vsel %vm439, %v4536, 0
    %4551 = vmatprep.subr.mxu0 0.0
    %4552 = vmatpush1.msra.mxu0 %v4540
    %4553 = vmatprep.subr.mxu0 0.0
    %4554 = vmatpush1.msra.mxu0 %v4542
    %4555 = vmatprep.subr.mxu0 0.0
    %4556 = vmatpush1.msra.mxu0 0.0
    %4557 = vmatprep.subr.mxu0 0.0
    %4558 = vmatpush1.msra.mxu0 0.0
    %4559 = vmatprep.subr.mxu0 0.0
    %4560 = vmatpush1.msra.mxu0 0.0
    %4561 = vmatprep.subr.mxu0 0.0
    %4562 = vmatpush1.msra.mxu0 0.0
    %4563 = vmatprep.subr.mxu0 0.0
    %4564 = vmatpush1.msra.mxu0 0.0
    %4565 = vmatprep.subr.mxu0 0.0
    %4566 = vmatpush1.msra.mxu0 0.0
    %4567 = vmatprep.subr.mxu0 0.0
    %4568 = vmatpush1.msra.mxu0 0.0
    %4569 = vmatprep.subr.mxu0 0.0
    %4570 = vmatpush1.msra.mxu0 0.0
    %4571 = vmatprep.subr.mxu0 0.0
    %4572 = vmatpush1.msra.mxu0 0.0
    %4573 = vmatprep.subr.mxu0 0.0
    %4574 = vmatpush1.msra.mxu0 0.0
    %4575 = vmatprep.subr.mxu0 0.0
    %4576 = vmatpush1.msra.mxu0 0.0
    %4577 = vmatprep.subr.mxu0 0.0
    %4578 = vmatpush1.msra.mxu0 0.0
    %4579 = vmatprep.subr.mxu0 0.0
    %4580 = vmatpush1.msra.mxu0 0.0
    %4581 = vmatprep.subr.mxu0 0.0
    %4582 = vmatpush1.msra.mxu0 0.0
    %4583 = vmatprep.subr.mxu0 0.0
    %4584 = vmatpush1.msra.mxu0 0.0
    %4585 = vmatprep.subr.mxu0 0.0
    %4586 = vmatpush1.msra.mxu0 0.0
    %4587 = vmatprep.subr.mxu0 0.0
    %4588 = vmatpush1.msra.mxu0 0.0
    %4589 = vmatprep.subr.mxu0 0.0
    %4590 = vmatpush1.msra.mxu0 0.0
    %4591 = vmatprep.subr.mxu0 0.0
    %4592 = vmatpush1.msra.mxu0 0.0
    %4593 = vmatprep.subr.mxu0 0.0
    %4594 = vmatpush1.msra.mxu0 0.0
    %4595 = vmatprep.subr.mxu0 0.0
    %4596 = vmatpush1.msra.mxu0 0.0
    %4597 = vmatprep.subr.mxu0 0.0
    %4598 = vmatpush1.msra.mxu0 0.0
    %4599 = vmatprep.subr.mxu0 0.0
    %4600 = vmatpush1.msra.mxu0 0.0
    %4601 = vmatprep.subr.mxu0 0.0
    %4602 = vmatpush1.msra.mxu0 0.0
    %4603 = vmatprep.subr.mxu0 0.0
    %4604 = vmatpush1.msra.mxu0 0.0
    %4605 = vmatprep.subr.mxu0 0.0
    %4606 = vmatpush1.msra.mxu0 0.0
    %4607 = vmatprep.subr.mxu0 0.0
    %4608 = vmatpush1.msra.mxu0 0.0
    %4609 = vmatprep.subr.mxu0 0.0
    %4610 = vmatpush1.msra.mxu0 0.0
    %4611 = vmatprep.subr.mxu0 0.0
    %4612 = vmatpush1.msra.mxu0 0.0
    %4613 = vmatprep.subr.mxu0 0.0
    %4614 = vmatpush1.msra.mxu0 0.0
    %4615 = vmatprep.mubr.f32.mxu0 0.0
    %4616 = vmatmul.mubr.f32.gmra.mrb[0].mxu0 %v4546
    %v4617 = vpop.f32.mrb[0].mxu0
    %v4618 = vadd.f32 0.0, %v4617
    %v4619 = vpop.f32.mrb[0].mxu0
    %4620 = vmatprep.mubr.f32.mxu0 0.0
    %4621 = vmatmul.mubr.f32.gmra.mrb[0].mxu0 %v4549
    %v4622 = vpop.f32.mrb[0].mxu0
    %v4623 = vadd.f32 0.0, %v4622
    %v4624 = vpop.f32.mrb[0].mxu0
    %4625 = vdwg.mxu0
    %4626 = vrot.lane.b32.xlu0 %v2793, 40
    %v4627 = vpop.permute.xlu0 %4626
    %4628 = vrot.lane.b32.xlu0 %v2798, 40
    %v4629 = vpop.permute.xlu0 %4628
    %v4633 = vsel %vm439, %v4537, 0
    %v4636 = vsel %vm439, %v4538, 0
    %4638 = vmatprep.subr.mxu0 0.0
    %4639 = vmatpush1.msra.mxu0 %v4627
    %4640 = vmatprep.subr.mxu0 0.0
    %4641 = vmatpush1.msra.mxu0 %v4629
    %4642 = vmatprep.subr.mxu0 0.0
    %4643 = vmatpush1.msra.mxu0 0.0
    %4644 = vmatprep.subr.mxu0 0.0
    %4645 = vmatpush1.msra.mxu0 0.0
    %4646 = vmatprep.subr.mxu0 0.0
    %4647 = vmatpush1.msra.mxu0 0.0
    %4648 = vmatprep.subr.mxu0 0.0
    %4649 = vmatpush1.msra.mxu0 0.0
    %4650 = vmatprep.subr.mxu0 0.0
    %4651 = vmatpush1.msra.mxu0 0.0
    %4652 = vmatprep.subr.mxu0 0.0
    %4653 = vmatpush1.msra.mxu0 0.0
    %4654 = vmatprep.subr.mxu0 0.0
    %4655 = vmatpush1.msra.mxu0 0.0
    %4656 = vmatprep.subr.mxu0 0.0
    %4657 = vmatpush1.msra.mxu0 0.0
    %4658 = vmatprep.subr.mxu0 0.0
    %4659 = vmatpush1.msra.mxu0 0.0
    %4660 = vmatprep.subr.mxu0 0.0
    %4661 = vmatpush1.msra.mxu0 0.0
    %4662 = vmatprep.subr.mxu0 0.0
    %4663 = vmatpush1.msra.mxu0 0.0
    %4664 = vmatprep.subr.mxu0 0.0
    %4665 = vmatpush1.msra.mxu0 0.0
    %4666 = vmatprep.subr.mxu0 0.0
    %4667 = vmatpush1.msra.mxu0 0.0
    %4668 = vmatprep.subr.mxu0 0.0
    %4669 = vmatpush1.msra.mxu0 0.0
    %4670 = vmatprep.subr.mxu0 0.0
    %4671 = vmatpush1.msra.mxu0 0.0
    %4672 = vmatprep.subr.mxu0 0.0
    %4673 = vmatpush1.msra.mxu0 0.0
    %4674 = vmatprep.subr.mxu0 0.0
    %4675 = vmatpush1.msra.mxu0 0.0
    %4676 = vmatprep.subr.mxu0 0.0
    %4677 = vmatpush1.msra.mxu0 0.0
    %4678 = vmatprep.subr.mxu0 0.0
    %4679 = vmatpush1.msra.mxu0 0.0
    %4680 = vmatprep.subr.mxu0 0.0
    %4681 = vmatpush1.msra.mxu0 0.0
    %4682 = vmatprep.subr.mxu0 0.0
    %4683 = vmatpush1.msra.mxu0 0.0
    %4684 = vmatprep.subr.mxu0 0.0
    %4685 = vmatpush1.msra.mxu0 0.0
    %4686 = vmatprep.subr.mxu0 0.0
    %4687 = vmatpush1.msra.mxu0 0.0
    %4688 = vmatprep.subr.mxu0 0.0
    %4689 = vmatpush1.msra.mxu0 0.0
    %4690 = vmatprep.subr.mxu0 0.0
    %4691 = vmatpush1.msra.mxu0 0.0
    %4692 = vmatprep.subr.mxu0 0.0
    %4693 = vmatpush1.msra.mxu0 0.0
    %4694 = vmatprep.subr.mxu0 0.0
    %4695 = vmatpush1.msra.mxu0 0.0
    %4696 = vmatprep.subr.mxu0 0.0
    %4697 = vmatpush1.msra.mxu0 0.0
    %4698 = vmatprep.subr.mxu0 0.0
    %4699 = vmatpush1.msra.mxu0 0.0
    %4700 = vmatprep.subr.mxu0 0.0
    %4701 = vmatpush1.msra.mxu0 0.0
    %4702 = vmatprep.mubr.f32.mxu0 0.0
    %4703 = vmatmul.mubr.f32.gmra.mrb[0].mxu0 %v4633
    %v4704 = vpop.f32.mrb[0].mxu0
    %v4705 = vadd.f32 0.0, %v4704
    %v4706 = vpop.f32.mrb[0].mxu0
    %4707 = vmatprep.mubr.f32.mxu0 0.0
    %4708 = vmatmul.mubr.f32.gmra.mrb[0].mxu0 %v4636
    %v4709 = vpop.f32.mrb[0].mxu0
    %v4710 = vadd.f32 0.0, %v4709
    %v4711 = vpop.f32.mrb[0].mxu0
    %4712 = vdwg.mxu0
    %v4714 = vsel %vm262, %v4618, 0
    %v4717 = vsel %vm262, %v4623, 0
    %v4720 = vsel %vm262, %v4705, 0
    %v4723 = vsel %vm262, %v4710, 0
    %4725 = vmatprep.subr.mxu0 0.0
    %4726 = vmatpush1.msra.mxu0 %v2805
    %4727 = vmatprep.subr.mxu0 0.0
    %4728 = vmatpush1.msra.mxu0 0.0
    %4729 = vmatprep.subr.mxu0 0.0
    %4730 = vmatpush1.msra.mxu0 0.0
    %4731 = vmatprep.subr.mxu0 0.0
    %4732 = vmatpush1.msra.mxu0 0.0
    %4733 = vmatprep.subr.mxu0 0.0
    %4734 = vmatpush1.msra.mxu0 0.0
    %4735 = vmatprep.subr.mxu0 0.0
    %4736 = vmatpush1.msra.mxu0 0.0
    %4737 = vmatprep.subr.mxu0 0.0
    %4738 = vmatpush1.msra.mxu0 0.0
    %4739 = vmatprep.subr.mxu0 0.0
    %4740 = vmatpush1.msra.mxu0 0.0
    %4741 = vmatprep.subr.mxu0 0.0
    %4742 = vmatpush1.msra.mxu0 0.0
    %4743 = vmatprep.subr.mxu0 0.0
    %4744 = vmatpush1.msra.mxu0 0.0
    %4745 = vmatprep.subr.mxu0 0.0
    %4746 = vmatpush1.msra.mxu0 0.0
    %4747 = vmatprep.subr.mxu0 0.0
    %4748 = vmatpush1.msra.mxu0 0.0
    %4749 = vmatprep.subr.mxu0 0.0
    %4750 = vmatpush1.msra.mxu0 0.0
    %4751 = vmatprep.subr.mxu0 0.0
    %4752 = vmatpush1.msra.mxu0 0.0
    %4753 = vmatprep.subr.mxu0 0.0
    %4754 = vmatpush1.msra.mxu0 0.0
    %4755 = vmatprep.subr.mxu0 0.0
    %4756 = vmatpush1.msra.mxu0 0.0
    %4757 = vmatprep.subr.mxu0 0.0
    %4758 = vmatpush1.msra.mxu0 0.0
    %4759 = vmatprep.subr.mxu0 0.0
    %4760 = vmatpush1.msra.mxu0 0.0
    %4761 = vmatprep.subr.mxu0 0.0
    %4762 = vmatpush1.msra.mxu0 0.0
    %4763 = vmatprep.subr.mxu0 0.0
    %4764 = vmatpush1.msra.mxu0 0.0
    %4765 = vmatprep.subr.mxu0 0.0
    %4766 = vmatpush1.msra.mxu0 0.0
    %4767 = vmatprep.subr.mxu0 0.0
    %4768 = vmatpush1.msra.mxu0 0.0
    %4769 = vmatprep.subr.mxu0 0.0
    %4770 = vmatpush1.msra.mxu0 0.0
    %4771 = vmatprep.subr.mxu0 0.0
    %4772 = vmatpush1.msra.mxu0 0.0
    %4773 = vmatprep.subr.mxu0 0.0
    %4774 = vmatpush1.msra.mxu0 0.0
    %4775 = vmatprep.subr.mxu0 0.0
    %4776 = vmatpush1.msra.mxu0 0.0
    %4777 = vmatprep.subr.mxu0 0.0
    %4778 = vmatpush1.msra.mxu0 0.0
    %4779 = vmatprep.subr.mxu0 0.0
    %4780 = vmatpush1.msra.mxu0 0.0
    %4781 = vmatprep.subr.mxu0 0.0
    %4782 = vmatpush1.msra.mxu0 0.0
    %4783 = vmatprep.subr.mxu0 0.0
    %4784 = vmatpush1.msra.mxu0 0.0
    %4785 = vmatprep.subr.mxu0 0.0
    %4786 = vmatpush1.msra.mxu0 0.0
    %4787 = vmatprep.subr.mxu0 0.0
    %4788 = vmatpush1.msra.mxu0 0.0
    %4789 = vmatprep.mubr.f32.mxu0 0.0
    %4790 = vmatmul.mubr.f32.gmra.mrb[0].mxu0 %v4714
    %v4791 = vpop.f32.mrb[0].mxu0
    %v4792 = vadd.f32 0.0, %v4791
    %v4793 = vpop.f32.mrb[0].mxu0
    %4794 = vmatprep.mubr.f32.mxu0 0.0
    %4795 = vmatmul.mubr.f32.gmra.mrb[0].mxu0 %v4717
    %v4796 = vpop.f32.mrb[0].mxu0
    %v4797 = vadd.f32 0.0, %v4796
    %v4798 = vpop.f32.mrb[0].mxu0
    %4799 = vmatprep.mubr.f32.mxu0 0.0
    %4800 = vmatmul.mubr.f32.gmra.mrb[0].mxu0 %v4720
    %v4801 = vpop.f32.mrb[0].mxu0
    %v4802 = vadd.f32 0.0, %v4801
    %v4803 = vpop.f32.mrb[0].mxu0
    %4804 = vmatprep.mubr.f32.mxu0 0.0
    %4805 = vmatmul.mubr.f32.gmra.mrb[0].mxu0 %v4723
    %v4806 = vpop.f32.mrb[0].mxu0
    %v4807 = vadd.f32 0.0, %v4806
    %v4808 = vpop.f32.mrb[0].mxu0
    %4809 = vdwg.mxu0
    %v4810 = vadd.f32 %v4305, %v4792
    %v4811 = vadd.f32 %v4306, %v4797
    %v4812 = vadd.f32 %v4307, %v4802
    %v4813 = vadd.f32 %v4308, %v4807
    %s4814 = scalar_lea.vmem [#allocation5], 1
    %v4815 = vld [vmem:[%s4814] sm:$0x1]
    %v4817 = vlaneseq
    %v4818 = vshrl.u32 %v4817, 7
    %v4819 = vsub.s32 0, %v4818
    %v4820 = vrot.slane %v4815, %v4819
    %v4822 = vadd.f32 %v4810, %v4820
    %v4823 = vadd.f32 %v4811, %v4820
    %v4824 = vadd.f32 %v4812, %v4820
    %v4825 = vadd.f32 %v4813, %v4820
    %v4826 = vadd.f32 %v2687, %v4822
    %v4827 = vadd.f32 %v2688, %v4823
    %v4828 = vadd.f32 %v2689, %v4824
    %v4829 = vadd.f32 %v2690, %v4825
    %s4830 = scalar_lea.vmem [#allocation7], 1
    %v4831 = vld [vmem:[%s4830] sm:$0x1]
    %s4832 = scalar_lea.vmem [#allocation8], 1
    %v4833 = vld [vmem:[%s4832] sm:$0x1]
    %v4834 = vsel %vm157, %v4826, 0.0
    %4835 = vadd.xlane.f32.xlu0 %v4834
    %v4836 = vpop.xlane.xlu0 %4835
    %v4837 = vsel %vm157, %v4827, 0.0
    %4838 = vadd.xlane.f32.xlu0 %v4837
    %v4839 = vpop.xlane.xlu0 %4838
    %v4840 = vsel %vm157, %v4828, 0.0
    %4841 = vadd.xlane.f32.xlu0 %v4840
    %v4842 = vpop.xlane.xlu0 %4841
    %v4843 = vsel %vm157, %v4829, 0.0
    %4844 = vadd.xlane.f32.xlu0 %v4843
    %v4845 = vpop.xlane.xlu0 %4844
    %v4846 = vmul.f32 %v4836, %v2295
    %v4847 = vmul.f32 %v4839, %v2295
    %v4848 = vmul.f32 %v4842, %v2295
    %v4849 = vmul.f32 %v4845, %v2295
    %v4850 = vsub.f32 %v4826, %v4846
    %v4851 = vsub.f32 %v4827, %v4847
    %v4852 = vsub.f32 %v4828, %v4848
    %v4853 = vsub.f32 %v4829, %v4849
    %v4854 = vmul.f32 %v4850, %v4850
    %v4855 = vmul.f32 %v4851, %v4851
    %v4856 = vmul.f32 %v4852, %v4852
    %v4857 = vmul.f32 %v4853, %v4853
    %v4858 = vsel %vm157, %v4854, 0.0
    %4859 = vadd.xlane.f32.xlu0 %v4858
    %v4860 = vpop.xlane.xlu0 %4859
    %v4861 = vsel %vm157, %v4855, 0.0
    %4862 = vadd.xlane.f32.xlu0 %v4861
    %v4863 = vpop.xlane.xlu0 %4862
    %v4864 = vsel %vm157, %v4856, 0.0
    %4865 = vadd.xlane.f32.xlu0 %v4864
    %v4866 = vpop.xlane.xlu0 %4865
    %v4867 = vsel %vm157, %v4857, 0.0
    %4868 = vadd.xlane.f32.xlu0 %v4867
    %v4869 = vpop.xlane.xlu0 %4868
    %v4870 = vmul.f32 %v4860, %v2295
    %v4871 = vmul.f32 %v4863, %v2295
    %v4872 = vmul.f32 %v4866, %v2295
    %v4873 = vmul.f32 %v4869, %v2295
    %v4874 = vadd.f32 %v4870, 1e-12
    %v4875 = vadd.f32 %v4871, 1e-12
    %v4876 = vadd.f32 %v4872, 1e-12
    %v4877 = vadd.f32 %v4873, 1e-12
    %v4878 = vrsqrt.pop %v4874
    %v4879 = vrsqrt.pop %v4875
    %v4880 = vrsqrt.pop %v4876
    %v4881 = vrsqrt.pop %v4877
    %v4882 = vmul.f32 %v4850, %v4878
    %v4883 = vmul.f32 %v4851, %v4879
    %v4884 = vmul.f32 %v4852, %v4880
    %v4885 = vmul.f32 %v4853, %v4881
    %v4887 = vlaneseq
    %v4888 = vshrl.u32 %v4887, 7
    %v4889 = vsub.s32 0, %v4888
    %v4890 = vrot.slane %v4831, %v4889
    %v4892 = vmul.f32 %v4882, %v4890
    %v4893 = vmul.f32 %v4883, %v4890
    %v4894 = vmul.f32 %v4884, %v4890
    %v4895 = vmul.f32 %v4885, %v4890
    %v4897 = vlaneseq
    %v4898 = vshrl.u32 %v4897, 7
    %v4899 = vsub.s32 0, %v4898
    %v4900 = vrot.slane %v4833, %v4899
    %v4902 = vadd.f32 %v4892, %v4900
    %v4903 = vadd.f32 %v4893, %v4900
    %v4904 = vadd.f32 %v4894, %v4900
    %v4905 = vadd.f32 %v4895, %v4900
    %s4906 = scalar_lea.vmem %s8, 32
    %v4907 = vld [vmem:[%s4906] sm:$0xff]
    %v4908 = vld [vmem:[%s4906 + $0x8] sm:$0xff]
    %v4909 = vld [vmem:[%s4906 + $0x10] sm:$0xff]
    %v4910 = vld [vmem:[%s4906 + $0x18] sm:$0xff]
    %s4911 = scalar_lea.vmem [#allocation10], 1
    %v4912 = vld [vmem:[%s4911] sm:$0x1]
    %v4914 = vlaneseq
    %v4915 = vshrl.u32 %v4914, 7
    %v4916 = vsub.s32 0, %v4915
    %v4917 = vrot.slane %v4912, %v4916
    %v4920 = vsel %vm157, %v4902, 0
    %v4923 = vsel %vm157, %v4903, 0
    %v4926 = vsel %vm157, %v4904, 0
    %v4929 = vsel %vm157, %v4905, 0
    %4931 = vmatprep.subr.mxu0 0.0
    %4932 = vmatpush1.msra.mxu0 %v4907
    %4933 = vmatprep.subr.mxu0 0.0
    %4934 = vmatpush1.msra.mxu0 %v4908
    %4935 = vmatprep.subr.mxu0 0.0
    %4936 = vmatpush1.msra.mxu0 %v4909
    %4937 = vmatprep.subr.mxu0 0.0
    %4938 = vmatpush1.msra.mxu0 %v4910
    %4939 = vmatprep.subr.mxu0 0.0
    %4940 = vmatpush1.msra.mxu0 0.0
    %4941 = vmatprep.subr.mxu0 0.0
    %4942 = vmatpush1.msra.mxu0 0.0
    %4943 = vmatprep.subr.mxu0 0.0
    %4944 = vmatpush1.msra.mxu0 0.0
    %4945 = vmatprep.subr.mxu0 0.0
    %4946 = vmatpush1.msra.mxu0 0.0
    %4947 = vmatprep.subr.mxu0 0.0
    %4948 = vmatpush1.msra.mxu0 0.0
    %4949 = vmatprep.subr.mxu0 0.0
    %4950 = vmatpush1.msra.mxu0 0.0
    %4951 = vmatprep.subr.mxu0 0.0
    %4952 = vmatpush1.msra.mxu0 0.0
    %4953 = vmatprep.subr.mxu0 0.0
    %4954 = vmatpush1.msra.mxu0 0.0
    %4955 = vmatprep.subr.mxu0 0.0
    %4956 = vmatpush1.msra.mxu0 0.0
    %4957 = vmatprep.subr.mxu0 0.0
    %4958 = vmatpush1.msra.mxu0 0.0
    %4959 = vmatprep.subr.mxu0 0.0
    %4960 = vmatpush1.msra.mxu0 0.0
    %4961 = vmatprep.subr.mxu0 0.0
    %4962 = vmatpush1.msra.mxu0 0.0
    %4963 = vmatprep.subr.mxu0 0.0
    %4964 = vmatpush1.msra.mxu0 0.0
    %4965 = vmatprep.subr.mxu0 0.0
    %4966 = vmatpush1.msra.mxu0 0.0
    %4967 = vmatprep.subr.mxu0 0.0
    %4968 = vmatpush1.msra.mxu0 0.0
    %4969 = vmatprep.subr.mxu0 0.0
    %4970 = vmatpush1.msra.mxu0 0.0
    %4971 = vmatprep.subr.mxu0 0.0
    %4972 = vmatpush1.msra.mxu0 0.0
    %4973 = vmatprep.subr.mxu0 0.0
    %4974 = vmatpush1.msra.mxu0 0.0
    %4975 = vmatprep.subr.mxu0 0.0
    %4976 = vmatpush1.msra.mxu0 0.0
    %4977 = vmatprep.subr.mxu0 0.0
    %4978 = vmatpush1.msra.mxu0 0.0
    %4979 = vmatprep.subr.mxu0 0.0
    %4980 = vmatpush1.msra.mxu0 0.0
    %4981 = vmatprep.subr.mxu0 0.0
    %4982 = vmatpush1.msra.mxu0 0.0
    %4983 = vmatprep.subr.mxu0 0.0
    %4984 = vmatpush1.msra.mxu0 0.0
    %4985 = vmatprep.subr.mxu0 0.0
    %4986 = vmatpush1.msra.mxu0 0.0
    %4987 = vmatprep.subr.mxu0 0.0
    %4988 = vmatpush1.msra.mxu0 0.0
    %4989 = vmatprep.subr.mxu0 0.0
    %4990 = vmatpush1.msra.mxu0 0.0
    %4991 = vmatprep.subr.mxu0 0.0
    %4992 = vmatpush1.msra.mxu0 0.0
    %4993 = vmatprep.subr.mxu0 0.0
    %4994 = vmatpush1.msra.mxu0 0.0
    %4995 = vmatprep.mubr.f32.mxu0 0.0
    %4996 = vmatmul.mubr.f32.gmra.mrb[0].mxu0 %v4920
    %v4997 = vpop.f32.mrb[0].mxu0
    %v4998 = vadd.f32 %v4917, %v4997
    %v4999 = vpop.f32.mrb[0].mxu0
    %5000 = vmatprep.mubr.f32.mxu0 0.0
    %5001 = vmatmul.mubr.f32.gmra.mrb[0].mxu0 %v4923
    %v5002 = vpop.f32.mrb[0].mxu0
    %v5003 = vadd.f32 %v4917, %v5002
    %v5004 = vpop.f32.mrb[0].mxu0
    %5005 = vmatprep.mubr.f32.mxu0 0.0
    %5006 = vmatmul.mubr.f32.gmra.mrb[0].mxu0 %v4926
    %v5007 = vpop.f32.mrb[0].mxu0
    %v5008 = vadd.f32 %v4917, %v5007
    %v5009 = vpop.f32.mrb[0].mxu0
    %5010 = vmatprep.mubr.f32.mxu0 0.0
    %5011 = vmatmul.mubr.f32.gmra.mrb[0].mxu0 %v4929
    %v5012 = vpop.f32.mrb[0].mxu0
    %v5013 = vadd.f32 %v4917, %v5012
    %v5014 = vpop.f32.mrb[0].mxu0
    %5015 = vdwg.mxu0
    %v5016 = vmul.f32 %v4998, %v4998
    %v5017 = vmul.f32 %v5003, %v5003
    %v5018 = vmul.f32 %v5008, %v5008
    %v5019 = vmul.f32 %v5013, %v5013
    %v5020 = vmul.f32 %v4998, %v5016
    %v5021 = vmul.f32 %v5003, %v5017
    %v5022 = vmul.f32 %v5008, %v5018
    %v5023 = vmul.f32 %v5013, %v5019
    %v5024 = vmul.f32 %v5020, 0.044715
    %v5025 = vmul.f32 %v5021, 0.044715
    %v5026 = vmul.f32 %v5022, 0.044715
    %v5027 = vmul.f32 %v5023, 0.044715
    %v5028 = vadd.f32 %v4998, %v5024
    %v5029 = vadd.f32 %v5003, %v5025
    %v5030 = vadd.f32 %v5008, %v5026
    %v5031 = vadd.f32 %v5013, %v5027
    %v5032 = vmul.f32 %v5028, 0.7978846
    %v5033 = vmul.f32 %v5029, 0.7978846
    %v5034 = vmul.f32 %v5030, 0.7978846
    %v5035 = vmul.f32 %v5031, 0.7978846
    %v5036 = vtanh.pop %v5032
    %v5037 = vtanh.pop %v5033
    %v5038 = vtanh.pop %v5034
    %v5039 = vtanh.pop %v5035
    %v5040 = vadd.f32 %v5036, 1.0
    %v5041 = vadd.f32 %v5037, 1.0
    %v5042 = vadd.f32 %v5038, 1.0
    %v5043 = vadd.f32 %v5039, 1.0
    %v5044 = vmul.f32 %v5040, 0.5
    %v5045 = vmul.f32 %v5041, 0.5
    %v5046 = vmul.f32 %v5042, 0.5
    %v5047 = vmul.f32 %v5043, 0.5
    %v5048 = vmul.f32 %v4998, %v5044
    %v5049 = vmul.f32 %v5003, %v5045
    %v5050 = vmul.f32 %v5008, %v5046
    %v5051 = vmul.f32 %v5013, %v5047
    %s5052 = scalar_lea.vmem %s10, 64
    %v5053 = vld [vmem:[%s5052] sm:$0xff]
    %v5054 = vld [vmem:[%s5052 + $0x8] sm:$0xff]
    %v5055 = vld [vmem:[%s5052 + $0x10] sm:$0xff]
    %v5056 = vld [vmem:[%s5052 + $0x18] sm:$0xff]
    %v5057 = vld [vmem:[%s5052 + $0x20] sm:$0xff]
    %v5058 = vld [vmem:[%s5052 + $0x28] sm:$0xff]
    %v5059 = vld [vmem:[%s5052 + $0x30] sm:$0xff]
    %v5060 = vld [vmem:[%s5052 + $0x38] sm:$0xff]
    %s5061 = scalar_lea.vmem %s11, 1
    %v5062 = vld [vmem:[%s5061] sm:$0x1]
    %v5064 = vlaneseq
    %v5065 = vshrl.u32 %v5064, 7
    %v5066 = vsub.s32 0, %v5065
    %v5067 = vrot.slane %v5062, %v5066
    %v5070 = vsel %vm2515, %v5048, 0
    %v5073 = vsel %vm2515, %v5049, 0
    %v5076 = vsel %vm2515, %v5050, 0
    %v5079 = vsel %vm2515, %v5051, 0
    %5081 = vmatprep.subr.mxu0 0.0
    %5082 = vmatpush1.msra.mxu0 %v5053
    %5083 = vmatprep.subr.mxu0 0.0
    %5084 = vmatpush1.msra.mxu0 %v5054
    %5085 = vmatprep.subr.mxu0 0.0
    %5086 = vmatpush1.msra.mxu0 %v5055
    %5087 = vmatprep.subr.mxu0 0.0
    %5088 = vmatpush1.msra.mxu0 %v5056
    %5089 = vmatprep.subr.mxu0 0.0
    %5090 = vmatpush1.msra.mxu0 %v5057
    %5091 = vmatprep.subr.mxu0 0.0
    %5092 = vmatpush1.msra.mxu0 %v5058
    %5093 = vmatprep.subr.mxu0 0.0
    %5094 = vmatpush1.msra.mxu0 %v5059
    %5095 = vmatprep.subr.mxu0 0.0
    %5096 = vmatpush1.msra.mxu0 %v5060
    %5097 = vmatprep.subr.mxu0 0.0
    %5098 = vmatpush1.msra.mxu0 0.0
    %5099 = vmatprep.subr.mxu0 0.0
    %5100 = vmatpush1.msra.mxu0 0.0
    %5101 = vmatprep.subr.mxu0 0.0
    %5102 = vmatpush1.msra.mxu0 0.0
    %5103 = vmatprep.subr.mxu0 0.0
    %5104 = vmatpush1.msra.mxu0 0.0
    %5105 = vmatprep.subr.mxu0 0.0
    %5106 = vmatpush1.msra.mxu0 0.0
    %5107 = vmatprep.subr.mxu0 0.0
    %5108 = vmatpush1.msra.mxu0 0.0
    %5109 = vmatprep.subr.mxu0 0.0
    %5110 = vmatpush1.msra.mxu0 0.0
    %5111 = vmatprep.subr.mxu0 0.0
    %5112 = vmatpush1.msra.mxu0 0.0
    %5113 = vmatprep.subr.mxu0 0.0
    %5114 = vmatpush1.msra.mxu0 0.0
    %5115 = vmatprep.subr.mxu0 0.0
    %5116 = vmatpush1.msra.mxu0 0.0
    %5117 = vmatprep.subr.mxu0 0.0
    %5118 = vmatpush1.msra.mxu0 0.0
    %5119 = vmatprep.subr.mxu0 0.0
    %5120 = vmatpush1.msra.mxu0 0.0
    %5121 = vmatprep.subr.mxu0 0.0
    %5122 = vmatpush1.msra.mxu0 0.0
    %5123 = vmatprep.subr.mxu0 0.0
    %5124 = vmatpush1.msra.mxu0 0.0
    %5125 = vmatprep.subr.mxu0 0.0
    %5126 = vmatpush1.msra.mxu0 0.0
    %5127 = vmatprep.subr.mxu0 0.0
    %5128 = vmatpush1.msra.mxu0 0.0
    %5129 = vmatprep.subr.mxu0 0.0
    %5130 = vmatpush1.msra.mxu0 0.0
    %5131 = vmatprep.subr.mxu0 0.0
    %5132 = vmatpush1.msra.mxu0 0.0
    %5133 = vmatprep.subr.mxu0 0.0
    %5134 = vmatpush1.msra.mxu0 0.0
    %5135 = vmatprep.subr.mxu0 0.0
    %5136 = vmatpush1.msra.mxu0 0.0
    %5137 = vmatprep.subr.mxu0 0.0
    %5138 = vmatpush1.msra.mxu0 0.0
    %5139 = vmatprep.subr.mxu0 0.0
    %5140 = vmatpush1.msra.mxu0 0.0
    %5141 = vmatprep.subr.mxu0 0.0
    %5142 = vmatpush1.msra.mxu0 0.0
    %5143 = vmatprep.subr.mxu0 0.0
    %5144 = vmatpush1.msra.mxu0 0.0
    %5145 = vmatprep.mubr.f32.mxu0 0.0
    %5146 = vmatmul.mubr.f32.gmra.mrb[0].mxu0 %v5070
    %v5147 = vpop.f32.mrb[0].mxu0
    %v5148 = vadd.f32 %v5067, %v5147
    %v5149 = vpop.f32.mrb[0].mxu0
    %5150 = vmatprep.mubr.f32.mxu0 0.0
    %5151 = vmatmul.mubr.f32.gmra.mrb[0].mxu0 %v5073
    %v5152 = vpop.f32.mrb[0].mxu0
    %v5153 = vpop.f32.mrb[0].mxu0
    %5154 = vmatprep.mubr.f32.mxu0 0.0
    %5155 = vmatmul.mubr.f32.gmra.mrb[0].mxu0 %v5076
    %v5156 = vpop.f32.mrb[0].mxu0
    %v5157 = vadd.f32 %v5067, %v5156
    %v5158 = vpop.f32.mrb[0].mxu0
    %5159 = vmatprep.mubr.f32.mxu0 0.0
    %5160 = vmatmul.mubr.f32.gmra.mrb[0].mxu0 %v5079
    %v5161 = vpop.f32.mrb[0].mxu0
    %v5162 = vpop.f32.mrb[0].mxu0
    %5163 = vdwg.mxu0
    %v5164 = vadd.f32 %v4902, %v5148
    %v5165 = vadd.f32 %v4904, %v5157
    %s5166 = scalar_lea.vmem %s12, 1
    %v5167 = vld [vmem:[%s5166] sm:$0x1]
    %s5168 = scalar_lea.vmem %s13, 1
    %v5169 = vld [vmem:[%s5168] sm:$0x1]
    %v5170 = vsel %vm157, %v5164, 0.0
    %5171 = vadd.xlane.f32.xlu0 %v5170
    %v5172 = vpop.xlane.xlu0 %5171
    %v5173 = vsel %vm157, %v5165, 0.0
    %5174 = vadd.xlane.f32.xlu0 %v5173
    %v5175 = vpop.xlane.xlu0 %5174
    %v5176 = vmul.f32 %v5172, %v2295
    %v5177 = vmul.f32 %v5175, %v2295
    %v5178 = vsub.f32 %v5164, %v5176
    %v5179 = vsub.f32 %v5165, %v5177
    %v5180 = vmul.f32 %v5178, %v5178
    %v5181 = vmul.f32 %v5179, %v5179
    %v5182 = vsel %vm157, %v5180, 0.0
    %5183 = vadd.xlane.f32.xlu0 %v5182
    %v5184 = vpop.xlane.xlu0 %5183
    %v5185 = vsel %vm157, %v5181, 0.0
    %5186 = vadd.xlane.f32.xlu0 %v5185
    %v5187 = vpop.xlane.xlu0 %5186
    %v5188 = vmul.f32 %v5184, %v2295
    %v5189 = vmul.f32 %v5187, %v2295
    %v5190 = vadd.f32 %v5188, 1e-12
    %v5191 = vadd.f32 %v5189, 1e-12
    %v5192 = vrsqrt.pop %v5190
    %v5193 = vrsqrt.pop %v5191
    %v5194 = vmul.f32 %v5178, %v5192
    %v5195 = vmul.f32 %v5179, %v5193
    %v5197 = vlaneseq
    %v5198 = vshrl.u32 %v5197, 7
    %v5199 = vsub.s32 0, %v5198
    %v5200 = vrot.slane %v5167, %v5199
    %v5202 = vmul.f32 %v5194, %v5200
    %v5203 = vmul.f32 %v5195, %v5200
    %v5205 = vlaneseq
    %v5206 = vshrl.u32 %v5205, 7
    %v5207 = vsub.s32 0, %v5206
    %v5208 = vrot.slane %v5169, %v5207
    %v5210 = vadd.f32 %v5202, %v5208
    %v5211 = vadd.f32 %v5203, %v5208
    %v5212 = vld [vmem:[#allocation11] sm:$0xff]
    %v5213 = vld [vmem:[#allocation11 + $0x8] sm:$0xff]
    %v5214 = vld [vmem:[#allocation11 + $0x10] sm:$0xff]
    %v5215 = vld [vmem:[#allocation11 + $0x18] sm:$0xff]
    %v5216 = vld [vmem:[%s15] sm:$0x1]
    %v5218 = vlaneseq
    %v5219 = vshrl.u32 %v5218, 7
    %v5220 = vsub.s32 0, %v5219
    %v5221 = vrot.slane %v5216, %v5220
    %v5225 = vrot.slane %v5211, 7
    %vm5226 = vcmask 1041409
    %v5227 = vsel %vm5226, %v5225, %v5210
    %v5228 = vsel %vm157, %v5227, 0
    %5230 = vmatprep.subr.mxu0 0.0
    %5231 = vmatpush1.msra.mxu0 %v5212
    %5232 = vmatprep.subr.mxu0 0.0
    %5233 = vmatpush1.msra.mxu0 %v5213
    %5234 = vmatprep.subr.mxu0 0.0
    %5235 = vmatpush1.msra.mxu0 %v5214
    %5236 = vmatprep.subr.mxu0 0.0
    %5237 = vmatpush1.msra.mxu0 %v5215
    %5238 = vmatprep.subr.mxu0 0.0
    %5239 = vmatpush1.msra.mxu0 0.0
    %5240 = vmatprep.subr.mxu0 0.0
    %5241 = vmatpush1.msra.mxu0 0.0
    %5242 = vmatprep.subr.mxu0 0.0
    %5243 = vmatpush1.msra.mxu0 0.0
    %5244 = vmatprep.subr.mxu0 0.0
    %5245 = vmatpush1.msra.mxu0 0.0
    %5246 = vmatprep.subr.mxu0 0.0
    %5247 = vmatpush1.msra.mxu0 0.0
    %5248 = vmatprep.subr.mxu0 0.0
    %5249 = vmatpush1.msra.mxu0 0.0
    %5250 = vmatprep.subr.mxu0 0.0
    %5251 = vmatpush1.msra.mxu0 0.0
    %5252 = vmatprep.subr.mxu0 0.0
    %5253 = vmatpush1.msra.mxu0 0.0
    %5254 = vmatprep.subr.mxu0 0.0
    %5255 = vmatpush1.msra.mxu0 0.0
    %5256 = vmatprep.subr.mxu0 0.0
    %5257 = vmatpush1.msra.mxu0 0.0
    %5258 = vmatprep.subr.mxu0 0.0
    %5259 = vmatpush1.msra.mxu0 0.0
    %5260 = vmatprep.subr.mxu0 0.0
    %5261 = vmatpush1.msra.mxu0 0.0
    %5262 = vmatprep.subr.mxu0 0.0
    %5263 = vmatpush1.msra.mxu0 0.0
    %5264 = vmatprep.subr.mxu0 0.0
    %5265 = vmatpush1.msra.mxu0 0.0
    %5266 = vmatprep.subr.mxu0 0.0
    %5267 = vmatpush1.msra.mxu0 0.0
    %5268 = vmatprep.subr.mxu0 0.0
    %5269 = vmatpush1.msra.mxu0 0.0
    %5270 = vmatprep.subr.mxu0 0.0
    %5271 = vmatpush1.msra.mxu0 0.0
    %5272 = vmatprep.subr.mxu0 0.0
    %5273 = vmatpush1.msra.mxu0 0.0
    %5274 = vmatprep.subr.mxu0 0.0
    %5275 = vmatpush1.msra.mxu0 0.0
    %5276 = vmatprep.subr.mxu0 0.0
    %5277 = vmatpush1.msra.mxu0 0.0
    %5278 = vmatprep.subr.mxu0 0.0
    %5279 = vmatpush1.msra.mxu0 0.0
    %5280 = vmatprep.subr.mxu0 0.0
    %5281 = vmatpush1.msra.mxu0 0.0
    %5282 = vmatprep.subr.mxu0 0.0
    %5283 = vmatpush1.msra.mxu0 0.0
    %5284 = vmatprep.subr.mxu0 0.0
    %5285 = vmatpush1.msra.mxu0 0.0
    %5286 = vmatprep.subr.mxu0 0.0
    %5287 = vmatpush1.msra.mxu0 0.0
    %5288 = vmatprep.subr.mxu0 0.0
    %5289 = vmatpush1.msra.mxu0 0.0
    %5290 = vmatprep.subr.mxu0 0.0
    %5291 = vmatpush1.msra.mxu0 0.0
    %5292 = vmatprep.subr.mxu0 0.0
    %5293 = vmatpush1.msra.mxu0 0.0
    %5294 = vmatprep.mubr.f32.mxu0 0.0
    %5295 = vmatmul.mubr.f32.gmra.mrb[0].mxu0 %v5228
    %v5296 = vpop.f32.mrb[0].mxu0
    %v5297 = vadd.f32 %v5221, %v5296
    %v5298 = vpop.f32.mrb[0].mxu0
    %5299 = vdwg.mxu0
    %v5300 = vtanh.pop %v5297
    %v5301 = vld [vmem:[%s16] sm:$0xff]
    %v5302 = vld [vmem:[%s16 + $0x8] sm:$0xff]
    %v5303 = vld [vmem:[%s16 + $0x10] sm:$0xff]
    %v5304 = vld [vmem:[%s16 + $0x18] sm:$0xff]
    %v5305 = vld [vmem:[#allocation2] sm:$0x1]
    %v5307 = vlaneseq
    %v5308 = vshrl.u32 %v5307, 7
    %v5309 = vsub.s32 0, %v5308
    %v5310 = vrot.slane %v5305, %v5309
    %v5313 = vsel %vm157, %v5300, 0
    %5315 = vmatprep.subr.mxu0 0.0
    %5316 = vmatpush1.msra.mxu0 %v5301
    %5317 = vmatprep.subr.mxu0 0.0
    %5318 = vmatpush1.msra.mxu0 %v5302
    %5319 = vmatprep.subr.mxu0 0.0
    %5320 = vmatpush1.msra.mxu0 %v5303
    %5321 = vmatprep.subr.mxu0 0.0
    %5322 = vmatpush1.msra.mxu0 %v5304
    %5323 = vmatprep.subr.mxu0 0.0
    %5324 = vmatpush1.msra.mxu0 0.0
    %5325 = vmatprep.subr.mxu0 0.0
    %5326 = vmatpush1.msra.mxu0 0.0
    %5327 = vmatprep.subr.mxu0 0.0
    %5328 = vmatpush1.msra.mxu0 0.0
    %5329 = vmatprep.subr.mxu0 0.0
    %5330 = vmatpush1.msra.mxu0 0.0
    %5331 = vmatprep.subr.mxu0 0.0
    %5332 = vmatpush1.msra.mxu0 0.0
    %5333 = vmatprep.subr.mxu0 0.0
    %5334 = vmatpush1.msra.mxu0 0.0
    %5335 = vmatprep.subr.mxu0 0.0
    %5336 = vmatpush1.msra.mxu0 0.0
    %5337 = vmatprep.subr.mxu0 0.0
    %5338 = vmatpush1.msra.mxu0 0.0
    %5339 = vmatprep.subr.mxu0 0.0
    %5340 = vmatpush1.msra.mxu0 0.0
    %5341 = vmatprep.subr.mxu0 0.0
    %5342 = vmatpush1.msra.mxu0 0.0
    %5343 = vmatprep.subr.mxu0 0.0
    %5344 = vmatpush1.msra.mxu0 0.0
    %5345 = vmatprep.subr.mxu0 0.0
    %5346 = vmatpush1.msra.mxu0 0.0
    %5347 = vmatprep.subr.mxu0 0.0
    %5348 = vmatpush1.msra.mxu0 0.0
    %5349 = vmatprep.subr.mxu0 0.0
    %5350 = vmatpush1.msra.mxu0 0.0
    %5351 = vmatprep.subr.mxu0 0.0
    %5352 = vmatpush1.msra.mxu0 0.0
    %5353 = vmatprep.subr.mxu0 0.0
    %5354 = vmatpush1.msra.mxu0 0.0
    %5355 = vmatprep.subr.mxu0 0.0
    %5356 = vmatpush1.msra.mxu0 0.0
    %5357 = vmatprep.subr.mxu0 0.0
    %5358 = vmatpush1.msra.mxu0 0.0
    %5359 = vmatprep.subr.mxu0 0.0
    %5360 = vmatpush1.msra.mxu0 0.0
    %5361 = vmatprep.subr.mxu0 0.0
    %5362 = vmatpush1.msra.mxu0 0.0
    %5363 = vmatprep.subr.mxu0 0.0
    %5364 = vmatpush1.msra.mxu0 0.0
    %5365 = vmatprep.subr.mxu0 0.0
    %5366 = vmatpush1.msra.mxu0 0.0
    %5367 = vmatprep.subr.mxu0 0.0
    %5368 = vmatpush1.msra.mxu0 0.0
    %5369 = vmatprep.subr.mxu0 0.0
    %5370 = vmatpush1.msra.mxu0 0.0
    %5371 = vmatprep.subr.mxu0 0.0
    %5372 = vmatpush1.msra.mxu0 0.0
    %5373 = vmatprep.subr.mxu0 0.0
    %5374 = vmatpush1.msra.mxu0 0.0
    %5375 = vmatprep.subr.mxu0 0.0
    %5376 = vmatpush1.msra.mxu0 0.0
    %5377 = vmatprep.subr.mxu0 0.0
    %5378 = vmatpush1.msra.mxu0 0.0
    %5379 = vmatprep.mubr.f32.mxu0 0.0
    %5380 = vmatmul.mubr.f32.gmra.mrb[0].mxu0 %v5313
    %v5381 = vpop.f32.mrb[0].mxu0
    %v5382 = vadd.f32 %v5310, %v5381
    %v5383 = vpop.f32.mrb[0].mxu0
    %5384 = vdwg.mxu0
    %v5385 = vxor.u32 %v5382, 2147483648
    %v5386 = vmul.f32 %v5385, 1.442695
    %v5387 = vpow.pop %v5386
    %v5388 = vadd.f32 %v5387, 1.0
    %v5389 = vrcp.pop %v5388
    %v5390 = vmul.f32 1.0, %v5389
    %vm5391 = vcmask 1024
    %5392 = vst.msk [vmem:[%s18] sm:$0x3] %vm5391, %v5390
    // Predicated region
    $region98: #{tpu_custom_call.1} parent=1 // pred_check
      _
    $region99: #{tpu_custom_call.1} parent=1 // pred_check_branch
      %5394 = sbr.rel (0) target = $region101
    $region100: #{tpu_custom_call.1} parent=1 // pred_region
      _
    $region101: #{tpu_custom_call.1} parent=1 // pred_fallthru
      _
    // Predicated region
    $region102: #{tpu_custom_call.1} parent=1 // pred_check
      _
    $region103: #{tpu_custom_call.1} parent=1 // pred_check_branch
      %5396 = sbr.rel (0) target = $region105
    $region104: #{tpu_custom_call.1} parent=1 // pred_region
      _
    $region105: #{tpu_custom_call.1} parent=1 // pred_fallthru
      _
    %5397 = vsyncpa [#allocation4], 1
    %5398 = vsyncpa [#allocation6], 1
    %5399 = vsyncpa [#allocation9], 1
    %5400 = vsyncpa [#allocation12], 1

</llo_original>
